<compile_context>
chip_gen: v6e
topology: v6e:2x2x1
jax: 0.10.0
libtpu: 0.0.40
codegen_flags: <defaults>
</compile_context>

<pallas_src>
import jax
import jax.numpy as jnp
import numpy as np
from jax import lax
from jax.experimental import pallas as pl
from jax.experimental.pallas import tpu as pltpu


# ----------------------------------------------------------------------------
# Static plan
# ----------------------------------------------------------------------------
def _make_plan(input_channels, num_filters, H, W, no_first_pool=True):
    stages = []
    h, w = H, W
    cin = input_channels
    for i, cout in enumerate(num_filters):
        pool = not (i == 0 and no_first_pool)
        if pool:
            h //= 2
            w //= 2
        convs = []
        c = cin
        for _ in range(3):                      # 3 conv layers per DownConvBlock
            convs.append(dict(H=h, W=w, Cin=c, Cout=cout))
            c = cout
        stages.append(dict(pool=pool, H=h, W=w, Cout=cout, convs=convs))
        cin = cout
    return stages


# ----------------------------------------------------------------------------
# Host-side parameter repacking
# ----------------------------------------------------------------------------
def _fused_weight(w, W):
    """HWIO (3,3,Cin,Cout) -> (3*W*Cin, W*Cout) bf16 banded weight, no halo cols.

    Entry [kh*W*Cin + wi*Cin + ci, wo*Cout + co] = w[kh, wi-wo+1, ci, co] when
    wi-wo+1 in {0,1,2}, else 0.  With a row-im2col LHS (three vertically
    shifted copies of the activation along K) one matmul realizes the whole
    SAME-padded 3x3 conv; out-of-image columns never appear in K because their
    activations are identically zero.
    """
    _, _, Cin, Cout = w.shape
    S = np.zeros((3, W, W), np.float32)         # S[kw, wi, wo]
    for kw in range(3):
        for wo in range(W):
            wi = wo + kw - 1
            if 0 <= wi < W:
                S[kw, wi, wo] = 1.0
    wf = np.einsum("kab,hkio->haibo", S, np.asarray(w, np.float32))
    wf = wf.reshape(3 * W * Cin, W * Cout)
    return jnp.asarray(wf, jnp.bfloat16)


def _pool_mats(B, H, W, C):
    """AvgPool2d(2,2) as two bf16 matmuls on the stacked (B*H, W*C) layout."""
    rp = np.zeros((B * (H // 2), B * H), np.float32)   # block-diagonal per image
    for b in range(B):
        for i in range(H // 2):
            rp[b * (H // 2) + i, b * H + 2 * i] = 0.5
            rp[b * (H // 2) + i, b * H + 2 * i + 1] = 0.5
    cp = np.zeros((W * C, (W // 2) * C), np.float32)
    for j in range(W // 2):
        for c in range(C):
            cp[2 * j * C + c, j * C + c] = 0.5
            cp[(2 * j + 1) * C + c, j * C + c] = 0.5
    return jnp.asarray(rp, jnp.bfloat16), jnp.asarray(cp, jnp.bfloat16)


# ----------------------------------------------------------------------------
# Fused Pallas kernel (batch_tile images per grid step, whole encoder in VMEM)
# ----------------------------------------------------------------------------
def _build_encoder_kernel(stages, batch_tile, out_dtype):
    n_convs = sum(len(s["convs"]) for s in stages)
    n_pools = sum(1 for s in stages if s["pool"])
    B = batch_tile

    def kernel(*refs):
        i = 0
        x_ref = refs[i]; i += 1
        w_refs, b_refs = [], []
        for _ in range(n_convs):
            w_refs.append(refs[i]); b_refs.append(refs[i + 1]); i += 2
        rp_refs, cp_refs = [], []
        for _ in range(n_pools):
            rp_refs.append(refs[i]); cp_refs.append(refs[i + 1]); i += 2
        o_ref = refs[i]

        _, Hin, WCin = x_ref.shape
        # Carried activation stays f32; bf16 casts happen only at MXU operands.
        act = x_ref[...].reshape(B * Hin, WCin).astype(jnp.float32)

        li = 0  # conv counter
        pi = 0  # pool counter
        for s in stages:
            if s["pool"]:
                # AvgPool2d(2,2): (B*H/2,B*H) @ (B*H,W*C) @ (W*C,(W/2)*C), bf16 MXU.
                t = jnp.dot(rp_refs[pi][...], act.astype(jnp.bfloat16),
                            preferred_element_type=jnp.float32)
                act = jnp.dot(t.astype(jnp.bfloat16), cp_refs[pi][...],
                              preferred_element_type=jnp.float32)
                pi += 1
            for c in s["convs"]:
                H, W, Cin, Cout = c["H"], c["W"], c["Cin"], c["Cout"]
                rows, WC = B * H, W * Cin
                z = jnp.zeros((1, WC), jnp.float32)
                # Vertical shifts (zero pad at image top/bottom) -- value level,
                # no scratch, no border zero-fills of a padded slab.
                adn = jnp.concatenate([z, act[:rows - 1, :]], axis=0)   # row h-1
                aup = jnp.concatenate([act[1:rows, :], z], axis=0)      # row h+1
                if B > 1:
                    # Zero rows that would leak across vertically stacked images.
                    rid = lax.broadcasted_iota(jnp.int32, (rows, 1), 0)
                    adn = jnp.where(rid % H == 0, 0.0, adn)
                    aup = jnp.where(rid % H == H - 1, 0.0, aup)
                # Row-im2col LHS (rows, 3*W*Cin), interior at lane offset 0.
                lhs = jnp.concatenate([adn, act, aup], axis=1).astype(jnp.bfloat16)
                acc = jnp.dot(lhs, w_refs[li][...],
                              preferred_element_type=jnp.float32)
                acc = acc + b_refs[li][...]                 # f32 bias (1, W*Cout)
                act = jnp.maximum(acc, 0.0)                 # fused ReLU, f32
                li += 1

        Ho, Wo, Co = stages[-1]["H"], stages[-1]["W"], stages[-1]["Cout"]
        o_ref[...] = act.reshape(B, Ho, Wo * Co).astype(out_dtype)

    return kernel


# ----------------------------------------------------------------------------
# EncoderSimp forward (NCHW in / NCHW out) -- single pallas_call
# ----------------------------------------------------------------------------
def _pick_batch_tile(n):
    """Fold batch into M while keeping >=2 grid steps for CORE_PARALLEL."""
    if n <= 2:
        return 1
    for bt in range(n // 2, 0, -1):
        if n % bt == 0:
            return bt
    return 1


def encoder_simp_forward(x_nchw, params, no_first_pool=True, batch_tile=None):
    """Mirrors EncoderSimp.forward: returns (x, size_list) with x in NCHW."""
    N, Cin0, H, W = (int(d) for d in x_nchw.shape)
    num_filters = [blk[0][0].shape[-1] for blk in params]
    stages = _make_plan(Cin0, num_filters, H, W, no_first_pool)

    if batch_tile is None:
        batch_tile = _pick_batch_tile(N)
    assert N % batch_tile == 0
    n_steps = N // batch_tile

    # TODO(synk): if the surrounding model keeps NHWC / lane-dense activations,
    # these wrapper transposes can be dropped entirely.
    x2d = jnp.transpose(x_nchw, (0, 2, 3, 1)).reshape(N, H, W * Cin0)

    conv_inputs, conv_specs = [], []
    pool_inputs, pool_specs = [], []
    h_cur, w_cur, c_cur = H, W, Cin0
    for s, blk in zip(stages, params):
        if s["pool"]:
            # TODO(synk): odd spatial sizes (PyTorch AvgPool2d floor mode) unsupported.
            assert h_cur % 2 == 0 and w_cur % 2 == 0
            rp, cp = _pool_mats(batch_tile, h_cur, w_cur, c_cur)
            pool_inputs += [rp, cp]
            pool_specs += [pl.BlockSpec(rp.shape, lambda n: (0, 0)),
                           pl.BlockSpec(cp.shape, lambda n: (0, 0))]
            h_cur //= 2
            w_cur //= 2
        for c, (w, b) in zip(s["convs"], blk):
            wf = _fused_weight(w, c["W"])                    # (3*W*Cin, W*Cout) bf16
            bt = jnp.tile(b.astype(jnp.float32), c["W"]).reshape(1, c["W"] * c["Cout"])
            conv_inputs += [wf, bt]
            conv_specs += [pl.BlockSpec(wf.shape, lambda n: (0, 0)),
                           pl.BlockSpec(bt.shape, lambda n: (0, 0))]
        c_cur = s["Cout"]

    Ho, Wo, Co = stages[-1]["H"], stages[-1]["W"], stages[-1]["Cout"]
    kernel = _build_encoder_kernel(stages, batch_tile, out_dtype=x_nchw.dtype)

    def run(semantics):
        out = pl.pallas_call(
            kernel,
            out_shape=jax.ShapeDtypeStruct((N, Ho, Wo * Co), x_nchw.dtype),
            grid_spec=pltpu.PrefetchScalarGridSpec(
                num_scalar_prefetch=0,
                grid=(n_steps,),
                in_specs=[pl.BlockSpec((batch_tile, H, W * Cin0),
                                       lambda n: (n, 0, 0))]
                         + conv_specs + pool_specs,
                out_specs=pl.BlockSpec((batch_tile, Ho, Wo * Co),
                                       lambda n: (n, 0, 0)),
            ),
            compiler_params=pltpu.CompilerParams(dimension_semantics=semantics),
        )(x2d, *conv_inputs, *pool_inputs)
        return jax.block_until_ready(out)

    try:
        # v7x: shard the batch grid axis across both TensorCores.
        out2d = run((pltpu.CORE_PARALLEL,))
    except Exception:
        # Single-TC chips (v5e/v6e) or compilers that reject CORE_PARALLEL here.
        out2d = run(("parallel",))

    out = jnp.transpose(out2d.reshape(N, Ho, Wo, Co), (0, 3, 1, 2))  # NHWC -> NCHW
    size_list = [(H, W)] + [(s["H"], s["W"]) for s in stages]
    return out, size_list


# ----------------------------------------------------------------------------
# Parameter init (HWIO weights, (Cout,) biases)
# ----------------------------------------------------------------------------
def init_encoder_params(key, input_channels, num_filters):
    params = []
    in_dim = input_channels
    for out_dim in num_filters:
        block = []
        cin = in_dim
        for _ in range(3):  # 3 conv layers per DownConvBlock
            key, kw, kb = jax.random.split(key, 3)
            fan_in = cin * 3 * 3
            bound = 1.0 / np.sqrt(fan_in)
            w = jax.random.uniform(kw, (3, 3, cin, out_dim), jnp.float32, -bound, bound)
            b = jax.random.uniform(kb, (out_dim,), jnp.float32, -bound, bound)
            block.append((w, b))
            cin = out_dim
        params.append(block)
        in_dim = out_dim
    return params


# ----------------------------------------------------------------------------
# Pure-JAX references (correctness checks only)
# ----------------------------------------------------------------------------
def _ref_forward(x_nchw, params, no_first_pool=True):
    """Exact f32 module semantics."""
    x = jnp.transpose(x_nchw, (0, 2, 3, 1))
    for i, block in enumerate(params):
        if not (i == 0 and no_first_pool):
            N, H, W, C = x.shape
            x = x.reshape(N, H // 2, 2, W // 2, 2, C).mean(axis=(2, 4))
        for (w, b) in block:
            x = lax.conv_general_dilated(
                x, w, window_strides=(1, 1), padding="SAME",
                dimension_numbers=("NHWC", "HWIO", "NHWC"))
            x = jnp.maximum(x + b, 0.0)
    return jnp.transpose(x, (0, 3, 1, 2))


def _ref_forward_bf16(x_nchw, params, no_first_pool=True):
    """Same math as the kernel: bf16 MXU operands, f32 accumulation."""
    x = jnp.transpose(x_nchw, (0, 2, 3, 1)).astype(jnp.float32)
    for i, block in enumerate(params):
        if not (i == 0 and no_first_pool):
            xb = x.astype(jnp.bfloat16).astype(jnp.float32)
            xr = 0.5 * (xb[:, 0::2] + xb[:, 1::2])                   # row pool
            xr = xr.astype(jnp.bfloat16).astype(jnp.float32)
            x = 0.5 * (xr[:, :, 0::2] + xr[:, :, 1::2])              # col pool
        for (w, b) in block:
            y = lax.conv_general_dilated(
                x.astype(jnp.bfloat16), w.astype(jnp.bfloat16),
                window_strides=(1, 1), padding="SAME",
                dimension_numbers=("NHWC", "HWIO", "NHWC"),
                preferred_element_type=jnp.float32)
            x = jnp.maximum(y + b.astype(jnp.float32), 0.0)
    return jnp.transpose(x, (0, 3, 1, 2))


# ----------------------------------------------------------------------------
if __name__ == "__main__":
    input_channels = 4
    num_filters = [8, 16, 32]
    N, H, W = 2, 16, 16

    key = jax.random.PRNGKey(0)
    key, kx = jax.random.split(key)
    x = jax.random.normal(kx, (N, input_channels, H, W), jnp.float32)
    params = init_encoder_params(key, input_channels, num_filters)

    out, size_list = encoder_simp_forward(x, params, no_first_pool=True)
    out = jax.block_until_ready(out)

    # Tight check: independent lax.conv reference using the same bf16-operand /
    # f32-accumulate numerics as the kernel (validates band/pool construction).
    ref16 = jax.block_until_ready(_ref_forward_bf16(x, params, no_first_pool=True))
    np.testing.assert_allclose(np.asarray(out), np.asarray(ref16),
                               rtol=1e-4, atol=1e-4)

    # Loose check against the exact f32 module semantics (bf16 operand rounding).
    ref32 = jax.block_until_ready(_ref_forward(x, params, no_first_pool=True))
    np.testing.assert_allclose(np.asarray(out), np.asarray(ref32),
                               rtol=5e-2, atol=1e-2)

    assert size_list == [(16, 16), (16, 16), (8, 8), (4, 4)], size_list
    assert out.shape == (N, num_filters[-1], 4, 4), out.shape

    print("KERNEL_OK")
</pallas_src>

<mosaic_0001>
module attributes {stable_mosaic.version = 11 : i64} {
  func.func @kernel(%arg0: i32, %arg1: memref<1x16x64xf32, #tpu.memory_space<vmem>>, %arg2: memref<192x128xbf16, #tpu.memory_space<vmem>>, %arg3: memref<1x128xf32, #tpu.memory_space<vmem>>, %arg4: memref<384x128xbf16, #tpu.memory_space<vmem>>, %arg5: memref<1x128xf32, #tpu.memory_space<vmem>>, %arg6: memref<384x128xbf16, #tpu.memory_space<vmem>>, %arg7: memref<1x128xf32, #tpu.memory_space<vmem>>, %arg8: memref<192x128xbf16, #tpu.memory_space<vmem>>, %arg9: memref<1x128xf32, #tpu.memory_space<vmem>>, %arg10: memref<384x128xbf16, #tpu.memory_space<vmem>>, %arg11: memref<1x128xf32, #tpu.memory_space<vmem>>, %arg12: memref<384x128xbf16, #tpu.memory_space<vmem>>, %arg13: memref<1x128xf32, #tpu.memory_space<vmem>>, %arg14: memref<192x128xbf16, #tpu.memory_space<vmem>>, %arg15: memref<1x128xf32, #tpu.memory_space<vmem>>, %arg16: memref<384x128xbf16, #tpu.memory_space<vmem>>, %arg17: memref<1x128xf32, #tpu.memory_space<vmem>>, %arg18: memref<384x128xbf16, #tpu.memory_space<vmem>>, %arg19: memref<1x128xf32, #tpu.memory_space<vmem>>, %arg20: memref<8x16xbf16, #tpu.memory_space<vmem>>, %arg21: memref<128x64xbf16, #tpu.memory_space<vmem>>, %arg22: memref<4x8xbf16, #tpu.memory_space<vmem>>, %arg23: memref<128x64xbf16, #tpu.memory_space<vmem>>, %arg24: memref<1x4x128xf32, #tpu.memory_space<vmem>>) attributes {dimension_semantics = [#tpu.dimension_semantics<core_parallel>], iteration_bounds = array<i64: 2>, scalar_prefetch = 0 : i64, scratch_operands = 0 : i64, tpu.core_type = #tpu.core_type<tc>, window_params = [{transform_indices = @transform_0, window_bounds = array<i64: 1, 16, 64>}, {pipeline_mode = #tpu.pipeline_mode<synchronous>, transform_indices = @transform_1, window_bounds = array<i64: 192, 128>}, {pipeline_mode = #tpu.pipeline_mode<synchronous>, transform_indices = @transform_2, window_bounds = array<i64: 1, 128>}, {pipeline_mode = #tpu.pipeline_mode<synchronous>, transform_indices = @transform_3, window_bounds = array<i64: 384, 128>}, {pipeline_mode = #tpu.pipeline_mode<synchronous>, transform_indices = @transform_4, window_bounds = array<i64: 1, 128>}, {pipeline_mode = #tpu.pipeline_mode<synchronous>, transform_indices = @transform_5, window_bounds = array<i64: 384, 128>}, {pipeline_mode = #tpu.pipeline_mode<synchronous>, transform_indices = @transform_6, window_bounds = array<i64: 1, 128>}, {pipeline_mode = #tpu.pipeline_mode<synchronous>, transform_indices = @transform_7, window_bounds = array<i64: 192, 128>}, {pipeline_mode = #tpu.pipeline_mode<synchronous>, transform_indices = @transform_8, window_bounds = array<i64: 1, 128>}, {pipeline_mode = #tpu.pipeline_mode<synchronous>, transform_indices = @transform_9, window_bounds = array<i64: 384, 128>}, {pipeline_mode = #tpu.pipeline_mode<synchronous>, transform_indices = @transform_10, window_bounds = array<i64: 1, 128>}, {pipeline_mode = #tpu.pipeline_mode<synchronous>, transform_indices = @transform_11, window_bounds = array<i64: 384, 128>}, {pipeline_mode = #tpu.pipeline_mode<synchronous>, transform_indices = @transform_12, window_bounds = array<i64: 1, 128>}, {pipeline_mode = #tpu.pipeline_mode<synchronous>, transform_indices = @transform_13, window_bounds = array<i64: 192, 128>}, {pipeline_mode = #tpu.pipeline_mode<synchronous>, transform_indices = @transform_14, window_bounds = array<i64: 1, 128>}, {pipeline_mode = #tpu.pipeline_mode<synchronous>, transform_indices = @transform_15, window_bounds = array<i64: 384, 128>}, {pipeline_mode = #tpu.pipeline_mode<synchronous>, transform_indices = @transform_16, window_bounds = array<i64: 1, 128>}, {pipeline_mode = #tpu.pipeline_mode<synchronous>, transform_indices = @transform_17, window_bounds = array<i64: 384, 128>}, {pipeline_mode = #tpu.pipeline_mode<synchronous>, transform_indices = @transform_18, window_bounds = array<i64: 1, 128>}, {pipeline_mode = #tpu.pipeline_mode<synchronous>, transform_indices = @transform_19, window_bounds = array<i64: 8, 16>}, {pipeline_mode = #tpu.pipeline_mode<synchronous>, transform_indices = @transform_20, window_bounds = array<i64: 128, 64>}, {pipeline_mode = #tpu.pipeline_mode<synchronous>, transform_indices = @transform_21, window_bounds = array<i64: 4, 8>}, {pipeline_mode = #tpu.pipeline_mode<synchronous>, transform_indices = @transform_22, window_bounds = array<i64: 128, 64>}, {transform_indices = @transform_23, window_bounds = array<i64: 1, 4, 128>}]} {
    %c0 = arith.constant 0 : index
    %c0_0 = arith.constant 0 : index
    %c0_1 = arith.constant 0 : index
    %0 = vector.load %arg1[%c0, %c0_0, %c0_1] : memref<1x16x64xf32, #tpu.memory_space<vmem>>, vector<1x16x64xf32>
    %1 = vector.shape_cast %0 : vector<1x16x64xf32> to vector<16x64xf32>
    %cst = arith.constant 0.000000e+00 : f32
    %2 = vector.broadcast %cst : f32 to vector<1x64xf32>
    %3 = vector.extract_strided_slice %1 {offsets = [0, 0], sizes = [15, 64], strides = [1, 1]} : vector<16x64xf32> to vector<15x64xf32>
    %4 = tpu.concatenate %2, %3 in 0 : vector<1x64xf32>, vector<15x64xf32> -> vector<16x64xf32>
    %5 = vector.extract_strided_slice %1 {offsets = [1, 0], sizes = [15, 64], strides = [1, 1]} : vector<16x64xf32> to vector<15x64xf32>
    %6 = tpu.concatenate %5, %2 in 0 : vector<15x64xf32>, vector<1x64xf32> -> vector<16x64xf32>
    %7 = tpu.concatenate %4, %1, %6 in 1 : vector<16x64xf32>, vector<16x64xf32>, vector<16x64xf32> -> vector<16x192xf32>
    %8 = arith.truncf %7 : vector<16x192xf32> to vector<16x192xbf16>
    %c0_2 = arith.constant 0 : index
    %c0_3 = arith.constant 0 : index
    %9 = vector.load %arg2[%c0_2, %c0_3] : memref<192x128xbf16, #tpu.memory_space<vmem>>, vector<192x128xbf16>
    %cst_4 = arith.constant dense<0.000000e+00> : vector<16x128xf32>
    %10 = tpu.matmul %8, %9, %cst_4 {dimension_numbers = #tpu.dot_dimension_numbers<[1], [0], [0], [1], [0, 0, 1, 1], [], []>} : vector<16x192xbf16>, vector<192x128xbf16>, vector<16x128xf32> -> vector<16x128xf32>
    %c0_5 = arith.constant 0 : index
    %c0_6 = arith.constant 0 : index
    %11 = vector.load %arg3[%c0_5, %c0_6] : memref<1x128xf32, #tpu.memory_space<vmem>>, vector<1x128xf32>
    %12 = vector.broadcast %11 : vector<1x128xf32> to vector<16x128xf32>
    %13 = arith.addf %10, %12 : vector<16x128xf32>
    %cst_7 = arith.constant 0.000000e+00 : f32
    %14 = vector.broadcast %cst_7 : f32 to vector<16x128xf32>
    %15 = arith.maximumf %13, %14 : vector<16x128xf32>
    %cst_8 = arith.constant 0.000000e+00 : f32
    %16 = vector.broadcast %cst_8 : f32 to vector<1x128xf32>
    %17 = vector.extract_strided_slice %15 {offsets = [0, 0], sizes = [15, 128], strides = [1, 1]} : vector<16x128xf32> to vector<15x128xf32>
    %18 = tpu.concatenate %16, %17 in 0 : vector<1x128xf32>, vector<15x128xf32> -> vector<16x128xf32>
    %19 = vector.extract_strided_slice %15 {offsets = [1, 0], sizes = [15, 128], strides = [1, 1]} : vector<16x128xf32> to vector<15x128xf32>
    %20 = tpu.concatenate %19, %16 in 0 : vector<15x128xf32>, vector<1x128xf32> -> vector<16x128xf32>
    %21 = tpu.concatenate %18, %15, %20 in 1 : vector<16x128xf32>, vector<16x128xf32>, vector<16x128xf32> -> vector<16x384xf32>
    %22 = arith.truncf %21 : vector<16x384xf32> to vector<16x384xbf16>
    %c0_9 = arith.constant 0 : index
    %c0_10 = arith.constant 0 : index
    %23 = vector.load %arg4[%c0_9, %c0_10] : memref<384x128xbf16, #tpu.memory_space<vmem>>, vector<384x128xbf16>
    %cst_11 = arith.constant dense<0.000000e+00> : vector<16x128xf32>
    %24 = tpu.matmul %22, %23, %cst_11 {dimension_numbers = #tpu.dot_dimension_numbers<[1], [0], [0], [1], [0, 0, 1, 1], [], []>} : vector<16x384xbf16>, vector<384x128xbf16>, vector<16x128xf32> -> vector<16x128xf32>
    %c0_12 = arith.constant 0 : index
    %c0_13 = arith.constant 0 : index
    %25 = vector.load %arg5[%c0_12, %c0_13] : memref<1x128xf32, #tpu.memory_space<vmem>>, vector<1x128xf32>
    %26 = vector.broadcast %25 : vector<1x128xf32> to vector<16x128xf32>
    %27 = arith.addf %24, %26 : vector<16x128xf32>
    %cst_14 = arith.constant 0.000000e+00 : f32
    %28 = vector.broadcast %cst_14 : f32 to vector<16x128xf32>
    %29 = arith.maximumf %27, %28 : vector<16x128xf32>
    %cst_15 = arith.constant 0.000000e+00 : f32
    %30 = vector.broadcast %cst_15 : f32 to vector<1x128xf32>
    %31 = vector.extract_strided_slice %29 {offsets = [0, 0], sizes = [15, 128], strides = [1, 1]} : vector<16x128xf32> to vector<15x128xf32>
    %32 = tpu.concatenate %30, %31 in 0 : vector<1x128xf32>, vector<15x128xf32> -> vector<16x128xf32>
    %33 = vector.extract_strided_slice %29 {offsets = [1, 0], sizes = [15, 128], strides = [1, 1]} : vector<16x128xf32> to vector<15x128xf32>
    %34 = tpu.concatenate %33, %30 in 0 : vector<15x128xf32>, vector<1x128xf32> -> vector<16x128xf32>
    %35 = tpu.concatenate %32, %29, %34 in 1 : vector<16x128xf32>, vector<16x128xf32>, vector<16x128xf32> -> vector<16x384xf32>
    %36 = arith.truncf %35 : vector<16x384xf32> to vector<16x384xbf16>
    %c0_16 = arith.constant 0 : index
    %c0_17 = arith.constant 0 : index
    %37 = vector.load %arg6[%c0_16, %c0_17] : memref<384x128xbf16, #tpu.memory_space<vmem>>, vector<384x128xbf16>
    %cst_18 = arith.constant dense<0.000000e+00> : vector<16x128xf32>
    %38 = tpu.matmul %36, %37, %cst_18 {dimension_numbers = #tpu.dot_dimension_numbers<[1], [0], [0], [1], [0, 0, 1, 1], [], []>} : vector<16x384xbf16>, vector<384x128xbf16>, vector<16x128xf32> -> vector<16x128xf32>
    %c0_19 = arith.constant 0 : index
    %c0_20 = arith.constant 0 : index
    %39 = vector.load %arg7[%c0_19, %c0_20] : memref<1x128xf32, #tpu.memory_space<vmem>>, vector<1x128xf32>
    %40 = vector.broadcast %39 : vector<1x128xf32> to vector<16x128xf32>
    %41 = arith.addf %38, %40 : vector<16x128xf32>
    %cst_21 = arith.constant 0.000000e+00 : f32
    %42 = vector.broadcast %cst_21 : f32 to vector<16x128xf32>
    %43 = arith.maximumf %41, %42 : vector<16x128xf32>
    %c0_22 = arith.constant 0 : index
    %c0_23 = arith.constant 0 : index
    %44 = vector.load %arg20[%c0_22, %c0_23] : memref<8x16xbf16, #tpu.memory_space<vmem>>, vector<8x16xbf16>
    %45 = arith.truncf %43 : vector<16x128xf32> to vector<16x128xbf16>
    %cst_24 = arith.constant dense<0.000000e+00> : vector<8x128xf32>
    %46 = tpu.matmul %44, %45, %cst_24 {dimension_numbers = #tpu.dot_dimension_numbers<[1], [0], [0], [1], [0, 0, 1, 1], [], []>} : vector<8x16xbf16>, vector<16x128xbf16>, vector<8x128xf32> -> vector<8x128xf32>
    %47 = arith.truncf %46 : vector<8x128xf32> to vector<8x128xbf16>
    %c0_25 = arith.constant 0 : index
    %c0_26 = arith.constant 0 : index
    %48 = vector.load %arg21[%c0_25, %c0_26] : memref<128x64xbf16, #tpu.memory_space<vmem>>, vector<128x64xbf16>
    %cst_27 = arith.constant dense<0.000000e+00> : vector<8x64xf32>
    %49 = tpu.matmul %47, %48, %cst_27 {dimension_numbers = #tpu.dot_dimension_numbers<[1], [0], [0], [1], [0, 0, 1, 1], [], []>} : vector<8x128xbf16>, vector<128x64xbf16>, vector<8x64xf32> -> vector<8x64xf32>
    %cst_28 = arith.constant 0.000000e+00 : f32
    %50 = vector.broadcast %cst_28 : f32 to vector<1x64xf32>
    %51 = vector.extract_strided_slice %49 {offsets = [0, 0], sizes = [7, 64], strides = [1, 1]} : vector<8x64xf32> to vector<7x64xf32>
    %52 = tpu.concatenate %50, %51 in 0 : vector<1x64xf32>, vector<7x64xf32> -> vector<8x64xf32>
    %53 = vector.extract_strided_slice %49 {offsets = [1, 0], sizes = [7, 64], strides = [1, 1]} : vector<8x64xf32> to vector<7x64xf32>
    %54 = tpu.concatenate %53, %50 in 0 : vector<7x64xf32>, vector<1x64xf32> -> vector<8x64xf32>
    %55 = tpu.concatenate %52, %49, %54 in 1 : vector<8x64xf32>, vector<8x64xf32>, vector<8x64xf32> -> vector<8x192xf32>
    %56 = arith.truncf %55 : vector<8x192xf32> to vector<8x192xbf16>
    %c0_29 = arith.constant 0 : index
    %c0_30 = arith.constant 0 : index
    %57 = vector.load %arg8[%c0_29, %c0_30] : memref<192x128xbf16, #tpu.memory_space<vmem>>, vector<192x128xbf16>
    %cst_31 = arith.constant dense<0.000000e+00> : vector<8x128xf32>
    %58 = tpu.matmul %56, %57, %cst_31 {dimension_numbers = #tpu.dot_dimension_numbers<[1], [0], [0], [1], [0, 0, 1, 1], [], []>} : vector<8x192xbf16>, vector<192x128xbf16>, vector<8x128xf32> -> vector<8x128xf32>
    %c0_32 = arith.constant 0 : index
    %c0_33 = arith.constant 0 : index
    %59 = vector.load %arg9[%c0_32, %c0_33] : memref<1x128xf32, #tpu.memory_space<vmem>>, vector<1x128xf32>
    %60 = vector.broadcast %59 : vector<1x128xf32> to vector<8x128xf32>
    %61 = arith.addf %58, %60 : vector<8x128xf32>
    %cst_34 = arith.constant 0.000000e+00 : f32
    %62 = vector.broadcast %cst_34 : f32 to vector<8x128xf32>
    %63 = arith.maximumf %61, %62 : vector<8x128xf32>
    %cst_35 = arith.constant 0.000000e+00 : f32
    %64 = vector.broadcast %cst_35 : f32 to vector<1x128xf32>
    %65 = vector.extract_strided_slice %63 {offsets = [0, 0], sizes = [7, 128], strides = [1, 1]} : vector<8x128xf32> to vector<7x128xf32>
    %66 = tpu.concatenate %64, %65 in 0 : vector<1x128xf32>, vector<7x128xf32> -> vector<8x128xf32>
    %67 = vector.extract_strided_slice %63 {offsets = [1, 0], sizes = [7, 128], strides = [1, 1]} : vector<8x128xf32> to vector<7x128xf32>
    %68 = tpu.concatenate %67, %64 in 0 : vector<7x128xf32>, vector<1x128xf32> -> vector<8x128xf32>
    %69 = tpu.concatenate %66, %63, %68 in 1 : vector<8x128xf32>, vector<8x128xf32>, vector<8x128xf32> -> vector<8x384xf32>
    %70 = arith.truncf %69 : vector<8x384xf32> to vector<8x384xbf16>
    %c0_36 = arith.constant 0 : index
    %c0_37 = arith.constant 0 : index
    %71 = vector.load %arg10[%c0_36, %c0_37] : memref<384x128xbf16, #tpu.memory_space<vmem>>, vector<384x128xbf16>
    %cst_38 = arith.constant dense<0.000000e+00> : vector<8x128xf32>
    %72 = tpu.matmul %70, %71, %cst_38 {dimension_numbers = #tpu.dot_dimension_numbers<[1], [0], [0], [1], [0, 0, 1, 1], [], []>} : vector<8x384xbf16>, vector<384x128xbf16>, vector<8x128xf32> -> vector<8x128xf32>
    %c0_39 = arith.constant 0 : index
    %c0_40 = arith.constant 0 : index
    %73 = vector.load %arg11[%c0_39, %c0_40] : memref<1x128xf32, #tpu.memory_space<vmem>>, vector<1x128xf32>
    %74 = vector.broadcast %73 : vector<1x128xf32> to vector<8x128xf32>
    %75 = arith.addf %72, %74 : vector<8x128xf32>
    %cst_41 = arith.constant 0.000000e+00 : f32
    %76 = vector.broadcast %cst_41 : f32 to vector<8x128xf32>
    %77 = arith.maximumf %75, %76 : vector<8x128xf32>
    %cst_42 = arith.constant 0.000000e+00 : f32
    %78 = vector.broadcast %cst_42 : f32 to vector<1x128xf32>
    %79 = vector.extract_strided_slice %77 {offsets = [0, 0], sizes = [7, 128], strides = [1, 1]} : vector<8x128xf32> to vector<7x128xf32>
    %80 = tpu.concatenate %78, %79 in 0 : vector<1x128xf32>, vector<7x128xf32> -> vector<8x128xf32>
    %81 = vector.extract_strided_slice %77 {offsets = [1, 0], sizes = [7, 128], strides = [1, 1]} : vector<8x128xf32> to vector<7x128xf32>
    %82 = tpu.concatenate %81, %78 in 0 : vector<7x128xf32>, vector<1x128xf32> -> vector<8x128xf32>
    %83 = tpu.concatenate %80, %77, %82 in 1 : vector<8x128xf32>, vector<8x128xf32>, vector<8x128xf32> -> vector<8x384xf32>
    %84 = arith.truncf %83 : vector<8x384xf32> to vector<8x384xbf16>
    %c0_43 = arith.constant 0 : index
    %c0_44 = arith.constant 0 : index
    %85 = vector.load %arg12[%c0_43, %c0_44] : memref<384x128xbf16, #tpu.memory_space<vmem>>, vector<384x128xbf16>
    %cst_45 = arith.constant dense<0.000000e+00> : vector<8x128xf32>
    %86 = tpu.matmul %84, %85, %cst_45 {dimension_numbers = #tpu.dot_dimension_numbers<[1], [0], [0], [1], [0, 0, 1, 1], [], []>} : vector<8x384xbf16>, vector<384x128xbf16>, vector<8x128xf32> -> vector<8x128xf32>
    %c0_46 = arith.constant 0 : index
    %c0_47 = arith.constant 0 : index
    %87 = vector.load %arg13[%c0_46, %c0_47] : memref<1x128xf32, #tpu.memory_space<vmem>>, vector<1x128xf32>
    %88 = vector.broadcast %87 : vector<1x128xf32> to vector<8x128xf32>
    %89 = arith.addf %86, %88 : vector<8x128xf32>
    %cst_48 = arith.constant 0.000000e+00 : f32
    %90 = vector.broadcast %cst_48 : f32 to vector<8x128xf32>
    %91 = arith.maximumf %89, %90 : vector<8x128xf32>
    %c0_49 = arith.constant 0 : index
    %c0_50 = arith.constant 0 : index
    %92 = vector.load %arg22[%c0_49, %c0_50] : memref<4x8xbf16, #tpu.memory_space<vmem>>, vector<4x8xbf16>
    %93 = arith.truncf %91 : vector<8x128xf32> to vector<8x128xbf16>
    %cst_51 = arith.constant dense<0.000000e+00> : vector<4x128xf32>
    %94 = tpu.matmul %92, %93, %cst_51 {dimension_numbers = #tpu.dot_dimension_numbers<[1], [0], [0], [1], [0, 0, 1, 1], [], []>} : vector<4x8xbf16>, vector<8x128xbf16>, vector<4x128xf32> -> vector<4x128xf32>
    %95 = arith.truncf %94 : vector<4x128xf32> to vector<4x128xbf16>
    %c0_52 = arith.constant 0 : index
    %c0_53 = arith.constant 0 : index
    %96 = vector.load %arg23[%c0_52, %c0_53] : memref<128x64xbf16, #tpu.memory_space<vmem>>, vector<128x64xbf16>
    %cst_54 = arith.constant dense<0.000000e+00> : vector<4x64xf32>
    %97 = tpu.matmul %95, %96, %cst_54 {dimension_numbers = #tpu.dot_dimension_numbers<[1], [0], [0], [1], [0, 0, 1, 1], [], []>} : vector<4x128xbf16>, vector<128x64xbf16>, vector<4x64xf32> -> vector<4x64xf32>
    %cst_55 = arith.constant 0.000000e+00 : f32
    %98 = vector.broadcast %cst_55 : f32 to vector<1x64xf32>
    %99 = vector.extract_strided_slice %97 {offsets = [0, 0], sizes = [3, 64], strides = [1, 1]} : vector<4x64xf32> to vector<3x64xf32>
    %100 = tpu.concatenate %98, %99 in 0 : vector<1x64xf32>, vector<3x64xf32> -> vector<4x64xf32>
    %101 = vector.extract_strided_slice %97 {offsets = [1, 0], sizes = [3, 64], strides = [1, 1]} : vector<4x64xf32> to vector<3x64xf32>
    %102 = tpu.concatenate %101, %98 in 0 : vector<3x64xf32>, vector<1x64xf32> -> vector<4x64xf32>
    %103 = tpu.concatenate %100, %97, %102 in 1 : vector<4x64xf32>, vector<4x64xf32>, vector<4x64xf32> -> vector<4x192xf32>
    %104 = arith.truncf %103 : vector<4x192xf32> to vector<4x192xbf16>
    %c0_56 = arith.constant 0 : index
    %c0_57 = arith.constant 0 : index
    %105 = vector.load %arg14[%c0_56, %c0_57] : memref<192x128xbf16, #tpu.memory_space<vmem>>, vector<192x128xbf16>
    %cst_58 = arith.constant dense<0.000000e+00> : vector<4x128xf32>
    %106 = tpu.matmul %104, %105, %cst_58 {dimension_numbers = #tpu.dot_dimension_numbers<[1], [0], [0], [1], [0, 0, 1, 1], [], []>} : vector<4x192xbf16>, vector<192x128xbf16>, vector<4x128xf32> -> vector<4x128xf32>
    %c0_59 = arith.constant 0 : index
    %c0_60 = arith.constant 0 : index
    %107 = vector.load %arg15[%c0_59, %c0_60] : memref<1x128xf32, #tpu.memory_space<vmem>>, vector<1x128xf32>
    %108 = vector.broadcast %107 : vector<1x128xf32> to vector<4x128xf32>
    %109 = arith.addf %106, %108 : vector<4x128xf32>
    %cst_61 = arith.constant 0.000000e+00 : f32
    %110 = vector.broadcast %cst_61 : f32 to vector<4x128xf32>
    %111 = arith.maximumf %109, %110 : vector<4x128xf32>
    %cst_62 = arith.constant 0.000000e+00 : f32
    %112 = vector.broadcast %cst_62 : f32 to vector<1x128xf32>
    %113 = vector.extract_strided_slice %111 {offsets = [0, 0], sizes = [3, 128], strides = [1, 1]} : vector<4x128xf32> to vector<3x128xf32>
    %114 = tpu.concatenate %112, %113 in 0 : vector<1x128xf32>, vector<3x128xf32> -> vector<4x128xf32>
    %115 = vector.extract_strided_slice %111 {offsets = [1, 0], sizes = [3, 128], strides = [1, 1]} : vector<4x128xf32> to vector<3x128xf32>
    %116 = tpu.concatenate %115, %112 in 0 : vector<3x128xf32>, vector<1x128xf32> -> vector<4x128xf32>
    %117 = tpu.concatenate %114, %111, %116 in 1 : vector<4x128xf32>, vector<4x128xf32>, vector<4x128xf32> -> vector<4x384xf32>
    %118 = arith.truncf %117 : vector<4x384xf32> to vector<4x384xbf16>
    %c0_63 = arith.constant 0 : index
    %c0_64 = arith.constant 0 : index
    %119 = vector.load %arg16[%c0_63, %c0_64] : memref<384x128xbf16, #tpu.memory_space<vmem>>, vector<384x128xbf16>
    %cst_65 = arith.constant dense<0.000000e+00> : vector<4x128xf32>
    %120 = tpu.matmul %118, %119, %cst_65 {dimension_numbers = #tpu.dot_dimension_numbers<[1], [0], [0], [1], [0, 0, 1, 1], [], []>} : vector<4x384xbf16>, vector<384x128xbf16>, vector<4x128xf32> -> vector<4x128xf32>
    %c0_66 = arith.constant 0 : index
    %c0_67 = arith.constant 0 : index
    %121 = vector.load %arg17[%c0_66, %c0_67] : memref<1x128xf32, #tpu.memory_space<vmem>>, vector<1x128xf32>
    %122 = vector.broadcast %121 : vector<1x128xf32> to vector<4x128xf32>
    %123 = arith.addf %120, %122 : vector<4x128xf32>
    %cst_68 = arith.constant 0.000000e+00 : f32
    %124 = vector.broadcast %cst_68 : f32 to vector<4x128xf32>
    %125 = arith.maximumf %123, %124 : vector<4x128xf32>
    %cst_69 = arith.constant 0.000000e+00 : f32
    %126 = vector.broadcast %cst_69 : f32 to vector<1x128xf32>
    %127 = vector.extract_strided_slice %125 {offsets = [0, 0], sizes = [3, 128], strides = [1, 1]} : vector<4x128xf32> to vector<3x128xf32>
    %128 = tpu.concatenate %126, %127 in 0 : vector<1x128xf32>, vector<3x128xf32> -> vector<4x128xf32>
    %129 = vector.extract_strided_slice %125 {offsets = [1, 0], sizes = [3, 128], strides = [1, 1]} : vector<4x128xf32> to vector<3x128xf32>
    %130 = tpu.concatenate %129, %126 in 0 : vector<3x128xf32>, vector<1x128xf32> -> vector<4x128xf32>
    %131 = tpu.concatenate %128, %125, %130 in 1 : vector<4x128xf32>, vector<4x128xf32>, vector<4x128xf32> -> vector<4x384xf32>
    %132 = arith.truncf %131 : vector<4x384xf32> to vector<4x384xbf16>
    %c0_70 = arith.constant 0 : index
    %c0_71 = arith.constant 0 : index
    %133 = vector.load %arg18[%c0_70, %c0_71] : memref<384x128xbf16, #tpu.memory_space<vmem>>, vector<384x128xbf16>
    %cst_72 = arith.constant dense<0.000000e+00> : vector<4x128xf32>
    %134 = tpu.matmul %132, %133, %cst_72 {dimension_numbers = #tpu.dot_dimension_numbers<[1], [0], [0], [1], [0, 0, 1, 1], [], []>} : vector<4x384xbf16>, vector<384x128xbf16>, vector<4x128xf32> -> vector<4x128xf32>
    %c0_73 = arith.constant 0 : index
    %c0_74 = arith.constant 0 : index
    %135 = vector.load %arg19[%c0_73, %c0_74] : memref<1x128xf32, #tpu.memory_space<vmem>>, vector<1x128xf32>
    %136 = vector.broadcast %135 : vector<1x128xf32> to vector<4x128xf32>
    %137 = arith.addf %134, %136 : vector<4x128xf32>
    %cst_75 = arith.constant 0.000000e+00 : f32
    %138 = vector.broadcast %cst_75 : f32 to vector<4x128xf32>
    %139 = arith.maximumf %137, %138 : vector<4x128xf32>
    %140 = vector.shape_cast %139 : vector<4x128xf32> to vector<1x4x128xf32>
    %c0_76 = arith.constant 0 : index
    %c0_77 = arith.constant 0 : index
    %c0_78 = arith.constant 0 : index
    %141 = vector.load %arg24[%c0_76, %c0_77, %c0_78] : memref<1x4x128xf32, #tpu.memory_space<vmem>>, vector<1x4x128xf32>
    tpu.vector_store %arg24[%c0_76, %c0_77, %c0_78], %140 {strides = array<i32>} : memref<1x4x128xf32, #tpu.memory_space<vmem>>, vector<1x4x128xf32>,
    return
  }
  func.func @transform_0(%arg0: i32) -> (i32, i32, i32) {
    %c0_i32 = arith.constant 0 : i32
    %c0_i32_0 = arith.constant 0 : i32
    %c0_i32_1 = arith.constant 0 : i32
    return %arg0, %c0_i32, %c0_i32_0 : i32, i32, i32
  }
  func.func @transform_1(%arg0: i32) -> (i32, i32) {
    %c0_i32 = arith.constant 0 : i32
    %c0_i32_0 = arith.constant 0 : i32
    %c0_i32_1 = arith.constant 0 : i32
    return %c0_i32, %c0_i32_0 : i32, i32
  }
  func.func @transform_2(%arg0: i32) -> (i32, i32) {
    %c0_i32 = arith.constant 0 : i32
    %c0_i32_0 = arith.constant 0 : i32
    %c0_i32_1 = arith.constant 0 : i32
    return %c0_i32, %c0_i32_0 : i32, i32
  }
  func.func @transform_3(%arg0: i32) -> (i32, i32) {
    %c0_i32 = arith.constant 0 : i32
    %c0_i32_0 = arith.constant 0 : i32
    %c0_i32_1 = arith.constant 0 : i32
    return %c0_i32, %c0_i32_0 : i32, i32
  }
  func.func @transform_4(%arg0: i32) -> (i32, i32) {
    %c0_i32 = arith.constant 0 : i32
    %c0_i32_0 = arith.constant 0 : i32
    %c0_i32_1 = arith.constant 0 : i32
    return %c0_i32, %c0_i32_0 : i32, i32
  }
  func.func @transform_5(%arg0: i32) -> (i32, i32) {
    %c0_i32 = arith.constant 0 : i32
    %c0_i32_0 = arith.constant 0 : i32
    %c0_i32_1 = arith.constant 0 : i32
    return %c0_i32, %c0_i32_0 : i32, i32
  }
  func.func @transform_6(%arg0: i32) -> (i32, i32) {
    %c0_i32 = arith.constant 0 : i32
    %c0_i32_0 = arith.constant 0 : i32
    %c0_i32_1 = arith.constant 0 : i32
    return %c0_i32, %c0_i32_0 : i32, i32
  }
  func.func @transform_7(%arg0: i32) -> (i32, i32) {
    %c0_i32 = arith.constant 0 : i32
    %c0_i32_0 = arith.constant 0 : i32
    %c0_i32_1 = arith.constant 0 : i32
    return %c0_i32, %c0_i32_0 : i32, i32
  }
  func.func @transform_8(%arg0: i32) -> (i32, i32) {
    %c0_i32 = arith.constant 0 : i32
    %c0_i32_0 = arith.constant 0 : i32
    %c0_i32_1 = arith.constant 0 : i32
    return %c0_i32, %c0_i32_0 : i32, i32
  }
  func.func @transform_9(%arg0: i32) -> (i32, i32) {
    %c0_i32 = arith.constant 0 : i32
    %c0_i32_0 = arith.constant 0 : i32
    %c0_i32_1 = arith.constant 0 : i32
    return %c0_i32, %c0_i32_0 : i32, i32
  }
  func.func @transform_10(%arg0: i32) -> (i32, i32) {
    %c0_i32 = arith.constant 0 : i32
    %c0_i32_0 = arith.constant 0 : i32
    %c0_i32_1 = arith.constant 0 : i32
    return %c0_i32, %c0_i32_0 : i32, i32
  }
  func.func @transform_11(%arg0: i32) -> (i32, i32) {
    %c0_i32 = arith.constant 0 : i32
    %c0_i32_0 = arith.constant 0 : i32
    %c0_i32_1 = arith.constant 0 : i32
    return %c0_i32, %c0_i32_0 : i32, i32
  }
  func.func @transform_12(%arg0: i32) -> (i32, i32) {
    %c0_i32 = arith.constant 0 : i32
    %c0_i32_0 = arith.constant 0 : i32
    %c0_i32_1 = arith.constant 0 : i32
    return %c0_i32, %c0_i32_0 : i32, i32
  }
  func.func @transform_13(%arg0: i32) -> (i32, i32) {
    %c0_i32 = arith.constant 0 : i32
    %c0_i32_0 = arith.constant 0 : i32
    %c0_i32_1 = arith.constant 0 : i32
    return %c0_i32, %c0_i32_0 : i32, i32
  }
  func.func @transform_14(%arg0: i32) -> (i32, i32) {
    %c0_i32 = arith.constant 0 : i32
    %c0_i32_0 = arith.constant 0 : i32
    %c0_i32_1 = arith.constant 0 : i32
    return %c0_i32, %c0_i32_0 : i32, i32
  }
  func.func @transform_15(%arg0: i32) -> (i32, i32) {
    %c0_i32 = arith.constant 0 : i32
    %c0_i32_0 = arith.constant 0 : i32
    %c0_i32_1 = arith.constant 0 : i32
    return %c0_i32, %c0_i32_0 : i32, i32
  }
  func.func @transform_16(%arg0: i32) -> (i32, i32) {
    %c0_i32 = arith.constant 0 : i32
    %c0_i32_0 = arith.constant 0 : i32
    %c0_i32_1 = arith.constant 0 : i32
    return %c0_i32, %c0_i32_0 : i32, i32
  }
  func.func @transform_17(%arg0: i32) -> (i32, i32) {
    %c0_i32 = arith.constant 0 : i32
    %c0_i32_0 = arith.constant 0 : i32
    %c0_i32_1 = arith.constant 0 : i32
    return %c0_i32, %c0_i32_0 : i32, i32
  }
  func.func @transform_18(%arg0: i32) -> (i32, i32) {
    %c0_i32 = arith.constant 0 : i32
    %c0_i32_0 = arith.constant 0 : i32
    %c0_i32_1 = arith.constant 0 : i32
    return %c0_i32, %c0_i32_0 : i32, i32
  }
  func.func @transform_19(%arg0: i32) -> (i32, i32) {
    %c0_i32 = arith.constant 0 : i32
    %c0_i32_0 = arith.constant 0 : i32
    %c0_i32_1 = arith.constant 0 : i32
    return %c0_i32, %c0_i32_0 : i32, i32
  }
  func.func @transform_20(%arg0: i32) -> (i32, i32) {
    %c0_i32 = arith.constant 0 : i32
    %c0_i32_0 = arith.constant 0 : i32
    %c0_i32_1 = arith.constant 0 : i32
    return %c0_i32, %c0_i32_0 : i32, i32
  }
  func.func @transform_21(%arg0: i32) -> (i32, i32) {
    %c0_i32 = arith.constant 0 : i32
    %c0_i32_0 = arith.constant 0 : i32
    %c0_i32_1 = arith.constant 0 : i32
    return %c0_i32, %c0_i32_0 : i32, i32
  }
  func.func @transform_22(%arg0: i32) -> (i32, i32) {
    %c0_i32 = arith.constant 0 : i32
    %c0_i32_0 = arith.constant 0 : i32
    %c0_i32_1 = arith.constant 0 : i32
    return %c0_i32, %c0_i32_0 : i32, i32
  }
  func.func @transform_23(%arg0: i32) -> (i32, i32, i32) {
    %c0_i32 = arith.constant 0 : i32
    %c0_i32_0 = arith.constant 0 : i32
    %c0_i32_1 = arith.constant 0 : i32
    return %arg0, %c0_i32, %c0_i32_0 : i32, i32, i32
  }
}

module attributes {stable_mosaic.version = 11 : i64} {
  func.func @kernel(%arg0: i32, %arg1: memref<1x16x64xf32, #tpu.memory_space<vmem>>, %arg2: memref<192x128xbf16, #tpu.memory_space<vmem>>, %arg3: memref<1x128xf32, #tpu.memory_space<vmem>>, %arg4: memref<384x128xbf16, #tpu.memory_space<vmem>>, %arg5: memref<1x128xf32, #tpu.memory_space<vmem>>, %arg6: memref<384x128xbf16, #tpu.memory_space<vmem>>, %arg7: memref<1x128xf32, #tpu.memory_space<vmem>>, %arg8: memref<192x128xbf16, #tpu.memory_space<vmem>>, %arg9: memref<1x128xf32, #tpu.memory_space<vmem>>, %arg10: memref<384x128xbf16, #tpu.memory_space<vmem>>, %arg11: memref<1x128xf32, #tpu.memory_space<vmem>>, %arg12: memref<384x128xbf16, #tpu.memory_space<vmem>>, %arg13: memref<1x128xf32, #tpu.memory_space<vmem>>, %arg14: memref<192x128xbf16, #tpu.memory_space<vmem>>, %arg15: memref<1x128xf32, #tpu.memory_space<vmem>>, %arg16: memref<384x128xbf16, #tpu.memory_space<vmem>>, %arg17: memref<1x128xf32, #tpu.memory_space<vmem>>, %arg18: memref<384x128xbf16, #tpu.memory_space<vmem>>, %arg19: memref<1x128xf32, #tpu.memory_space<vmem>>, %arg20: memref<8x16xbf16, #tpu.memory_space<vmem>>, %arg21: memref<128x64xbf16, #tpu.memory_space<vmem>>, %arg22: memref<4x8xbf16, #tpu.memory_space<vmem>>, %arg23: memref<128x64xbf16, #tpu.memory_space<vmem>>, %arg24: memref<1x4x128xf32, #tpu.memory_space<vmem>>) attributes {dimension_semantics = [#tpu.dimension_semantics<parallel>], iteration_bounds = array<i64: 2>, scalar_prefetch = 0 : i64, scratch_operands = 0 : i64, tpu.core_type = #tpu.core_type<tc>, window_params = [{transform_indices = @transform_0, window_bounds = array<i64: 1, 16, 64>}, {pipeline_mode = #tpu.pipeline_mode<synchronous>, transform_indices = @transform_1, window_bounds = array<i64: 192, 128>}, {pipeline_mode = #tpu.pipeline_mode<synchronous>, transform_indices = @transform_2, window_bounds = array<i64: 1, 128>}, {pipeline_mode = #tpu.pipeline_mode<synchronous>, transform_indices = @transform_3, window_bounds = array<i64: 384, 128>}, {pipeline_mode = #tpu.pipeline_mode<synchronous>, transform_indices = @transform_4, window_bounds = array<i64: 1, 128>}, {pipeline_mode = #tpu.pipeline_mode<synchronous>, transform_indices = @transform_5, window_bounds = array<i64: 384, 128>}, {pipeline_mode = #tpu.pipeline_mode<synchronous>, transform_indices = @transform_6, window_bounds = array<i64: 1, 128>}, {pipeline_mode = #tpu.pipeline_mode<synchronous>, transform_indices = @transform_7, window_bounds = array<i64: 192, 128>}, {pipeline_mode = #tpu.pipeline_mode<synchronous>, transform_indices = @transform_8, window_bounds = array<i64: 1, 128>}, {pipeline_mode = #tpu.pipeline_mode<synchronous>, transform_indices = @transform_9, window_bounds = array<i64: 384, 128>}, {pipeline_mode = #tpu.pipeline_mode<synchronous>, transform_indices = @transform_10, window_bounds = array<i64: 1, 128>}, {pipeline_mode = #tpu.pipeline_mode<synchronous>, transform_indices = @transform_11, window_bounds = array<i64: 384, 128>}, {pipeline_mode = #tpu.pipeline_mode<synchronous>, transform_indices = @transform_12, window_bounds = array<i64: 1, 128>}, {pipeline_mode = #tpu.pipeline_mode<synchronous>, transform_indices = @transform_13, window_bounds = array<i64: 192, 128>}, {pipeline_mode = #tpu.pipeline_mode<synchronous>, transform_indices = @transform_14, window_bounds = array<i64: 1, 128>}, {pipeline_mode = #tpu.pipeline_mode<synchronous>, transform_indices = @transform_15, window_bounds = array<i64: 384, 128>}, {pipeline_mode = #tpu.pipeline_mode<synchronous>, transform_indices = @transform_16, window_bounds = array<i64: 1, 128>}, {pipeline_mode = #tpu.pipeline_mode<synchronous>, transform_indices = @transform_17, window_bounds = array<i64: 384, 128>}, {pipeline_mode = #tpu.pipeline_mode<synchronous>, transform_indices = @transform_18, window_bounds = array<i64: 1, 128>}, {pipeline_mode = #tpu.pipeline_mode<synchronous>, transform_indices = @transform_19, window_bounds = array<i64: 8, 16>}, {pipeline_mode = #tpu.pipeline_mode<synchronous>, transform_indices = @transform_20, window_bounds = array<i64: 128, 64>}, {pipeline_mode = #tpu.pipeline_mode<synchronous>, transform_indices = @transform_21, window_bounds = array<i64: 4, 8>}, {pipeline_mode = #tpu.pipeline_mode<synchronous>, transform_indices = @transform_22, window_bounds = array<i64: 128, 64>}, {transform_indices = @transform_23, window_bounds = array<i64: 1, 4, 128>}]} {
    %c0 = arith.constant 0 : index
    %c0_0 = arith.constant 0 : index
    %c0_1 = arith.constant 0 : index
    %0 = vector.load %arg1[%c0, %c0_0, %c0_1] : memref<1x16x64xf32, #tpu.memory_space<vmem>>, vector<1x16x64xf32>
    %1 = vector.shape_cast %0 : vector<1x16x64xf32> to vector<16x64xf32>
    %cst = arith.constant 0.000000e+00 : f32
    %2 = vector.broadcast %cst : f32 to vector<1x64xf32>
    %3 = vector.extract_strided_slice %1 {offsets = [0, 0], sizes = [15, 64], strides = [1, 1]} : vector<16x64xf32> to vector<15x64xf32>
    %4 = tpu.concatenate %2, %3 in 0 : vector<1x64xf32>, vector<15x64xf32> -> vector<16x64xf32>
    %5 = vector.extract_strided_slice %1 {offsets = [1, 0], sizes = [15, 64], strides = [1, 1]} : vector<16x64xf32> to vector<15x64xf32>
    %6 = tpu.concatenate %5, %2 in 0 : vector<15x64xf32>, vector<1x64xf32> -> vector<16x64xf32>
    %7 = tpu.concatenate %4, %1, %6 in 1 : vector<16x64xf32>, vector<16x64xf32>, vector<16x64xf32> -> vector<16x192xf32>
    %8 = arith.truncf %7 : vector<16x192xf32> to vector<16x192xbf16>
    %c0_2 = arith.constant 0 : index
    %c0_3 = arith.constant 0 : index
    %9 = vector.load %arg2[%c0_2, %c0_3] : memref<192x128xbf16, #tpu.memory_space<vmem>>, vector<192x128xbf16>
    %cst_4 = arith.constant dense<0.000000e+00> : vector<16x128xf32>
    %10 = tpu.matmul %8, %9, %cst_4 {dimension_numbers = #tpu.dot_dimension_numbers<[1], [0], [0], [1], [0, 0, 1, 1], [], []>} : vector<16x192xbf16>, vector<192x128xbf16>, vector<16x128xf32> -> vector<16x128xf32>
    %c0_5 = arith.constant 0 : index
    %c0_6 = arith.constant 0 : index
    %11 = vector.load %arg3[%c0_5, %c0_6] : memref<1x128xf32, #tpu.memory_space<vmem>>, vector<1x128xf32>
    %12 = vector.broadcast %11 : vector<1x128xf32> to vector<16x128xf32>
    %13 = arith.addf %10, %12 : vector<16x128xf32>
    %cst_7 = arith.constant 0.000000e+00 : f32
    %14 = vector.broadcast %cst_7 : f32 to vector<16x128xf32>
    %15 = arith.maximumf %13, %14 : vector<16x128xf32>
    %cst_8 = arith.constant 0.000000e+00 : f32
    %16 = vector.broadcast %cst_8 : f32 to vector<1x128xf32>
    %17 = vector.extract_strided_slice %15 {offsets = [0, 0], sizes = [15, 128], strides = [1, 1]} : vector<16x128xf32> to vector<15x128xf32>
    %18 = tpu.concatenate %16, %17 in 0 : vector<1x128xf32>, vector<15x128xf32> -> vector<16x128xf32>
    %19 = vector.extract_strided_slice %15 {offsets = [1, 0], sizes = [15, 128], strides = [1, 1]} : vector<16x128xf32> to vector<15x128xf32>
    %20 = tpu.concatenate %19, %16 in 0 : vector<15x128xf32>, vector<1x128xf32> -> vector<16x128xf32>
    %21 = tpu.concatenate %18, %15, %20 in 1 : vector<16x128xf32>, vector<16x128xf32>, vector<16x128xf32> -> vector<16x384xf32>
    %22 = arith.truncf %21 : vector<16x384xf32> to vector<16x384xbf16>
    %c0_9 = arith.constant 0 : index
    %c0_10 = arith.constant 0 : index
    %23 = vector.load %arg4[%c0_9, %c0_10] : memref<384x128xbf16, #tpu.memory_space<vmem>>, vector<384x128xbf16>
    %cst_11 = arith.constant dense<0.000000e+00> : vector<16x128xf32>
    %24 = tpu.matmul %22, %23, %cst_11 {dimension_numbers = #tpu.dot_dimension_numbers<[1], [0], [0], [1], [0, 0, 1, 1], [], []>} : vector<16x384xbf16>, vector<384x128xbf16>, vector<16x128xf32> -> vector<16x128xf32>
    %c0_12 = arith.constant 0 : index
    %c0_13 = arith.constant 0 : index
    %25 = vector.load %arg5[%c0_12, %c0_13] : memref<1x128xf32, #tpu.memory_space<vmem>>, vector<1x128xf32>
    %26 = vector.broadcast %25 : vector<1x128xf32> to vector<16x128xf32>
    %27 = arith.addf %24, %26 : vector<16x128xf32>
    %cst_14 = arith.constant 0.000000e+00 : f32
    %28 = vector.broadcast %cst_14 : f32 to vector<16x128xf32>
    %29 = arith.maximumf %27, %28 : vector<16x128xf32>
    %cst_15 = arith.constant 0.000000e+00 : f32
    %30 = vector.broadcast %cst_15 : f32 to vector<1x128xf32>
    %31 = vector.extract_strided_slice %29 {offsets = [0, 0], sizes = [15, 128], strides = [1, 1]} : vector<16x128xf32> to vector<15x128xf32>
    %32 = tpu.concatenate %30, %31 in 0 : vector<1x128xf32>, vector<15x128xf32> -> vector<16x128xf32>
    %33 = vector.extract_strided_slice %29 {offsets = [1, 0], sizes = [15, 128], strides = [1, 1]} : vector<16x128xf32> to vector<15x128xf32>
    %34 = tpu.concatenate %33, %30 in 0 : vector<15x128xf32>, vector<1x128xf32> -> vector<16x128xf32>
    %35 = tpu.concatenate %32, %29, %34 in 1 : vector<16x128xf32>, vector<16x128xf32>, vector<16x128xf32> -> vector<16x384xf32>
    %36 = arith.truncf %35 : vector<16x384xf32> to vector<16x384xbf16>
    %c0_16 = arith.constant 0 : index
    %c0_17 = arith.constant 0 : index
    %37 = vector.load %arg6[%c0_16, %c0_17] : memref<384x128xbf16, #tpu.memory_space<vmem>>, vector<384x128xbf16>
    %cst_18 = arith.constant dense<0.000000e+00> : vector<16x128xf32>
    %38 = tpu.matmul %36, %37, %cst_18 {dimension_numbers = #tpu.dot_dimension_numbers<[1], [0], [0], [1], [0, 0, 1, 1], [], []>} : vector<16x384xbf16>, vector<384x128xbf16>, vector<16x128xf32> -> vector<16x128xf32>
    %c0_19 = arith.constant 0 : index
    %c0_20 = arith.constant 0 : index
    %39 = vector.load %arg7[%c0_19, %c0_20] : memref<1x128xf32, #tpu.memory_space<vmem>>, vector<1x128xf32>
    %40 = vector.broadcast %39 : vector<1x128xf32> to vector<16x128xf32>
    %41 = arith.addf %38, %40 : vector<16x128xf32>
    %cst_21 = arith.constant 0.000000e+00 : f32
    %42 = vector.broadcast %cst_21 : f32 to vector<16x128xf32>
    %43 = arith.maximumf %41, %42 : vector<16x128xf32>
    %c0_22 = arith.constant 0 : index
    %c0_23 = arith.constant 0 : index
    %44 = vector.load %arg20[%c0_22, %c0_23] : memref<8x16xbf16, #tpu.memory_space<vmem>>, vector<8x16xbf16>
    %45 = arith.truncf %43 : vector<16x128xf32> to vector<16x128xbf16>
    %cst_24 = arith.constant dense<0.000000e+00> : vector<8x128xf32>
    %46 = tpu.matmul %44, %45, %cst_24 {dimension_numbers = #tpu.dot_dimension_numbers<[1], [0], [0], [1], [0, 0, 1, 1], [], []>} : vector<8x16xbf16>, vector<16x128xbf16>, vector<8x128xf32> -> vector<8x128xf32>
    %47 = arith.truncf %46 : vector<8x128xf32> to vector<8x128xbf16>
    %c0_25 = arith.constant 0 : index
    %c0_26 = arith.constant 0 : index
    %48 = vector.load %arg21[%c0_25, %c0_26] : memref<128x64xbf16, #tpu.memory_space<vmem>>, vector<128x64xbf16>
    %cst_27 = arith.constant dense<0.000000e+00> : vector<8x64xf32>
    %49 = tpu.matmul %47, %48, %cst_27 {dimension_numbers = #tpu.dot_dimension_numbers<[1], [0], [0], [1], [0, 0, 1, 1], [], []>} : vector<8x128xbf16>, vector<128x64xbf16>, vector<8x64xf32> -> vector<8x64xf32>
    %cst_28 = arith.constant 0.000000e+00 : f32
    %50 = vector.broadcast %cst_28 : f32 to vector<1x64xf32>
    %51 = vector.extract_strided_slice %49 {offsets = [0, 0], sizes = [7, 64], strides = [1, 1]} : vector<8x64xf32> to vector<7x64xf32>
    %52 = tpu.concatenate %50, %51 in 0 : vector<1x64xf32>, vector<7x64xf32> -> vector<8x64xf32>
    %53 = vector.extract_strided_slice %49 {offsets = [1, 0], sizes = [7, 64], strides = [1, 1]} : vector<8x64xf32> to vector<7x64xf32>
    %54 = tpu.concatenate %53, %50 in 0 : vector<7x64xf32>, vector<1x64xf32> -> vector<8x64xf32>
    %55 = tpu.concatenate %52, %49, %54 in 1 : vector<8x64xf32>, vector<8x64xf32>, vector<8x64xf32> -> vector<8x192xf32>
    %56 = arith.truncf %55 : vector<8x192xf32> to vector<8x192xbf16>
    %c0_29 = arith.constant 0 : index
    %c0_30 = arith.constant 0 : index
    %57 = vector.load %arg8[%c0_29, %c0_30] : memref<192x128xbf16, #tpu.memory_space<vmem>>, vector<192x128xbf16>
    %cst_31 = arith.constant dense<0.000000e+00> : vector<8x128xf32>
    %58 = tpu.matmul %56, %57, %cst_31 {dimension_numbers = #tpu.dot_dimension_numbers<[1], [0], [0], [1], [0, 0, 1, 1], [], []>} : vector<8x192xbf16>, vector<192x128xbf16>, vector<8x128xf32> -> vector<8x128xf32>
    %c0_32 = arith.constant 0 : index
    %c0_33 = arith.constant 0 : index
    %59 = vector.load %arg9[%c0_32, %c0_33] : memref<1x128xf32, #tpu.memory_space<vmem>>, vector<1x128xf32>
    %60 = vector.broadcast %59 : vector<1x128xf32> to vector<8x128xf32>
    %61 = arith.addf %58, %60 : vector<8x128xf32>
    %cst_34 = arith.constant 0.000000e+00 : f32
    %62 = vector.broadcast %cst_34 : f32 to vector<8x128xf32>
    %63 = arith.maximumf %61, %62 : vector<8x128xf32>
    %cst_35 = arith.constant 0.000000e+00 : f32
    %64 = vector.broadcast %cst_35 : f32 to vector<1x128xf32>
    %65 = vector.extract_strided_slice %63 {offsets = [0, 0], sizes = [7, 128], strides = [1, 1]} : vector<8x128xf32> to vector<7x128xf32>
    %66 = tpu.concatenate %64, %65 in 0 : vector<1x128xf32>, vector<7x128xf32> -> vector<8x128xf32>
    %67 = vector.extract_strided_slice %63 {offsets = [1, 0], sizes = [7, 128], strides = [1, 1]} : vector<8x128xf32> to vector<7x128xf32>
    %68 = tpu.concatenate %67, %64 in 0 : vector<7x128xf32>, vector<1x128xf32> -> vector<8x128xf32>
    %69 = tpu.concatenate %66, %63, %68 in 1 : vector<8x128xf32>, vector<8x128xf32>, vector<8x128xf32> -> vector<8x384xf32>
    %70 = arith.truncf %69 : vector<8x384xf32> to vector<8x384xbf16>
    %c0_36 = arith.constant 0 : index
    %c0_37 = arith.constant 0 : index
    %71 = vector.load %arg10[%c0_36, %c0_37] : memref<384x128xbf16, #tpu.memory_space<vmem>>, vector<384x128xbf16>
    %cst_38 = arith.constant dense<0.000000e+00> : vector<8x128xf32>
    %72 = tpu.matmul %70, %71, %cst_38 {dimension_numbers = #tpu.dot_dimension_numbers<[1], [0], [0], [1], [0, 0, 1, 1], [], []>} : vector<8x384xbf16>, vector<384x128xbf16>, vector<8x128xf32> -> vector<8x128xf32>
    %c0_39 = arith.constant 0 : index
    %c0_40 = arith.constant 0 : index
    %73 = vector.load %arg11[%c0_39, %c0_40] : memref<1x128xf32, #tpu.memory_space<vmem>>, vector<1x128xf32>
    %74 = vector.broadcast %73 : vector<1x128xf32> to vector<8x128xf32>
    %75 = arith.addf %72, %74 : vector<8x128xf32>
    %cst_41 = arith.constant 0.000000e+00 : f32
    %76 = vector.broadcast %cst_41 : f32 to vector<8x128xf32>
    %77 = arith.maximumf %75, %76 : vector<8x128xf32>
    %cst_42 = arith.constant 0.000000e+00 : f32
    %78 = vector.broadcast %cst_42 : f32 to vector<1x128xf32>
    %79 = vector.extract_strided_slice %77 {offsets = [0, 0], sizes = [7, 128], strides = [1, 1]} : vector<8x128xf32> to vector<7x128xf32>
    %80 = tpu.concatenate %78, %79 in 0 : vector<1x128xf32>, vector<7x128xf32> -> vector<8x128xf32>
    %81 = vector.extract_strided_slice %77 {offsets = [1, 0], sizes = [7, 128], strides = [1, 1]} : vector<8x128xf32> to vector<7x128xf32>
    %82 = tpu.concatenate %81, %78 in 0 : vector<7x128xf32>, vector<1x128xf32> -> vector<8x128xf32>
    %83 = tpu.concatenate %80, %77, %82 in 1 : vector<8x128xf32>, vector<8x128xf32>, vector<8x128xf32> -> vector<8x384xf32>
    %84 = arith.truncf %83 : vector<8x384xf32> to vector<8x384xbf16>
    %c0_43 = arith.constant 0 : index
    %c0_44 = arith.constant 0 : index
    %85 = vector.load %arg12[%c0_43, %c0_44] : memref<384x128xbf16, #tpu.memory_space<vmem>>, vector<384x128xbf16>
    %cst_45 = arith.constant dense<0.000000e+00> : vector<8x128xf32>
    %86 = tpu.matmul %84, %85, %cst_45 {dimension_numbers = #tpu.dot_dimension_numbers<[1], [0], [0], [1], [0, 0, 1, 1], [], []>} : vector<8x384xbf16>, vector<384x128xbf16>, vector<8x128xf32> -> vector<8x128xf32>
    %c0_46 = arith.constant 0 : index
    %c0_47 = arith.constant 0 : index
    %87 = vector.load %arg13[%c0_46, %c0_47] : memref<1x128xf32, #tpu.memory_space<vmem>>, vector<1x128xf32>
    %88 = vector.broadcast %87 : vector<1x128xf32> to vector<8x128xf32>
    %89 = arith.addf %86, %88 : vector<8x128xf32>
    %cst_48 = arith.constant 0.000000e+00 : f32
    %90 = vector.broadcast %cst_48 : f32 to vector<8x128xf32>
    %91 = arith.maximumf %89, %90 : vector<8x128xf32>
    %c0_49 = arith.constant 0 : index
    %c0_50 = arith.constant 0 : index
    %92 = vector.load %arg22[%c0_49, %c0_50] : memref<4x8xbf16, #tpu.memory_space<vmem>>, vector<4x8xbf16>
    %93 = arith.truncf %91 : vector<8x128xf32> to vector<8x128xbf16>
    %cst_51 = arith.constant dense<0.000000e+00> : vector<4x128xf32>
    %94 = tpu.matmul %92, %93, %cst_51 {dimension_numbers = #tpu.dot_dimension_numbers<[1], [0], [0], [1], [0, 0, 1, 1], [], []>} : vector<4x8xbf16>, vector<8x128xbf16>, vector<4x128xf32> -> vector<4x128xf32>
    %95 = arith.truncf %94 : vector<4x128xf32> to vector<4x128xbf16>
    %c0_52 = arith.constant 0 : index
    %c0_53 = arith.constant 0 : index
    %96 = vector.load %arg23[%c0_52, %c0_53] : memref<128x64xbf16, #tpu.memory_space<vmem>>, vector<128x64xbf16>
    %cst_54 = arith.constant dense<0.000000e+00> : vector<4x64xf32>
    %97 = tpu.matmul %95, %96, %cst_54 {dimension_numbers = #tpu.dot_dimension_numbers<[1], [0], [0], [1], [0, 0, 1, 1], [], []>} : vector<4x128xbf16>, vector<128x64xbf16>, vector<4x64xf32> -> vector<4x64xf32>
    %cst_55 = arith.constant 0.000000e+00 : f32
    %98 = vector.broadcast %cst_55 : f32 to vector<1x64xf32>
    %99 = vector.extract_strided_slice %97 {offsets = [0, 0], sizes = [3, 64], strides = [1, 1]} : vector<4x64xf32> to vector<3x64xf32>
    %100 = tpu.concatenate %98, %99 in 0 : vector<1x64xf32>, vector<3x64xf32> -> vector<4x64xf32>
    %101 = vector.extract_strided_slice %97 {offsets = [1, 0], sizes = [3, 64], strides = [1, 1]} : vector<4x64xf32> to vector<3x64xf32>
    %102 = tpu.concatenate %101, %98 in 0 : vector<3x64xf32>, vector<1x64xf32> -> vector<4x64xf32>
    %103 = tpu.concatenate %100, %97, %102 in 1 : vector<4x64xf32>, vector<4x64xf32>, vector<4x64xf32> -> vector<4x192xf32>
    %104 = arith.truncf %103 : vector<4x192xf32> to vector<4x192xbf16>
    %c0_56 = arith.constant 0 : index
    %c0_57 = arith.constant 0 : index
    %105 = vector.load %arg14[%c0_56, %c0_57] : memref<192x128xbf16, #tpu.memory_space<vmem>>, vector<192x128xbf16>
    %cst_58 = arith.constant dense<0.000000e+00> : vector<4x128xf32>
    %106 = tpu.matmul %104, %105, %cst_58 {dimension_numbers = #tpu.dot_dimension_numbers<[1], [0], [0], [1], [0, 0, 1, 1], [], []>} : vector<4x192xbf16>, vector<192x128xbf16>, vector<4x128xf32> -> vector<4x128xf32>
    %c0_59 = arith.constant 0 : index
    %c0_60 = arith.constant 0 : index
    %107 = vector.load %arg15[%c0_59, %c0_60] : memref<1x128xf32, #tpu.memory_space<vmem>>, vector<1x128xf32>
    %108 = vector.broadcast %107 : vector<1x128xf32> to vector<4x128xf32>
    %109 = arith.addf %106, %108 : vector<4x128xf32>
    %cst_61 = arith.constant 0.000000e+00 : f32
    %110 = vector.broadcast %cst_61 : f32 to vector<4x128xf32>
    %111 = arith.maximumf %109, %110 : vector<4x128xf32>
    %cst_62 = arith.constant 0.000000e+00 : f32
    %112 = vector.broadcast %cst_62 : f32 to vector<1x128xf32>
    %113 = vector.extract_strided_slice %111 {offsets = [0, 0], sizes = [3, 128], strides = [1, 1]} : vector<4x128xf32> to vector<3x128xf32>
    %114 = tpu.concatenate %112, %113 in 0 : vector<1x128xf32>, vector<3x128xf32> -> vector<4x128xf32>
    %115 = vector.extract_strided_slice %111 {offsets = [1, 0], sizes = [3, 128], strides = [1, 1]} : vector<4x128xf32> to vector<3x128xf32>
    %116 = tpu.concatenate %115, %112 in 0 : vector<3x128xf32>, vector<1x128xf32> -> vector<4x128xf32>
    %117 = tpu.concatenate %114, %111, %116 in 1 : vector<4x128xf32>, vector<4x128xf32>, vector<4x128xf32> -> vector<4x384xf32>
    %118 = arith.truncf %117 : vector<4x384xf32> to vector<4x384xbf16>
    %c0_63 = arith.constant 0 : index
    %c0_64 = arith.constant 0 : index
    %119 = vector.load %arg16[%c0_63, %c0_64] : memref<384x128xbf16, #tpu.memory_space<vmem>>, vector<384x128xbf16>
    %cst_65 = arith.constant dense<0.000000e+00> : vector<4x128xf32>
    %120 = tpu.matmul %118, %119, %cst_65 {dimension_numbers = #tpu.dot_dimension_numbers<[1], [0], [0], [1], [0, 0, 1, 1], [], []>} : vector<4x384xbf16>, vector<384x128xbf16>, vector<4x128xf32> -> vector<4x128xf32>
    %c0_66 = arith.constant 0 : index
    %c0_67 = arith.constant 0 : index
    %121 = vector.load %arg17[%c0_66, %c0_67] : memref<1x128xf32, #tpu.memory_space<vmem>>, vector<1x128xf32>
    %122 = vector.broadcast %121 : vector<1x128xf32> to vector<4x128xf32>
    %123 = arith.addf %120, %122 : vector<4x128xf32>
    %cst_68 = arith.constant 0.000000e+00 : f32
    %124 = vector.broadcast %cst_68 : f32 to vector<4x128xf32>
    %125 = arith.maximumf %123, %124 : vector<4x128xf32>
    %cst_69 = arith.constant 0.000000e+00 : f32
    %126 = vector.broadcast %cst_69 : f32 to vector<1x128xf32>
    %127 = vector.extract_strided_slice %125 {offsets = [0, 0], sizes = [3, 128], strides = [1, 1]} : vector<4x128xf32> to vector<3x128xf32>
    %128 = tpu.concatenate %126, %127 in 0 : vector<1x128xf32>, vector<3x128xf32> -> vector<4x128xf32>
    %129 = vector.extract_strided_slice %125 {offsets = [1, 0], sizes = [3, 128], strides = [1, 1]} : vector<4x128xf32> to vector<3x128xf32>
    %130 = tpu.concatenate %129, %126 in 0 : vector<3x128xf32>, vector<1x128xf32> -> vector<4x128xf32>
    %131 = tpu.concatenate %128, %125, %130 in 1 : vector<4x128xf32>, vector<4x128xf32>, vector<4x128xf32> -> vector<4x384xf32>
    %132 = arith.truncf %131 : vector<4x384xf32> to vector<4x384xbf16>
    %c0_70 = arith.constant 0 : index
    %c0_71 = arith.constant 0 : index
    %133 = vector.load %arg18[%c0_70, %c0_71] : memref<384x128xbf16, #tpu.memory_space<vmem>>, vector<384x128xbf16>
    %cst_72 = arith.constant dense<0.000000e+00> : vector<4x128xf32>
    %134 = tpu.matmul %132, %133, %cst_72 {dimension_numbers = #tpu.dot_dimension_numbers<[1], [0], [0], [1], [0, 0, 1, 1], [], []>} : vector<4x384xbf16>, vector<384x128xbf16>, vector<4x128xf32> -> vector<4x128xf32>
    %c0_73 = arith.constant 0 : index
    %c0_74 = arith.constant 0 : index
    %135 = vector.load %arg19[%c0_73, %c0_74] : memref<1x128xf32, #tpu.memory_space<vmem>>, vector<1x128xf32>
    %136 = vector.broadcast %135 : vector<1x128xf32> to vector<4x128xf32>
    %137 = arith.addf %134, %136 : vector<4x128xf32>
    %cst_75 = arith.constant 0.000000e+00 : f32
    %138 = vector.broadcast %cst_75 : f32 to vector<4x128xf32>
    %139 = arith.maximumf %137, %138 : vector<4x128xf32>
    %140 = vector.shape_cast %139 : vector<4x128xf32> to vector<1x4x128xf32>
    %c0_76 = arith.constant 0 : index
    %c0_77 = arith.constant 0 : index
    %c0_78 = arith.constant 0 : index
    %141 = vector.load %arg24[%c0_76, %c0_77, %c0_78] : memref<1x4x128xf32, #tpu.memory_space<vmem>>, vector<1x4x128xf32>
    tpu.vector_store %arg24[%c0_76, %c0_77, %c0_78], %140 {strides = array<i32>} : memref<1x4x128xf32, #tpu.memory_space<vmem>>, vector<1x4x128xf32>,
    return
  }
  func.func @transform_0(%arg0: i32) -> (i32, i32, i32) {
    %c0_i32 = arith.constant 0 : i32
    %c0_i32_0 = arith.constant 0 : i32
    %c0_i32_1 = arith.constant 0 : i32
    return %arg0, %c0_i32, %c0_i32_0 : i32, i32, i32
  }
  func.func @transform_1(%arg0: i32) -> (i32, i32) {
    %c0_i32 = arith.constant 0 : i32
    %c0_i32_0 = arith.constant 0 : i32
    %c0_i32_1 = arith.constant 0 : i32
    return %c0_i32, %c0_i32_0 : i32, i32
  }
  func.func @transform_2(%arg0: i32) -> (i32, i32) {
    %c0_i32 = arith.constant 0 : i32
    %c0_i32_0 = arith.constant 0 : i32
    %c0_i32_1 = arith.constant 0 : i32
    return %c0_i32, %c0_i32_0 : i32, i32
  }
  func.func @transform_3(%arg0: i32) -> (i32, i32) {
    %c0_i32 = arith.constant 0 : i32
    %c0_i32_0 = arith.constant 0 : i32
    %c0_i32_1 = arith.constant 0 : i32
    return %c0_i32, %c0_i32_0 : i32, i32
  }
  func.func @transform_4(%arg0: i32) -> (i32, i32) {
    %c0_i32 = arith.constant 0 : i32
    %c0_i32_0 = arith.constant 0 : i32
    %c0_i32_1 = arith.constant 0 : i32
    return %c0_i32, %c0_i32_0 : i32, i32
  }
  func.func @transform_5(%arg0: i32) -> (i32, i32) {
    %c0_i32 = arith.constant 0 : i32
    %c0_i32_0 = arith.constant 0 : i32
    %c0_i32_1 = arith.constant 0 : i32
    return %c0_i32, %c0_i32_0 : i32, i32
  }
  func.func @transform_6(%arg0: i32) -> (i32, i32) {
    %c0_i32 = arith.constant 0 : i32
    %c0_i32_0 = arith.constant 0 : i32
    %c0_i32_1 = arith.constant 0 : i32
    return %c0_i32, %c0_i32_0 : i32, i32
  }
  func.func @transform_7(%arg0: i32) -> (i32, i32) {
    %c0_i32 = arith.constant 0 : i32
    %c0_i32_0 = arith.constant 0 : i32
    %c0_i32_1 = arith.constant 0 : i32
    return %c0_i32, %c0_i32_0 : i32, i32
  }
  func.func @transform_8(%arg0: i32) -> (i32, i32) {
    %c0_i32 = arith.constant 0 : i32
    %c0_i32_0 = arith.constant 0 : i32
    %c0_i32_1 = arith.constant 0 : i32
    return %c0_i32, %c0_i32_0 : i32, i32
  }
  func.func @transform_9(%arg0: i32) -> (i32, i32) {
    %c0_i32 = arith.constant 0 : i32
    %c0_i32_0 = arith.constant 0 : i32
    %c0_i32_1 = arith.constant 0 : i32
    return %c0_i32, %c0_i32_0 : i32, i32
  }
  func.func @transform_10(%arg0: i32) -> (i32, i32) {
    %c0_i32 = arith.constant 0 : i32
    %c0_i32_0 = arith.constant 0 : i32
    %c0_i32_1 = arith.constant 0 : i32
    return %c0_i32, %c0_i32_0 : i32, i32
  }
  func.func @transform_11(%arg0: i32) -> (i32, i32) {
    %c0_i32 = arith.constant 0 : i32
    %c0_i32_0 = arith.constant 0 : i32
    %c0_i32_1 = arith.constant 0 : i32
    return %c0_i32, %c0_i32_0 : i32, i32
  }
  func.func @transform_12(%arg0: i32) -> (i32, i32) {
    %c0_i32 = arith.constant 0 : i32
    %c0_i32_0 = arith.constant 0 : i32
    %c0_i32_1 = arith.constant 0 : i32
    return %c0_i32, %c0_i32_0 : i32, i32
  }
  func.func @transform_13(%arg0: i32) -> (i32, i32) {
    %c0_i32 = arith.constant 0 : i32
    %c0_i32_0 = arith.constant 0 : i32
    %c0_i32_1 = arith.constant 0 : i32
    return %c0_i32, %c0_i32_0 : i32, i32
  }
  func.func @transform_14(%arg0: i32) -> (i32, i32) {
    %c0_i32 = arith.constant 0 : i32
    %c0_i32_0 = arith.constant 0 : i32
    %c0_i32_1 = arith.constant 0 : i32
    return %c0_i32, %c0_i32_0 : i32, i32
  }
  func.func @transform_15(%arg0: i32) -> (i32, i32) {
    %c0_i32 = arith.constant 0 : i32
    %c0_i32_0 = arith.constant 0 : i32
    %c0_i32_1 = arith.constant 0 : i32
    return %c0_i32, %c0_i32_0 : i32, i32
  }
  func.func @transform_16(%arg0: i32) -> (i32, i32) {
    %c0_i32 = arith.constant 0 : i32
    %c0_i32_0 = arith.constant 0 : i32
    %c0_i32_1 = arith.constant 0 : i32
    return %c0_i32, %c0_i32_0 : i32, i32
  }
  func.func @transform_17(%arg0: i32) -> (i32, i32) {
    %c0_i32 = arith.constant 0 : i32
    %c0_i32_0 = arith.constant 0 : i32
    %c0_i32_1 = arith.constant 0 : i32
    return %c0_i32, %c0_i32_0 : i32, i32
  }
  func.func @transform_18(%arg0: i32) -> (i32, i32) {
    %c0_i32 = arith.constant 0 : i32
    %c0_i32_0 = arith.constant 0 : i32
    %c0_i32_1 = arith.constant 0 : i32
    return %c0_i32, %c0_i32_0 : i32, i32
  }
  func.func @transform_19(%arg0: i32) -> (i32, i32) {
    %c0_i32 = arith.constant 0 : i32
    %c0_i32_0 = arith.constant 0 : i32
    %c0_i32_1 = arith.constant 0 : i32
    return %c0_i32, %c0_i32_0 : i32, i32
  }
  func.func @transform_20(%arg0: i32) -> (i32, i32) {
    %c0_i32 = arith.constant 0 : i32
    %c0_i32_0 = arith.constant 0 : i32
    %c0_i32_1 = arith.constant 0 : i32
    return %c0_i32, %c0_i32_0 : i32, i32
  }
  func.func @transform_21(%arg0: i32) -> (i32, i32) {
    %c0_i32 = arith.constant 0 : i32
    %c0_i32_0 = arith.constant 0 : i32
    %c0_i32_1 = arith.constant 0 : i32
    return %c0_i32, %c0_i32_0 : i32, i32
  }
  func.func @transform_22(%arg0: i32) -> (i32, i32) {
    %c0_i32 = arith.constant 0 : i32
    %c0_i32_0 = arith.constant 0 : i32
    %c0_i32_1 = arith.constant 0 : i32
    return %c0_i32, %c0_i32_0 : i32, i32
  }
  func.func @transform_23(%arg0: i32) -> (i32, i32, i32) {
    %c0_i32 = arith.constant 0 : i32
    %c0_i32_0 = arith.constant 0 : i32
    %c0_i32_1 = arith.constant 0 : i32
    return %arg0, %c0_i32, %c0_i32_0 : i32, i32, i32
  }
}

</mosaic_0001>

<llo_original>
// kernel: tpu_custom_call.1
$region0: #{tpu_custom_call.1}
  #allocation0 [shape = 'u32[]', space=smem, size = 0x4, offset = 0x4, fixed_abs, tag = 'smem constant byte address 0x4 - core index']
  #allocation1 [shape = 'u32[144,128]{1,0:T(1,128)}', space=vmem, size = 0x12000, scoped, tag = 'internal scratch']
  %s0 = inlined_call_operand.hbm [shape: f32[2,16,64], index: 0, kind: input, shape index: {}]
  %s1 = inlined_call_operand.hbm [shape: bf16[192,128], index: 1, kind: input, shape index: {}]
  %s2 = inlined_call_operand.hbm [shape: f32[1,128], index: 2, kind: input, shape index: {}]
  %s3 = inlined_call_operand.vmem [shape: bf16[384,128], index: 3, kind: input, shape index: {}]
  %s4 = inlined_call_operand.hbm [shape: f32[1,128], index: 4, kind: input, shape index: {}]
  %s5 = inlined_call_operand.hbm [shape: bf16[384,128], index: 5, kind: input, shape index: {}]
  %s6 = inlined_call_operand.hbm [shape: f32[1,128], index: 6, kind: input, shape index: {}]
  %s7 = inlined_call_operand.hbm [shape: bf16[192,128], index: 7, kind: input, shape index: {}]
  %s8 = inlined_call_operand.hbm [shape: f32[1,128], index: 8, kind: input, shape index: {}]
  %s9 = inlined_call_operand.hbm [shape: bf16[384,128], index: 9, kind: input, shape index: {}]
  %s10 = inlined_call_operand.hbm [shape: f32[1,128], index: 10, kind: input, shape index: {}]
  %s11 = inlined_call_operand.hbm [shape: bf16[384,128], index: 11, kind: input, shape index: {}]
  %s12 = inlined_call_operand.hbm [shape: f32[1,128], index: 12, kind: input, shape index: {}]
  %s13 = inlined_call_operand.hbm [shape: bf16[192,128], index: 13, kind: input, shape index: {}]
  %s14 = inlined_call_operand.hbm [shape: f32[1,128], index: 14, kind: input, shape index: {}]
  %s15 = inlined_call_operand.hbm [shape: bf16[384,128], index: 15, kind: input, shape index: {}]
  %s16 = inlined_call_operand.hbm [shape: f32[1,128], index: 16, kind: input, shape index: {}]
  %s17 = inlined_call_operand.hbm [shape: bf16[384,128], index: 17, kind: input, shape index: {}]
  %s18 = inlined_call_operand.hbm [shape: f32[1,128], index: 18, kind: input, shape index: {}]
  %s19 = inlined_call_operand.vmem [shape: bf16[8,16], index: 19, kind: input, shape index: {}]
  %s20 = inlined_call_operand.vmem [shape: bf16[128,64], index: 20, kind: input, shape index: {}]
  %s21 = inlined_call_operand.hbm [shape: bf16[4,8], index: 21, kind: input, shape index: {}]
  %s22 = inlined_call_operand.vmem [shape: bf16[128,64], index: 22, kind: input, shape index: {}]
  %s23 = inlined_call_operand.hbm [shape: f32[2,4,128], index: 23, kind: output, shape index: {}]
  %s24 = sld [smem:[#allocation0]]
  $region201: #{tpu_custom_call.1} parent=0
    _
  %s26 = ssub.s32 1, %s24
  %s27 = scalar_select 0, %s26, %s24
  $region1: #{tpu_custom_call.1} parent=0
    #allocation2 [shape = 'u8[16384]{0}', space=vmem, size = 0x4000, scoped, tag = 'input window, operand 0']
    #allocation3 [shape = 's32[2]{0}', space=sflag, size = 0x8, scoped, tag = 'scoped memory for tpu_custom_call.1']
    #allocation4 [shape = 's32[2]{0}', space=sflag, size = 0x8, scoped, tag = 'scoped memory for tpu_custom_call.1']
    #allocation5 [shape = 'u8[49152]{0}', space=vmem, size = 0xc000, scoped, tag = 'input window, operand 1, single buffered']
    #allocation6 [shape = 's32[1]{0}', space=sflag, size = 0x4, scoped, tag = 'scoped memory for tpu_custom_call.1']
    #allocation7 [shape = 'u8[512]{0}', space=vmem, size = 0x400, scoped, tag = 'input window, operand 2, single buffered']
    #allocation8 [shape = 'u8[512]{0}', space=vmem, size = 0x400, scoped, tag = 'input window, operand 4, single buffered']
    #allocation9 [shape = 's32[1]{0}', space=sflag, size = 0x4, scoped, tag = 'scoped memory for tpu_custom_call.1']
    #allocation10 [shape = 'u8[98304]{0}', space=vmem, size = 0x18000, scoped, tag = 'input window, operand 5, single buffered']
    #allocation11 [shape = 'u8[512]{0}', space=vmem, size = 0x400, scoped, tag = 'input window, operand 6, single buffered']
    #allocation12 [shape = 's32[1]{0}', space=sflag, size = 0x4, scoped, tag = 'scoped memory for tpu_custom_call.1']
    #allocation13 [shape = 'u8[49152]{0}', space=vmem, size = 0xc000, scoped, tag = 'input window, operand 7, single buffered']
    #allocation14 [shape = 'u8[512]{0}', space=vmem, size = 0x400, scoped, tag = 'input window, operand 8, single buffered']
    #allocation15 [shape = 's32[1]{0}', space=sflag, size = 0x4, scoped, tag = 'scoped memory for tpu_custom_call.1']
    #allocation16 [shape = 'u8[98304]{0}', space=vmem, size = 0x18000, scoped, tag = 'input window, operand 9, single buffered']
    #allocation17 [shape = 'u8[512]{0}', space=vmem, size = 0x400, scoped, tag = 'input window, operand 10, single buffered']
    #allocation18 [shape = 's32[1]{0}', space=sflag, size = 0x4, scoped, tag = 'scoped memory for tpu_custom_call.1']
    #allocation19 [shape = 'u8[98304]{0}', space=vmem, size = 0x18000, scoped, tag = 'input window, operand 11, single buffered']
    #allocation20 [shape = 'u8[512]{0}', space=vmem, size = 0x400, scoped, tag = 'input window, operand 12, single buffered']
    #allocation21 [shape = 's32[1]{0}', space=sflag, size = 0x4, scoped, tag = 'scoped memory for tpu_custom_call.1']
    #allocation22 [shape = 'u8[49152]{0}', space=vmem, size = 0xc000, scoped, tag = 'input window, operand 13, single buffered']
    #allocation23 [shape = 'u8[512]{0}', space=vmem, size = 0x400, scoped, tag = 'input window, operand 14, single buffered']
    #allocation24 [shape = 's32[1]{0}', space=sflag, size = 0x4, scoped, tag = 'scoped memory for tpu_custom_call.1']
    #allocation25 [shape = 'u8[98304]{0}', space=vmem, size = 0x18000, scoped, tag = 'input window, operand 15, single buffered']
    #allocation26 [shape = 'u8[512]{0}', space=vmem, size = 0x400, scoped, tag = 'input window, operand 16, single buffered']
    #allocation27 [shape = 's32[1]{0}', space=sflag, size = 0x4, scoped, tag = 'scoped memory for tpu_custom_call.1']
    #allocation28 [shape = 'u8[98304]{0}', space=vmem, size = 0x18000, scoped, tag = 'input window, operand 17, single buffered']
    #allocation29 [shape = 'u8[512]{0}', space=vmem, size = 0x400, scoped, tag = 'input window, operand 18, single buffered']
    #allocation30 [shape = 's32[1]{0}', space=sflag, size = 0x4, scoped, tag = 'scoped memory for tpu_custom_call.1']
    #allocation31 [shape = 'u8[1024]{0}', space=vmem, size = 0x400, scoped, tag = 'input window, operand 21, single buffered']
    #allocation32 [shape = 'u8[4096]{0}', space=vmem, size = 0x1000, scoped, tag = 'output window, operand 0']
    %28 = vsyncpa [#allocation3], 0
    %s29 = scalar_lea.sflag [#allocation3], 1
    %30 = vsyncpa %s29, 0
    %31 = vsyncpa [#allocation6], 0
    %32 = vsyncpa [#allocation9], 0
    %33 = vsyncpa [#allocation12], 0
    %34 = vsyncpa [#allocation15], 0
    %35 = vsyncpa [#allocation18], 0
    %36 = vsyncpa [#allocation21], 0
    %37 = vsyncpa [#allocation24], 0
    %38 = vsyncpa [#allocation27], 0
    %39 = vsyncpa [#allocation30], 0
    %40 = vsyncpa [#allocation4], 0
    %s41 = scalar_lea.sflag [#allocation4], 1
    %42 = vsyncpa %s41, 0
    loop: start=0, step=1, limit=4
    $region2: #{tpu_custom_call.1} parent=1 // loop_pre_header
      _
    $region3: #{tpu_custom_call.1} parent=1 // loop_header
      %s44 = sphi 0, %s48
      %p45 = scmp.ge.s32.totalorder %s44, 4
      %s54 = sphi 0, %s56
      %s57 = sphi 0, %s54
      %s58 = sphi 0, %s57
      %s74 = sphi 0, %s58
      %s78 = sphi 0, %s78
      %s80 = sphi 0, %s78
      %s81 = sphi 0, %s80
      %s95 = sphi 0, %s81
      %s99 = sphi 0, %s99
      %s101 = sphi 0, %s99
      %s102 = sphi 0, %s101
      %s116 = sphi 0, %s102
      %s120 = sphi 0, %s120
      %s122 = sphi 0, %s120
      %s123 = sphi 0, %s122
      %s137 = sphi 0, %s123
      %s141 = sphi 0, %s141
      %s143 = sphi 0, %s141
      %s144 = sphi 0, %s143
      %s158 = sphi 0, %s144
      %s162 = sphi 0, %s162
      %s164 = sphi 0, %s162
      %s165 = sphi 0, %s164
      %s179 = sphi 0, %s165
      %s183 = sphi 0, %s183
      %s185 = sphi 0, %s183
      %s186 = sphi 0, %s185
      %s200 = sphi 0, %s186
      %s204 = sphi 0, %s204
      %s206 = sphi 0, %s204
      %s207 = sphi 0, %s206
      %s221 = sphi 0, %s207
      %s225 = sphi 0, %s225
      %s227 = sphi 0, %s225
      %s228 = sphi 0, %s227
      %s242 = sphi 0, %s228
      %s246 = sphi 0, %s246
      %s248 = sphi 0, %s246
      %s249 = sphi 0, %s248
      %s263 = sphi 0, %s249
      %s267 = sphi 0, %s267
      %s269 = sphi 0, %s267
      %s270 = sphi 0, %s269
      %s284 = sphi 0, %s270
      %s288 = sphi 0, %s288
      %s290 = sphi 0, %s288
      %s291 = sphi 0, %s290
      %s305 = sphi 0, %s291
      %s309 = sphi 0, %s309
      %s311 = sphi 0, %s309
      %s312 = sphi 0, %s311
      %s326 = sphi 0, %s312
      %s330 = sphi 0, %s330
      %s332 = sphi 0, %s330
      %s333 = sphi 0, %s332
      %s347 = sphi 0, %s333
      %s351 = sphi 0, %s351
      %s353 = sphi 0, %s351
      %s354 = sphi 0, %s353
      %s368 = sphi 0, %s354
      %s372 = sphi 0, %s372
      %s374 = sphi 0, %s372
      %s375 = sphi 0, %s374
      %s389 = sphi 0, %s375
      %s393 = sphi 0, %s393
      %s395 = sphi 0, %s393
      %s396 = sphi 0, %s395
      %s410 = sphi 0, %s396
      %s414 = sphi 0, %s414
      %s416 = sphi 0, %s414
      %s417 = sphi 0, %s416
      %s431 = sphi 0, %s417
      %s435 = sphi 0, %s435
      %s437 = sphi 0, %s435
      %s438 = sphi 0, %s437
      %s452 = sphi 0, %s438
      %s456 = sphi 0, %s456
      %s458 = sphi 0, %s456
      %s459 = sphi 0, %s458
      %s473 = sphi 0, %s459
      %s477 = sphi 0, %s477
      %s479 = sphi 0, %s477
      %s480 = sphi 0, %s479
      %s494 = sphi 0, %s480
      %s498 = sphi 0, %s498
      %s500 = sphi 0, %s498
      %s501 = sphi 0, %s500
      %s515 = sphi 0, %s501
      %s519 = sphi 0, %s519
      %s521 = sphi 0, %s519
      %s522 = sphi 0, %s521
      %s536 = sphi 0, %s522
      %s542 = sphi 0, %s544
      %s545 = sphi 0, %s542
      %s546 = sphi 0, %s545
      %s562 = sphi 0, %s546
    $region4: #{tpu_custom_call.1} parent=1 // loop_header_branch
      %47 = sbr.rel (%p45) target = $region8
    $region5: #{tpu_custom_call.1} parent=1 // loop_body
      %s49 = ssub.s32 %s44, 1
      %s50 = ssub.s32 %s44, 2
      %s51 = sadd.s32 %s44, 1
      %s52 = ssub.s32 %s44, %s51
      %p53 = scmp.eq.s32.totalorder %s52, 0
      %s55 = sadd.s32 %s54, 1
      %s56 = scalar_select %p53, %s54, %s55
      %p59 = pneg %p53
      %p60 = scmp.eq.s32.totalorder %s44, 1
      %p61 = por %p59, %p60
      %p62 = scmp.ne.s32.totalorder %s54, %s57
      %p63 = scmp.eq.s32.totalorder %s44, 0
      %p64 = por %p62, %p63
      %p65 = scmp.ne.s32.totalorder %s54, %s57
      %p66 = scmp.eq.s32.totalorder %s49, 1
      %p67 = por %p65, %p66
      %p68 = scmp.ne.s32.totalorder %s57, %s58
      %p69 = scmp.eq.s32.totalorder %s49, 0
      %p70 = por %p68, %p69
      %p71 = scmp.ne.s32.totalorder %s57, %s58
      %p72 = scmp.eq.s32.totalorder %s50, 1
      %p73 = por %p71, %p72
      %p75 = scmp.ne.s32.totalorder %s58, %s74
      %p76 = scmp.eq.s32.totalorder %s50, 0
      %p77 = por %p75, %p76
      %s79 = sadd.s32 %s78, 1
      %p82 = scmp.eq.s32.totalorder %s44, 1
      %p83 = scmp.ne.s32.totalorder %s78, %s80
      %p84 = scmp.eq.s32.totalorder %s44, 0
      %p85 = por %p83, %p84
      %p86 = scmp.ne.s32.totalorder %s78, %s80
      %p87 = scmp.eq.s32.totalorder %s49, 1
      %p88 = por %p86, %p87
      %p89 = scmp.ne.s32.totalorder %s80, %s81
      %p90 = scmp.eq.s32.totalorder %s49, 0
      %p91 = por %p89, %p90
      %p92 = scmp.ne.s32.totalorder %s80, %s81
      %p93 = scmp.eq.s32.totalorder %s50, 1
      %p94 = por %p92, %p93
      %p96 = scmp.ne.s32.totalorder %s81, %s95
      %p97 = scmp.eq.s32.totalorder %s50, 0
      %p98 = por %p96, %p97
      %s100 = sadd.s32 %s99, 1
      %p103 = scmp.eq.s32.totalorder %s44, 1
      %p104 = scmp.ne.s32.totalorder %s99, %s101
      %p105 = scmp.eq.s32.totalorder %s44, 0
      %p106 = por %p104, %p105
      %p107 = scmp.ne.s32.totalorder %s99, %s101
      %p108 = scmp.eq.s32.totalorder %s49, 1
      %p109 = por %p107, %p108
      %p110 = scmp.ne.s32.totalorder %s101, %s102
      %p111 = scmp.eq.s32.totalorder %s49, 0
      %p112 = por %p110, %p111
      %p113 = scmp.ne.s32.totalorder %s101, %s102
      %p114 = scmp.eq.s32.totalorder %s50, 1
      %p115 = por %p113, %p114
      %p117 = scmp.ne.s32.totalorder %s102, %s116
      %p118 = scmp.eq.s32.totalorder %s50, 0
      %p119 = por %p117, %p118
      %s121 = sadd.s32 %s120, 1
      %p124 = scmp.eq.s32.totalorder %s44, 1
      %p125 = scmp.ne.s32.totalorder %s120, %s122
      %p126 = scmp.eq.s32.totalorder %s44, 0
      %p127 = por %p125, %p126
      %p128 = scmp.ne.s32.totalorder %s120, %s122
      %p129 = scmp.eq.s32.totalorder %s49, 1
      %p130 = por %p128, %p129
      %p131 = scmp.ne.s32.totalorder %s122, %s123
      %p132 = scmp.eq.s32.totalorder %s49, 0
      %p133 = por %p131, %p132
      %p134 = scmp.ne.s32.totalorder %s122, %s123
      %p135 = scmp.eq.s32.totalorder %s50, 1
      %p136 = por %p134, %p135
      %p138 = scmp.ne.s32.totalorder %s123, %s137
      %p139 = scmp.eq.s32.totalorder %s50, 0
      %p140 = por %p138, %p139
      %s142 = sadd.s32 %s141, 1
      %p145 = scmp.eq.s32.totalorder %s44, 1
      %p146 = scmp.ne.s32.totalorder %s141, %s143
      %p147 = scmp.eq.s32.totalorder %s44, 0
      %p148 = por %p146, %p147
      %p149 = scmp.ne.s32.totalorder %s141, %s143
      %p150 = scmp.eq.s32.totalorder %s49, 1
      %p151 = por %p149, %p150
      %p152 = scmp.ne.s32.totalorder %s143, %s144
      %p153 = scmp.eq.s32.totalorder %s49, 0
      %p154 = por %p152, %p153
      %p155 = scmp.ne.s32.totalorder %s143, %s144
      %p156 = scmp.eq.s32.totalorder %s50, 1
      %p157 = por %p155, %p156
      %p159 = scmp.ne.s32.totalorder %s144, %s158
      %p160 = scmp.eq.s32.totalorder %s50, 0
      %p161 = por %p159, %p160
      %s163 = sadd.s32 %s162, 1
      %p166 = scmp.eq.s32.totalorder %s44, 1
      %p167 = scmp.ne.s32.totalorder %s162, %s164
      %p168 = scmp.eq.s32.totalorder %s44, 0
      %p169 = por %p167, %p168
      %p170 = scmp.ne.s32.totalorder %s162, %s164
      %p171 = scmp.eq.s32.totalorder %s49, 1
      %p172 = por %p170, %p171
      %p173 = scmp.ne.s32.totalorder %s164, %s165
      %p174 = scmp.eq.s32.totalorder %s49, 0
      %p175 = por %p173, %p174
      %p176 = scmp.ne.s32.totalorder %s164, %s165
      %p177 = scmp.eq.s32.totalorder %s50, 1
      %p178 = por %p176, %p177
      %p180 = scmp.ne.s32.totalorder %s165, %s179
      %p181 = scmp.eq.s32.totalorder %s50, 0
      %p182 = por %p180, %p181
      %s184 = sadd.s32 %s183, 1
      %p187 = scmp.eq.s32.totalorder %s44, 1
      %p188 = scmp.ne.s32.totalorder %s183, %s185
      %p189 = scmp.eq.s32.totalorder %s44, 0
      %p190 = por %p188, %p189
      %p191 = scmp.ne.s32.totalorder %s183, %s185
      %p192 = scmp.eq.s32.totalorder %s49, 1
      %p193 = por %p191, %p192
      %p194 = scmp.ne.s32.totalorder %s185, %s186
      %p195 = scmp.eq.s32.totalorder %s49, 0
      %p196 = por %p194, %p195
      %p197 = scmp.ne.s32.totalorder %s185, %s186
      %p198 = scmp.eq.s32.totalorder %s50, 1
      %p199 = por %p197, %p198
      %p201 = scmp.ne.s32.totalorder %s186, %s200
      %p202 = scmp.eq.s32.totalorder %s50, 0
      %p203 = por %p201, %p202
      %s205 = sadd.s32 %s204, 1
      %p208 = scmp.eq.s32.totalorder %s44, 1
      %p209 = scmp.ne.s32.totalorder %s204, %s206
      %p210 = scmp.eq.s32.totalorder %s44, 0
      %p211 = por %p209, %p210
      %p212 = scmp.ne.s32.totalorder %s204, %s206
      %p213 = scmp.eq.s32.totalorder %s49, 1
      %p214 = por %p212, %p213
      %p215 = scmp.ne.s32.totalorder %s206, %s207
      %p216 = scmp.eq.s32.totalorder %s49, 0
      %p217 = por %p215, %p216
      %p218 = scmp.ne.s32.totalorder %s206, %s207
      %p219 = scmp.eq.s32.totalorder %s50, 1
      %p220 = por %p218, %p219
      %p222 = scmp.ne.s32.totalorder %s207, %s221
      %p223 = scmp.eq.s32.totalorder %s50, 0
      %p224 = por %p222, %p223
      %s226 = sadd.s32 %s225, 1
      %p229 = scmp.eq.s32.totalorder %s44, 1
      %p230 = scmp.ne.s32.totalorder %s225, %s227
      %p231 = scmp.eq.s32.totalorder %s44, 0
      %p232 = por %p230, %p231
      %p233 = scmp.ne.s32.totalorder %s225, %s227
      %p234 = scmp.eq.s32.totalorder %s49, 1
      %p235 = por %p233, %p234
      %p236 = scmp.ne.s32.totalorder %s227, %s228
      %p237 = scmp.eq.s32.totalorder %s49, 0
      %p238 = por %p236, %p237
      %p239 = scmp.ne.s32.totalorder %s227, %s228
      %p240 = scmp.eq.s32.totalorder %s50, 1
      %p241 = por %p239, %p240
      %p243 = scmp.ne.s32.totalorder %s228, %s242
      %p244 = scmp.eq.s32.totalorder %s50, 0
      %p245 = por %p243, %p244
      %s247 = sadd.s32 %s246, 1
      %p250 = scmp.eq.s32.totalorder %s44, 1
      %p251 = scmp.ne.s32.totalorder %s246, %s248
      %p252 = scmp.eq.s32.totalorder %s44, 0
      %p253 = por %p251, %p252
      %p254 = scmp.ne.s32.totalorder %s246, %s248
      %p255 = scmp.eq.s32.totalorder %s49, 1
      %p256 = por %p254, %p255
      %p257 = scmp.ne.s32.totalorder %s248, %s249
      %p258 = scmp.eq.s32.totalorder %s49, 0
      %p259 = por %p257, %p258
      %p260 = scmp.ne.s32.totalorder %s248, %s249
      %p261 = scmp.eq.s32.totalorder %s50, 1
      %p262 = por %p260, %p261
      %p264 = scmp.ne.s32.totalorder %s249, %s263
      %p265 = scmp.eq.s32.totalorder %s50, 0
      %p266 = por %p264, %p265
      %s268 = sadd.s32 %s267, 1
      %p271 = scmp.eq.s32.totalorder %s44, 1
      %p272 = scmp.ne.s32.totalorder %s267, %s269
      %p273 = scmp.eq.s32.totalorder %s44, 0
      %p274 = por %p272, %p273
      %p275 = scmp.ne.s32.totalorder %s267, %s269
      %p276 = scmp.eq.s32.totalorder %s49, 1
      %p277 = por %p275, %p276
      %p278 = scmp.ne.s32.totalorder %s269, %s270
      %p279 = scmp.eq.s32.totalorder %s49, 0
      %p280 = por %p278, %p279
      %p281 = scmp.ne.s32.totalorder %s269, %s270
      %p282 = scmp.eq.s32.totalorder %s50, 1
      %p283 = por %p281, %p282
      %p285 = scmp.ne.s32.totalorder %s270, %s284
      %p286 = scmp.eq.s32.totalorder %s50, 0
      %p287 = por %p285, %p286
      %s289 = sadd.s32 %s288, 1
      %p292 = scmp.eq.s32.totalorder %s44, 1
      %p293 = scmp.ne.s32.totalorder %s288, %s290
      %p294 = scmp.eq.s32.totalorder %s44, 0
      %p295 = por %p293, %p294
      %p296 = scmp.ne.s32.totalorder %s288, %s290
      %p297 = scmp.eq.s32.totalorder %s49, 1
      %p298 = por %p296, %p297
      %p299 = scmp.ne.s32.totalorder %s290, %s291
      %p300 = scmp.eq.s32.totalorder %s49, 0
      %p301 = por %p299, %p300
      %p302 = scmp.ne.s32.totalorder %s290, %s291
      %p303 = scmp.eq.s32.totalorder %s50, 1
      %p304 = por %p302, %p303
      %p306 = scmp.ne.s32.totalorder %s291, %s305
      %p307 = scmp.eq.s32.totalorder %s50, 0
      %p308 = por %p306, %p307
      %s310 = sadd.s32 %s309, 1
      %p313 = scmp.eq.s32.totalorder %s44, 1
      %p314 = scmp.ne.s32.totalorder %s309, %s311
      %p315 = scmp.eq.s32.totalorder %s44, 0
      %p316 = por %p314, %p315
      %p317 = scmp.ne.s32.totalorder %s309, %s311
      %p318 = scmp.eq.s32.totalorder %s49, 1
      %p319 = por %p317, %p318
      %p320 = scmp.ne.s32.totalorder %s311, %s312
      %p321 = scmp.eq.s32.totalorder %s49, 0
      %p322 = por %p320, %p321
      %p323 = scmp.ne.s32.totalorder %s311, %s312
      %p324 = scmp.eq.s32.totalorder %s50, 1
      %p325 = por %p323, %p324
      %p327 = scmp.ne.s32.totalorder %s312, %s326
      %p328 = scmp.eq.s32.totalorder %s50, 0
      %p329 = por %p327, %p328
      %s331 = sadd.s32 %s330, 1
      %p334 = scmp.eq.s32.totalorder %s44, 1
      %p335 = scmp.ne.s32.totalorder %s330, %s332
      %p336 = scmp.eq.s32.totalorder %s44, 0
      %p337 = por %p335, %p336
      %p338 = scmp.ne.s32.totalorder %s330, %s332
      %p339 = scmp.eq.s32.totalorder %s49, 1
      %p340 = por %p338, %p339
      %p341 = scmp.ne.s32.totalorder %s332, %s333
      %p342 = scmp.eq.s32.totalorder %s49, 0
      %p343 = por %p341, %p342
      %p344 = scmp.ne.s32.totalorder %s332, %s333
      %p345 = scmp.eq.s32.totalorder %s50, 1
      %p346 = por %p344, %p345
      %p348 = scmp.ne.s32.totalorder %s333, %s347
      %p349 = scmp.eq.s32.totalorder %s50, 0
      %p350 = por %p348, %p349
      %s352 = sadd.s32 %s351, 1
      %p355 = scmp.eq.s32.totalorder %s44, 1
      %p356 = scmp.ne.s32.totalorder %s351, %s353
      %p357 = scmp.eq.s32.totalorder %s44, 0
      %p358 = por %p356, %p357
      %p359 = scmp.ne.s32.totalorder %s351, %s353
      %p360 = scmp.eq.s32.totalorder %s49, 1
      %p361 = por %p359, %p360
      %p362 = scmp.ne.s32.totalorder %s353, %s354
      %p363 = scmp.eq.s32.totalorder %s49, 0
      %p364 = por %p362, %p363
      %p365 = scmp.ne.s32.totalorder %s353, %s354
      %p366 = scmp.eq.s32.totalorder %s50, 1
      %p367 = por %p365, %p366
      %p369 = scmp.ne.s32.totalorder %s354, %s368
      %p370 = scmp.eq.s32.totalorder %s50, 0
      %p371 = por %p369, %p370
      %s373 = sadd.s32 %s372, 1
      %p376 = scmp.eq.s32.totalorder %s44, 1
      %p377 = scmp.ne.s32.totalorder %s372, %s374
      %p378 = scmp.eq.s32.totalorder %s44, 0
      %p379 = por %p377, %p378
      %p380 = scmp.ne.s32.totalorder %s372, %s374
      %p381 = scmp.eq.s32.totalorder %s49, 1
      %p382 = por %p380, %p381
      %p383 = scmp.ne.s32.totalorder %s374, %s375
      %p384 = scmp.eq.s32.totalorder %s49, 0
      %p385 = por %p383, %p384
      %p386 = scmp.ne.s32.totalorder %s374, %s375
      %p387 = scmp.eq.s32.totalorder %s50, 1
      %p388 = por %p386, %p387
      %p390 = scmp.ne.s32.totalorder %s375, %s389
      %p391 = scmp.eq.s32.totalorder %s50, 0
      %p392 = por %p390, %p391
      %s394 = sadd.s32 %s393, 1
      %p397 = scmp.eq.s32.totalorder %s44, 1
      %p398 = scmp.ne.s32.totalorder %s393, %s395
      %p399 = scmp.eq.s32.totalorder %s44, 0
      %p400 = por %p398, %p399
      %p401 = scmp.ne.s32.totalorder %s393, %s395
      %p402 = scmp.eq.s32.totalorder %s49, 1
      %p403 = por %p401, %p402
      %p404 = scmp.ne.s32.totalorder %s395, %s396
      %p405 = scmp.eq.s32.totalorder %s49, 0
      %p406 = por %p404, %p405
      %p407 = scmp.ne.s32.totalorder %s395, %s396
      %p408 = scmp.eq.s32.totalorder %s50, 1
      %p409 = por %p407, %p408
      %p411 = scmp.ne.s32.totalorder %s396, %s410
      %p412 = scmp.eq.s32.totalorder %s50, 0
      %p413 = por %p411, %p412
      %s415 = sadd.s32 %s414, 1
      %p418 = scmp.eq.s32.totalorder %s44, 1
      %p419 = scmp.ne.s32.totalorder %s414, %s416
      %p420 = scmp.eq.s32.totalorder %s44, 0
      %p421 = por %p419, %p420
      %p422 = scmp.ne.s32.totalorder %s414, %s416
      %p423 = scmp.eq.s32.totalorder %s49, 1
      %p424 = por %p422, %p423
      %p425 = scmp.ne.s32.totalorder %s416, %s417
      %p426 = scmp.eq.s32.totalorder %s49, 0
      %p427 = por %p425, %p426
      %p428 = scmp.ne.s32.totalorder %s416, %s417
      %p429 = scmp.eq.s32.totalorder %s50, 1
      %p430 = por %p428, %p429
      %p432 = scmp.ne.s32.totalorder %s417, %s431
      %p433 = scmp.eq.s32.totalorder %s50, 0
      %p434 = por %p432, %p433
      %s436 = sadd.s32 %s435, 1
      %p439 = scmp.eq.s32.totalorder %s44, 1
      %p440 = scmp.ne.s32.totalorder %s435, %s437
      %p441 = scmp.eq.s32.totalorder %s44, 0
      %p442 = por %p440, %p441
      %p443 = scmp.ne.s32.totalorder %s435, %s437
      %p444 = scmp.eq.s32.totalorder %s49, 1
      %p445 = por %p443, %p444
      %p446 = scmp.ne.s32.totalorder %s437, %s438
      %p447 = scmp.eq.s32.totalorder %s49, 0
      %p448 = por %p446, %p447
      %p449 = scmp.ne.s32.totalorder %s437, %s438
      %p450 = scmp.eq.s32.totalorder %s50, 1
      %p451 = por %p449, %p450
      %p453 = scmp.ne.s32.totalorder %s438, %s452
      %p454 = scmp.eq.s32.totalorder %s50, 0
      %p455 = por %p453, %p454
      %s457 = sadd.s32 %s456, 1
      %p460 = scmp.eq.s32.totalorder %s44, 1
      %p461 = scmp.ne.s32.totalorder %s456, %s458
      %p462 = scmp.eq.s32.totalorder %s44, 0
      %p463 = por %p461, %p462
      %p464 = scmp.ne.s32.totalorder %s456, %s458
      %p465 = scmp.eq.s32.totalorder %s49, 1
      %p466 = por %p464, %p465
      %p467 = scmp.ne.s32.totalorder %s458, %s459
      %p468 = scmp.eq.s32.totalorder %s49, 0
      %p469 = por %p467, %p468
      %p470 = scmp.ne.s32.totalorder %s458, %s459
      %p471 = scmp.eq.s32.totalorder %s50, 1
      %p472 = por %p470, %p471
      %p474 = scmp.ne.s32.totalorder %s459, %s473
      %p475 = scmp.eq.s32.totalorder %s50, 0
      %p476 = por %p474, %p475
      %s478 = sadd.s32 %s477, 1
      %p481 = scmp.eq.s32.totalorder %s44, 1
      %p482 = scmp.ne.s32.totalorder %s477, %s479
      %p483 = scmp.eq.s32.totalorder %s44, 0
      %p484 = por %p482, %p483
      %p485 = scmp.ne.s32.totalorder %s477, %s479
      %p486 = scmp.eq.s32.totalorder %s49, 1
      %p487 = por %p485, %p486
      %p488 = scmp.ne.s32.totalorder %s479, %s480
      %p489 = scmp.eq.s32.totalorder %s49, 0
      %p490 = por %p488, %p489
      %p491 = scmp.ne.s32.totalorder %s479, %s480
      %p492 = scmp.eq.s32.totalorder %s50, 1
      %p493 = por %p491, %p492
      %p495 = scmp.ne.s32.totalorder %s480, %s494
      %p496 = scmp.eq.s32.totalorder %s50, 0
      %p497 = por %p495, %p496
      %s499 = sadd.s32 %s498, 1
      %p502 = scmp.eq.s32.totalorder %s44, 1
      %p503 = scmp.ne.s32.totalorder %s498, %s500
      %p504 = scmp.eq.s32.totalorder %s44, 0
      %p505 = por %p503, %p504
      %p506 = scmp.ne.s32.totalorder %s498, %s500
      %p507 = scmp.eq.s32.totalorder %s49, 1
      %p508 = por %p506, %p507
      %p509 = scmp.ne.s32.totalorder %s500, %s501
      %p510 = scmp.eq.s32.totalorder %s49, 0
      %p511 = por %p509, %p510
      %p512 = scmp.ne.s32.totalorder %s500, %s501
      %p513 = scmp.eq.s32.totalorder %s50, 1
      %p514 = por %p512, %p513
      %p516 = scmp.ne.s32.totalorder %s501, %s515
      %p517 = scmp.eq.s32.totalorder %s50, 0
      %p518 = por %p516, %p517
      %s520 = sadd.s32 %s519, 1
      %p523 = scmp.eq.s32.totalorder %s44, 1
      %p524 = scmp.ne.s32.totalorder %s519, %s521
      %p525 = scmp.eq.s32.totalorder %s44, 0
      %p526 = por %p524, %p525
      %p527 = scmp.ne.s32.totalorder %s519, %s521
      %p528 = scmp.eq.s32.totalorder %s49, 1
      %p529 = por %p527, %p528
      %p530 = scmp.ne.s32.totalorder %s521, %s522
      %p531 = scmp.eq.s32.totalorder %s49, 0
      %p532 = por %p530, %p531
      %p533 = scmp.ne.s32.totalorder %s521, %s522
      %p534 = scmp.eq.s32.totalorder %s50, 1
      %p535 = por %p533, %p534
      %p537 = scmp.ne.s32.totalorder %s522, %s536
      %p538 = scmp.eq.s32.totalorder %s50, 0
      %p539 = por %p537, %p538
      %s540 = ssub.s32 %s44, %s51
      %p541 = scmp.eq.s32.totalorder %s540, 0
      %s543 = sadd.s32 %s542, 1
      %s544 = scalar_select %p541, %s542, %s543
      %p547 = pneg %p541
      %p548 = scmp.eq.s32.totalorder %s44, 1
      %p549 = por %p547, %p548
      %p550 = scmp.ne.s32.totalorder %s542, %s545
      %p551 = scmp.eq.s32.totalorder %s44, 0
      %p552 = por %p550, %p551
      %p553 = scmp.ne.s32.totalorder %s542, %s545
      %p554 = scmp.eq.s32.totalorder %s49, 1
      %p555 = por %p553, %p554
      %p556 = scmp.ne.s32.totalorder %s545, %s546
      %p557 = scmp.eq.s32.totalorder %s49, 0
      %p558 = por %p556, %p557
      %p559 = scmp.ne.s32.totalorder %s545, %s546
      %p560 = scmp.eq.s32.totalorder %s50, 1
      %p561 = por %p559, %p560
      %p563 = scmp.ne.s32.totalorder %s546, %s562
      %p564 = scmp.eq.s32.totalorder %s50, 0
      %p565 = por %p563, %p564
      %p566 = scmp.le.s32.totalorder 1, %s44
      %p567 = scmp.lt.s32.totalorder %s44, 3
      %p568 = pnand %p566, %p567
      %p569 = pneg %p568
      // Predicated region
      $region9: #{tpu_custom_call.1} parent=5 // pred_check
        _
      $region10: #{tpu_custom_call.1} parent=5 // pred_check_branch
        %571 = sbr.rel (%p568) target = $region12
      $region11: #{tpu_custom_call.1} parent=5 // pred_region
        %s572 = ssub.s32 %s44, 1
        // Predicated region
        $region13: #{tpu_custom_call.1} parent=11 // pred_check
          %p573 = pneg %p91
        $region14: #{tpu_custom_call.1} parent=11 // pred_check_branch
          %575 = sbr.rel (%p573) target = $region16
        $region15: #{tpu_custom_call.1} parent=11 // pred_region
          %s577 = ssub.s32 1536, 1536
          %578 = vsyncadd [#allocation6], %s577
          %s579 = sshll.u32 [#allocation5], 4
          %s580 = int_to_ptr.vmem [resolvable:$true] %s579
          %585 = dma.hbm_to_vmem [thread:$0]  %s1, 1536, %s580, [#allocation6], 64, 64, 4
        $region16: #{tpu_custom_call.1} parent=11 // pred_fallthru
          _
        // Predicated region
        $region17: #{tpu_custom_call.1} parent=11 // pred_check
          %p586 = pneg %p112
        $region18: #{tpu_custom_call.1} parent=11 // pred_check_branch
          %588 = sbr.rel (%p586) target = $region20
        $region19: #{tpu_custom_call.1} parent=11 // pred_region
          %s590 = ssub.s32 16, 16
          %591 = vsyncadd [#allocation6], %s590
          %s593 = sshll.u32 [#allocation7], 4
          %s594 = int_to_ptr.vmem [resolvable:$true] %s593
          %596 = dma.hbm_to_vmem [thread:$0]  %s2, 16, %s594, [#allocation6]
        $region20: #{tpu_custom_call.1} parent=11 // pred_fallthru
          _
        // Predicated region
        $region21: #{tpu_custom_call.1} parent=11 // pred_check
          %p597 = pneg %p133
        $region22: #{tpu_custom_call.1} parent=11 // pred_check_branch
          %599 = sbr.rel (%p597) target = $region24
        $region23: #{tpu_custom_call.1} parent=11 // pred_region
          _
        $region24: #{tpu_custom_call.1} parent=11 // pred_fallthru
          _
        // Predicated region
        $region25: #{tpu_custom_call.1} parent=11 // pred_check
          %p600 = pneg %p154
        $region26: #{tpu_custom_call.1} parent=11 // pred_check_branch
          %602 = sbr.rel (%p600) target = $region28
        $region27: #{tpu_custom_call.1} parent=11 // pred_region
          %s604 = ssub.s32 16, 16
          %605 = vsyncadd [#allocation9], %s604
          %s607 = sshll.u32 [#allocation8], 4
          %s608 = int_to_ptr.vmem [resolvable:$true] %s607
          %610 = dma.hbm_to_vmem [thread:$0]  %s4, 16, %s608, [#allocation9]
        $region28: #{tpu_custom_call.1} parent=11 // pred_fallthru
          _
        // Predicated region
        $region29: #{tpu_custom_call.1} parent=11 // pred_check
          %p611 = pneg %p175
        $region30: #{tpu_custom_call.1} parent=11 // pred_check_branch
          %613 = sbr.rel (%p611) target = $region32
        $region31: #{tpu_custom_call.1} parent=11 // pred_region
          %s615 = ssub.s32 3072, 3072
          %616 = vsyncadd [#allocation9], %s615
          %s617 = sshll.u32 [#allocation10], 4
          %s618 = int_to_ptr.vmem [resolvable:$true] %s617
          %623 = dma.hbm_to_vmem [thread:$0]  %s5, 3072, %s618, [#allocation9], 64, 64, 4
        $region32: #{tpu_custom_call.1} parent=11 // pred_fallthru
          _
        // Predicated region
        $region33: #{tpu_custom_call.1} parent=11 // pred_check
          %p624 = pneg %p196
        $region34: #{tpu_custom_call.1} parent=11 // pred_check_branch
          %626 = sbr.rel (%p624) target = $region36
        $region35: #{tpu_custom_call.1} parent=11 // pred_region
          %s628 = ssub.s32 16, 16
          %629 = vsyncadd [#allocation12], %s628
          %s631 = sshll.u32 [#allocation11], 4
          %s632 = int_to_ptr.vmem [resolvable:$true] %s631
          %634 = dma.hbm_to_vmem [thread:$0]  %s6, 16, %s632, [#allocation12]
        $region36: #{tpu_custom_call.1} parent=11 // pred_fallthru
          _
        // Predicated region
        $region37: #{tpu_custom_call.1} parent=11 // pred_check
          %p635 = pneg %p217
        $region38: #{tpu_custom_call.1} parent=11 // pred_check_branch
          %637 = sbr.rel (%p635) target = $region40
        $region39: #{tpu_custom_call.1} parent=11 // pred_region
          %s639 = ssub.s32 1536, 1536
          %640 = vsyncadd [#allocation12], %s639
          %s641 = sshll.u32 [#allocation13], 4
          %s642 = int_to_ptr.vmem [resolvable:$true] %s641
          %647 = dma.hbm_to_vmem [thread:$0]  %s7, 1536, %s642, [#allocation12], 64, 64, 4
        $region40: #{tpu_custom_call.1} parent=11 // pred_fallthru
          _
        // Predicated region
        $region41: #{tpu_custom_call.1} parent=11 // pred_check
          %p648 = pneg %p238
        $region42: #{tpu_custom_call.1} parent=11 // pred_check_branch
          %650 = sbr.rel (%p648) target = $region44
        $region43: #{tpu_custom_call.1} parent=11 // pred_region
          %s652 = ssub.s32 16, 16
          %653 = vsyncadd [#allocation15], %s652
          %s655 = sshll.u32 [#allocation14], 4
          %s656 = int_to_ptr.vmem [resolvable:$true] %s655
          %658 = dma.hbm_to_vmem [thread:$0]  %s8, 16, %s656, [#allocation15]
        $region44: #{tpu_custom_call.1} parent=11 // pred_fallthru
          _
        // Predicated region
        $region45: #{tpu_custom_call.1} parent=11 // pred_check
          %p659 = pneg %p259
        $region46: #{tpu_custom_call.1} parent=11 // pred_check_branch
          %661 = sbr.rel (%p659) target = $region48
        $region47: #{tpu_custom_call.1} parent=11 // pred_region
          %s663 = ssub.s32 3072, 3072
          %664 = vsyncadd [#allocation15], %s663
          %s665 = sshll.u32 [#allocation16], 4
          %s666 = int_to_ptr.vmem [resolvable:$true] %s665
          %671 = dma.hbm_to_vmem [thread:$0]  %s9, 3072, %s666, [#allocation15], 64, 64, 4
        $region48: #{tpu_custom_call.1} parent=11 // pred_fallthru
          _
        // Predicated region
        $region49: #{tpu_custom_call.1} parent=11 // pred_check
          %p672 = pneg %p280
        $region50: #{tpu_custom_call.1} parent=11 // pred_check_branch
          %674 = sbr.rel (%p672) target = $region52
        $region51: #{tpu_custom_call.1} parent=11 // pred_region
          %s676 = ssub.s32 16, 16
          %677 = vsyncadd [#allocation18], %s676
          %s679 = sshll.u32 [#allocation17], 4
          %s680 = int_to_ptr.vmem [resolvable:$true] %s679
          %682 = dma.hbm_to_vmem [thread:$0]  %s10, 16, %s680, [#allocation18]
        $region52: #{tpu_custom_call.1} parent=11 // pred_fallthru
          _
        // Predicated region
        $region53: #{tpu_custom_call.1} parent=11 // pred_check
          %p683 = pneg %p301
        $region54: #{tpu_custom_call.1} parent=11 // pred_check_branch
          %685 = sbr.rel (%p683) target = $region56
        $region55: #{tpu_custom_call.1} parent=11 // pred_region
          %s687 = ssub.s32 3072, 3072
          %688 = vsyncadd [#allocation18], %s687
          %s689 = sshll.u32 [#allocation19], 4
          %s690 = int_to_ptr.vmem [resolvable:$true] %s689
          %695 = dma.hbm_to_vmem [thread:$0]  %s11, 3072, %s690, [#allocation18], 64, 64, 4
        $region56: #{tpu_custom_call.1} parent=11 // pred_fallthru
          _
        // Predicated region
        $region57: #{tpu_custom_call.1} parent=11 // pred_check
          %p696 = pneg %p322
        $region58: #{tpu_custom_call.1} parent=11 // pred_check_branch
          %698 = sbr.rel (%p696) target = $region60
        $region59: #{tpu_custom_call.1} parent=11 // pred_region
          %s700 = ssub.s32 16, 16
          %701 = vsyncadd [#allocation21], %s700
          %s703 = sshll.u32 [#allocation20], 4
          %s704 = int_to_ptr.vmem [resolvable:$true] %s703
          %706 = dma.hbm_to_vmem [thread:$0]  %s12, 16, %s704, [#allocation21]
        $region60: #{tpu_custom_call.1} parent=11 // pred_fallthru
          _
        // Predicated region
        $region61: #{tpu_custom_call.1} parent=11 // pred_check
          %p707 = pneg %p343
        $region62: #{tpu_custom_call.1} parent=11 // pred_check_branch
          %709 = sbr.rel (%p707) target = $region64
        $region63: #{tpu_custom_call.1} parent=11 // pred_region
          %s711 = ssub.s32 1536, 1536
          %712 = vsyncadd [#allocation21], %s711
          %s713 = sshll.u32 [#allocation22], 4
          %s714 = int_to_ptr.vmem [resolvable:$true] %s713
          %719 = dma.hbm_to_vmem [thread:$0]  %s13, 1536, %s714, [#allocation21], 64, 64, 4
        $region64: #{tpu_custom_call.1} parent=11 // pred_fallthru
          _
        // Predicated region
        $region65: #{tpu_custom_call.1} parent=11 // pred_check
          %p720 = pneg %p364
        $region66: #{tpu_custom_call.1} parent=11 // pred_check_branch
          %722 = sbr.rel (%p720) target = $region68
        $region67: #{tpu_custom_call.1} parent=11 // pred_region
          %s724 = ssub.s32 16, 16
          %725 = vsyncadd [#allocation24], %s724
          %s727 = sshll.u32 [#allocation23], 4
          %s728 = int_to_ptr.vmem [resolvable:$true] %s727
          %730 = dma.hbm_to_vmem [thread:$0]  %s14, 16, %s728, [#allocation24]
        $region68: #{tpu_custom_call.1} parent=11 // pred_fallthru
          _
        // Predicated region
        $region69: #{tpu_custom_call.1} parent=11 // pred_check
          %p731 = pneg %p385
        $region70: #{tpu_custom_call.1} parent=11 // pred_check_branch
          %733 = sbr.rel (%p731) target = $region72
        $region71: #{tpu_custom_call.1} parent=11 // pred_region
          %s735 = ssub.s32 3072, 3072
          %736 = vsyncadd [#allocation24], %s735
          %s737 = sshll.u32 [#allocation25], 4
          %s738 = int_to_ptr.vmem [resolvable:$true] %s737
          %743 = dma.hbm_to_vmem [thread:$0]  %s15, 3072, %s738, [#allocation24], 64, 64, 4
        $region72: #{tpu_custom_call.1} parent=11 // pred_fallthru
          _
        // Predicated region
        $region73: #{tpu_custom_call.1} parent=11 // pred_check
          %p744 = pneg %p406
        $region74: #{tpu_custom_call.1} parent=11 // pred_check_branch
          %746 = sbr.rel (%p744) target = $region76
        $region75: #{tpu_custom_call.1} parent=11 // pred_region
          %s748 = ssub.s32 16, 16
          %749 = vsyncadd [#allocation27], %s748
          %s751 = sshll.u32 [#allocation26], 4
          %s752 = int_to_ptr.vmem [resolvable:$true] %s751
          %754 = dma.hbm_to_vmem [thread:$0]  %s16, 16, %s752, [#allocation27]
        $region76: #{tpu_custom_call.1} parent=11 // pred_fallthru
          _
        // Predicated region
        $region77: #{tpu_custom_call.1} parent=11 // pred_check
          %p755 = pneg %p427
        $region78: #{tpu_custom_call.1} parent=11 // pred_check_branch
          %757 = sbr.rel (%p755) target = $region80
        $region79: #{tpu_custom_call.1} parent=11 // pred_region
          %s759 = ssub.s32 3072, 3072
          %760 = vsyncadd [#allocation27], %s759
          %s761 = sshll.u32 [#allocation28], 4
          %s762 = int_to_ptr.vmem [resolvable:$true] %s761
          %767 = dma.hbm_to_vmem [thread:$0]  %s17, 3072, %s762, [#allocation27], 64, 64, 4
        $region80: #{tpu_custom_call.1} parent=11 // pred_fallthru
          _
        // Predicated region
        $region81: #{tpu_custom_call.1} parent=11 // pred_check
          %p768 = pneg %p448
        $region82: #{tpu_custom_call.1} parent=11 // pred_check_branch
          %770 = sbr.rel (%p768) target = $region84
        $region83: #{tpu_custom_call.1} parent=11 // pred_region
          %s772 = ssub.s32 16, 16
          %773 = vsyncadd [#allocation30], %s772
          %s775 = sshll.u32 [#allocation29], 4
          %s776 = int_to_ptr.vmem [resolvable:$true] %s775
          %778 = dma.hbm_to_vmem [thread:$0]  %s18, 16, %s776, [#allocation30]
        $region84: #{tpu_custom_call.1} parent=11 // pred_fallthru
          _
        // Predicated region
        $region85: #{tpu_custom_call.1} parent=11 // pred_check
          %p779 = pneg %p469
        $region86: #{tpu_custom_call.1} parent=11 // pred_check_branch
          %781 = sbr.rel (%p779) target = $region88
        $region87: #{tpu_custom_call.1} parent=11 // pred_region
          _
        $region88: #{tpu_custom_call.1} parent=11 // pred_fallthru
          _
        // Predicated region
        $region89: #{tpu_custom_call.1} parent=11 // pred_check
          %p782 = pneg %p490
        $region90: #{tpu_custom_call.1} parent=11 // pred_check_branch
          %784 = sbr.rel (%p782) target = $region92
        $region91: #{tpu_custom_call.1} parent=11 // pred_region
          _
        $region92: #{tpu_custom_call.1} parent=11 // pred_fallthru
          _
        // Predicated region
        $region93: #{tpu_custom_call.1} parent=11 // pred_check
          %p785 = pneg %p511
        $region94: #{tpu_custom_call.1} parent=11 // pred_check_branch
          %787 = sbr.rel (%p785) target = $region96
        $region95: #{tpu_custom_call.1} parent=11 // pred_region
          %s789 = ssub.s32 32, 32
          %790 = vsyncadd [#allocation30], %s789
          %s792 = sshll.u32 [#allocation31], 4
          %s793 = int_to_ptr.vmem [resolvable:$true] %s792
          %795 = dma.hbm_to_vmem [thread:$0]  %s21, 32, %s793, [#allocation30]
        $region96: #{tpu_custom_call.1} parent=11 // pred_fallthru
          _
        // Predicated region
        $region97: #{tpu_custom_call.1} parent=11 // pred_check
          %p796 = pneg %p532
        $region98: #{tpu_custom_call.1} parent=11 // pred_check_branch
          %798 = sbr.rel (%p796) target = $region100
        $region99: #{tpu_custom_call.1} parent=11 // pred_region
          _
        $region100: #{tpu_custom_call.1} parent=11 // pred_fallthru
          _
      $region12: #{tpu_custom_call.1} parent=5 // pred_fallthru
        _
      %p799 = scmp.lt.s32.totalorder %s44, 2
      // Predicated region
      $region101: #{tpu_custom_call.1} parent=5 // pred_check
        %p800 = pneg %p799
      $region102: #{tpu_custom_call.1} parent=5 // pred_check_branch
        %802 = sbr.rel (%p800) target = $region104
      $region103: #{tpu_custom_call.1} parent=5 // pred_region
        // Predicated region
        $region105: #{tpu_custom_call.1} parent=103 // pred_check
          %p803 = pneg %p64
        $region106: #{tpu_custom_call.1} parent=103 // pred_check_branch
          %805 = sbr.rel (%p803) target = $region108
        $region107: #{tpu_custom_call.1} parent=103 // pred_region
          %s806 = sand.u32 %s54, 1
          %s807 = scalar_lea.sflag [#allocation3], %s806
          %s808 = sand.u32 %s54, 1
          %s809 = smul.addr %s808, 16
          %s810 = scalar_lea.vmem [#allocation2], %s809
          %s812 = ssub.s32 256, 256
          %813 = vsyncadd %s807, %s812
          %s814 = smul.addr %s44, 2
          %s815 = smul.addr %s814, 128
          %s816 = scalar_lea.hbm %s0, %s815
          %s817 = sshll.u32 %s810, 4
          %s818 = int_to_ptr.vmem [resolvable:$true] %s817
          %823 = dma.hbm_to_vmem [thread:$0]  %s816, 256, %s818, %s807, 128, 128, 8
        $region108: #{tpu_custom_call.1} parent=103 // pred_fallthru
          _
      $region104: #{tpu_custom_call.1} parent=5 // pred_fallthru
        _
      %p824 = scmp.le.s32.totalorder 1, %s44
      %p825 = scmp.lt.s32.totalorder %s44, 3
      %p826 = pnand %p824, %p825
      %p827 = pneg %p826
      // Predicated region
      $region109: #{tpu_custom_call.1} parent=5 // pred_check
        _
      $region110: #{tpu_custom_call.1} parent=5 // pred_check_branch
        %829 = sbr.rel (%p826) target = $region112
      $region111: #{tpu_custom_call.1} parent=5 // pred_region
        %s830 = ssub.s32 %s44, 1
        %s831 = sand.u32 %s57, 1
        %s832 = scalar_lea.sflag [#allocation3], %s831
        %s833 = sand.u32 %s57, 1
        %s834 = smul.addr %s833, 16
        %s835 = scalar_lea.vmem [#allocation2], %s834
        // Predicated region
        $region113: #{tpu_custom_call.1} parent=111 // pred_check
          %p836 = pneg %p70
        $region114: #{tpu_custom_call.1} parent=111 // pred_check_branch
          %838 = sbr.rel (%p836) target = $region116
        $region115: #{tpu_custom_call.1} parent=111 // pred_region
          %839 = dma.done %s832, 256
        $region116: #{tpu_custom_call.1} parent=111 // pred_fallthru
          _
        // Predicated region
        $region117: #{tpu_custom_call.1} parent=111 // pred_check
          %p840 = pneg %p91
        $region118: #{tpu_custom_call.1} parent=111 // pred_check_branch
          %842 = sbr.rel (%p840) target = $region120
        $region119: #{tpu_custom_call.1} parent=111 // pred_region
          %843 = dma.done [#allocation6], 1536
        $region120: #{tpu_custom_call.1} parent=111 // pred_fallthru
          _
        // Predicated region
        $region121: #{tpu_custom_call.1} parent=111 // pred_check
          %p844 = pneg %p112
        $region122: #{tpu_custom_call.1} parent=111 // pred_check_branch
          %846 = sbr.rel (%p844) target = $region124
        $region123: #{tpu_custom_call.1} parent=111 // pred_region
          %847 = dma.done [#allocation6], 16
        $region124: #{tpu_custom_call.1} parent=111 // pred_fallthru
          _
        // Predicated region
        $region125: #{tpu_custom_call.1} parent=111 // pred_check
          %p848 = pneg %p154
        $region126: #{tpu_custom_call.1} parent=111 // pred_check_branch
          %850 = sbr.rel (%p848) target = $region128
        $region127: #{tpu_custom_call.1} parent=111 // pred_region
          %851 = dma.done [#allocation9], 16
        $region128: #{tpu_custom_call.1} parent=111 // pred_fallthru
          _
        // Predicated region
        $region129: #{tpu_custom_call.1} parent=111 // pred_check
          %p852 = pneg %p175
        $region130: #{tpu_custom_call.1} parent=111 // pred_check_branch
          %854 = sbr.rel (%p852) target = $region132
        $region131: #{tpu_custom_call.1} parent=111 // pred_region
          %855 = dma.done [#allocation9], 3072
        $region132: #{tpu_custom_call.1} parent=111 // pred_fallthru
          _
        // Predicated region
        $region133: #{tpu_custom_call.1} parent=111 // pred_check
          %p856 = pneg %p196
        $region134: #{tpu_custom_call.1} parent=111 // pred_check_branch
          %858 = sbr.rel (%p856) target = $region136
        $region135: #{tpu_custom_call.1} parent=111 // pred_region
          %859 = dma.done [#allocation12], 16
        $region136: #{tpu_custom_call.1} parent=111 // pred_fallthru
          _
        // Predicated region
        $region137: #{tpu_custom_call.1} parent=111 // pred_check
          %p860 = pneg %p217
        $region138: #{tpu_custom_call.1} parent=111 // pred_check_branch
          %862 = sbr.rel (%p860) target = $region140
        $region139: #{tpu_custom_call.1} parent=111 // pred_region
          %863 = dma.done [#allocation12], 1536
        $region140: #{tpu_custom_call.1} parent=111 // pred_fallthru
          _
        // Predicated region
        $region141: #{tpu_custom_call.1} parent=111 // pred_check
          %p864 = pneg %p238
        $region142: #{tpu_custom_call.1} parent=111 // pred_check_branch
          %866 = sbr.rel (%p864) target = $region144
        $region143: #{tpu_custom_call.1} parent=111 // pred_region
          %867 = dma.done [#allocation15], 16
        $region144: #{tpu_custom_call.1} parent=111 // pred_fallthru
          _
        // Predicated region
        $region145: #{tpu_custom_call.1} parent=111 // pred_check
          %p868 = pneg %p259
        $region146: #{tpu_custom_call.1} parent=111 // pred_check_branch
          %870 = sbr.rel (%p868) target = $region148
        $region147: #{tpu_custom_call.1} parent=111 // pred_region
          %871 = dma.done [#allocation15], 3072
        $region148: #{tpu_custom_call.1} parent=111 // pred_fallthru
          _
        // Predicated region
        $region149: #{tpu_custom_call.1} parent=111 // pred_check
          %p872 = pneg %p280
        $region150: #{tpu_custom_call.1} parent=111 // pred_check_branch
          %874 = sbr.rel (%p872) target = $region152
        $region151: #{tpu_custom_call.1} parent=111 // pred_region
          %875 = dma.done [#allocation18], 16
        $region152: #{tpu_custom_call.1} parent=111 // pred_fallthru
          _
        // Predicated region
        $region153: #{tpu_custom_call.1} parent=111 // pred_check
          %p876 = pneg %p301
        $region154: #{tpu_custom_call.1} parent=111 // pred_check_branch
          %878 = sbr.rel (%p876) target = $region156
        $region155: #{tpu_custom_call.1} parent=111 // pred_region
          %879 = dma.done [#allocation18], 3072
        $region156: #{tpu_custom_call.1} parent=111 // pred_fallthru
          _
        // Predicated region
        $region157: #{tpu_custom_call.1} parent=111 // pred_check
          %p880 = pneg %p322
        $region158: #{tpu_custom_call.1} parent=111 // pred_check_branch
          %882 = sbr.rel (%p880) target = $region160
        $region159: #{tpu_custom_call.1} parent=111 // pred_region
          %883 = dma.done [#allocation21], 16
        $region160: #{tpu_custom_call.1} parent=111 // pred_fallthru
          _
        // Predicated region
        $region161: #{tpu_custom_call.1} parent=111 // pred_check
          %p884 = pneg %p343
        $region162: #{tpu_custom_call.1} parent=111 // pred_check_branch
          %886 = sbr.rel (%p884) target = $region164
        $region163: #{tpu_custom_call.1} parent=111 // pred_region
          %887 = dma.done [#allocation21], 1536
        $region164: #{tpu_custom_call.1} parent=111 // pred_fallthru
          _
        // Predicated region
        $region165: #{tpu_custom_call.1} parent=111 // pred_check
          %p888 = pneg %p364
        $region166: #{tpu_custom_call.1} parent=111 // pred_check_branch
          %890 = sbr.rel (%p888) target = $region168
        $region167: #{tpu_custom_call.1} parent=111 // pred_region
          %891 = dma.done [#allocation24], 16
        $region168: #{tpu_custom_call.1} parent=111 // pred_fallthru
          _
        // Predicated region
        $region169: #{tpu_custom_call.1} parent=111 // pred_check
          %p892 = pneg %p385
        $region170: #{tpu_custom_call.1} parent=111 // pred_check_branch
          %894 = sbr.rel (%p892) target = $region172
        $region171: #{tpu_custom_call.1} parent=111 // pred_region
          %895 = dma.done [#allocation24], 3072
        $region172: #{tpu_custom_call.1} parent=111 // pred_fallthru
          _
        // Predicated region
        $region173: #{tpu_custom_call.1} parent=111 // pred_check
          %p896 = pneg %p406
        $region174: #{tpu_custom_call.1} parent=111 // pred_check_branch
          %898 = sbr.rel (%p896) target = $region176
        $region175: #{tpu_custom_call.1} parent=111 // pred_region
          %899 = dma.done [#allocation27], 16
        $region176: #{tpu_custom_call.1} parent=111 // pred_fallthru
          _
        // Predicated region
        $region177: #{tpu_custom_call.1} parent=111 // pred_check
          %p900 = pneg %p427
        $region178: #{tpu_custom_call.1} parent=111 // pred_check_branch
          %902 = sbr.rel (%p900) target = $region180
        $region179: #{tpu_custom_call.1} parent=111 // pred_region
          %903 = dma.done [#allocation27], 3072
        $region180: #{tpu_custom_call.1} parent=111 // pred_fallthru
          _
        // Predicated region
        $region181: #{tpu_custom_call.1} parent=111 // pred_check
          %p904 = pneg %p448
        $region182: #{tpu_custom_call.1} parent=111 // pred_check_branch
          %906 = sbr.rel (%p904) target = $region184
        $region183: #{tpu_custom_call.1} parent=111 // pred_region
          %907 = dma.done [#allocation30], 16
        $region184: #{tpu_custom_call.1} parent=111 // pred_fallthru
          _
        // Predicated region
        $region185: #{tpu_custom_call.1} parent=111 // pred_check
          %p908 = pneg %p511
        $region186: #{tpu_custom_call.1} parent=111 // pred_check_branch
          %910 = sbr.rel (%p908) target = $region188
        $region187: #{tpu_custom_call.1} parent=111 // pred_region
          %911 = dma.done [#allocation30], 32
        $region188: #{tpu_custom_call.1} parent=111 // pred_fallthru
          _
        %s912 = sand.u32 %s57, 1
        %s913 = scalar_lea.sflag [#allocation3], %s912
        %s914 = sand.u32 %s57, 1
        %s915 = smul.addr %s914, 16
        %s916 = scalar_lea.vmem [#allocation2], %s915
        %p917 = pneg %p70
        %p918 = pneg %p67
        %p919 = pneg %p91
        %p920 = pneg %p88
        %p921 = pneg %p112
        %p922 = pneg %p109
        %p923 = pneg %p133
        %p924 = pneg %p130
        %p925 = pneg %p154
        %p926 = pneg %p151
        %p927 = pneg %p175
        %p928 = pneg %p172
        %p929 = pneg %p196
        %p930 = pneg %p193
        %p931 = pneg %p217
        %p932 = pneg %p214
        %p933 = pneg %p238
        %p934 = pneg %p235
        %p935 = pneg %p259
        %p936 = pneg %p256
        %p937 = pneg %p280
        %p938 = pneg %p277
        %p939 = pneg %p301
        %p940 = pneg %p298
        %p941 = pneg %p322
        %p942 = pneg %p319
        %p943 = pneg %p343
        %p944 = pneg %p340
        %p945 = pneg %p364
        %p946 = pneg %p361
        %p947 = pneg %p385
        %p948 = pneg %p382
        %p949 = pneg %p406
        %p950 = pneg %p403
        %p951 = pneg %p427
        %p952 = pneg %p424
        %p953 = pneg %p448
        %p954 = pneg %p445
        %p955 = pneg %p469
        %p956 = pneg %p466
        %p957 = pneg %p490
        %p958 = pneg %p487
        %p959 = pneg %p511
        %p960 = pneg %p508
        %p961 = pneg %p532
        %p962 = pneg %p529
        %p963 = pneg %p558
        %p964 = pneg %p555
        %s965 = sand.u32 %s545, 1
        %s966 = scalar_lea.sflag [#allocation4], %s965
        %s967 = sand.u32 %s545, 1
        %s968 = smul.addr %s967, 4
        %s969 = scalar_lea.vmem [#allocation32], %s968
        %v971 = vld [vmem:[%s835] sm:$0xff]
        %v972 = vld [vmem:[%s835 + $0x8] sm:$0xff]
        %vm975 = vcmask 1040384
        %v976 = vrot.slane %v971, 7
        %v977 = vrot.slane %v972, 7
        %v978 = vsel %vm975, %v976, %v977
        %v981 = vsel %vm975, 0.0, %v976
        %vm982 = vcmask 1046528
        %v983 = vrot.slane %v971, 1
        %v984 = vrot.slane %v972, 1
        %v985 = vsel %vm982, %v983, %v984
        %v988 = vsel %vm982, %v984, 0.0
        %989 = vrot.lane.b32.xlu0 %v971, 64
        %v990 = vpop.permute.xlu0 %989
        %991 = vrot.lane.b32.xlu0 %v972, 64
        %v992 = vpop.permute.xlu0 %991
        %vm995 = vcmask 523264
        %v996 = vsel %vm995, %v981, %v990
        %v997 = vsel %vm995, %v978, %v992
        %v998 = vpack.c.bf16 %v997, %v996
        %v999 = vpack.c.bf16 %v988, %v985
        %v1000 = vld [vmem:[#allocation5] sm:$0xf]
        %v1001 = vld [vmem:[#allocation5 + $0x4] sm:$0xf]
        %v1002 = vld [vmem:[#allocation5 + $0x8] sm:$0xf]
        %v1003 = vld [vmem:[#allocation5 + $0xc] sm:$0xf]
        %v1004 = vld [vmem:[#allocation5 + $0x10] sm:$0xf]
        %v1005 = vld [vmem:[#allocation5 + $0x14] sm:$0xf]
        %v1006 = vld [vmem:[#allocation5 + $0x18] sm:$0xf]
        %v1007 = vld [vmem:[#allocation5 + $0x1c] sm:$0xf]
        %v1008 = vld [vmem:[#allocation5 + $0x20] sm:$0xf]
        %v1009 = vld [vmem:[#allocation5 + $0x24] sm:$0xf]
        %v1010 = vld [vmem:[#allocation5 + $0x28] sm:$0xf]
        %v1011 = vld [vmem:[#allocation5 + $0x2c] sm:$0xf]
        %v1012 = vld [vmem:[#allocation5 + $0x30] sm:$0xf]
        %v1013 = vld [vmem:[#allocation5 + $0x34] sm:$0xf]
        %v1014 = vld [vmem:[#allocation5 + $0x38] sm:$0xf]
        %v1015 = vld [vmem:[#allocation5 + $0x3c] sm:$0xf]
        %v1016 = vld [vmem:[#allocation5 + $0x40] sm:$0xf]
        %v1017 = vld [vmem:[#allocation5 + $0x44] sm:$0xf]
        %v1018 = vld [vmem:[#allocation5 + $0x48] sm:$0xf]
        %v1019 = vld [vmem:[#allocation5 + $0x4c] sm:$0xf]
        %v1020 = vld [vmem:[#allocation5 + $0x50] sm:$0xf]
        %v1021 = vld [vmem:[#allocation5 + $0x54] sm:$0xf]
        %v1022 = vld [vmem:[#allocation5 + $0x58] sm:$0xf]
        %v1023 = vld [vmem:[#allocation5 + $0x5c] sm:$0xf]
        %v1024 = vld [vmem:[#allocation7] sm:$0x1]
        %v1026 = vlaneseq
        %v1027 = vshrl.u32 %v1026, 7
        %v1028 = vsub.s32 0, %v1027
        %v1029 = vrot.slane %v1024, %v1028
        %v1055 = vunpack.c.l.b16 %v1000
        %v1056 = vunpack.c.l.b16 %v1001
        %v1057 = vunpack.c.l.b16 %v1002
        %v1058 = vunpack.c.l.b16 %v1003
        %v1059 = vunpack.c.l.b16 %v1004
        %v1060 = vunpack.c.l.b16 %v1005
        %v1061 = vunpack.c.l.b16 %v1006
        %v1062 = vunpack.c.l.b16 %v1007
        %v1063 = vunpack.c.l.b16 %v1008
        %v1064 = vunpack.c.l.b16 %v1009
        %v1065 = vunpack.c.l.b16 %v1010
        %v1066 = vunpack.c.l.b16 %v1011
        %v1067 = vunpack.c.l.b16 %v1012
        %v1068 = vunpack.c.l.b16 %v1013
        %v1069 = vunpack.c.l.b16 %v1014
        %v1070 = vunpack.c.l.b16 %v1015
        %v1071 = vunpack.c.l.b16 %v1016
        %v1072 = vunpack.c.l.b16 %v1017
        %v1073 = vunpack.c.l.b16 %v1018
        %v1074 = vunpack.c.l.b16 %v1019
        %v1075 = vunpack.c.l.b16 %v1020
        %v1076 = vunpack.c.l.b16 %v1021
        %v1077 = vunpack.c.l.b16 %v1022
        %v1078 = vunpack.c.l.b16 %v1023
        %v1079 = vpack.c.b16 %v1056, %v1055
        %v1080 = vpack.c.b16 %v1058, %v1057
        %v1081 = vpack.c.b16 %v1060, %v1059
        %v1082 = vpack.c.b16 %v1062, %v1061
        %v1083 = vpack.c.b16 %v1064, %v1063
        %v1084 = vpack.c.b16 %v1066, %v1065
        %v1085 = vpack.c.b16 %v1068, %v1067
        %v1086 = vpack.c.b16 %v1070, %v1069
        %v1087 = vpack.c.b16 %v1072, %v1071
        %v1088 = vpack.c.b16 %v1074, %v1073
        %v1089 = vpack.c.b16 %v1076, %v1075
        %v1090 = vpack.c.b16 %v1078, %v1077
        %v1104 = vsel %vm995, %v999, 0
        %1106 = vmatprep.subr.bf16.mxu0 0
        %1107 = vmatpush1.bf16.msra.mxu0 %v1086
        %1108 = vmatprep.subr.bf16.mxu0 0
        %1109 = vmatpush1.bf16.msra.mxu0 %v1085
        %1110 = vmatprep.subr.bf16.mxu0 0
        %1111 = vmatpush1.bf16.msra.mxu0 %v1084
        %1112 = vmatprep.subr.bf16.mxu0 0
        %1113 = vmatpush1.bf16.msra.mxu0 %v1083
        %1114 = vmatprep.subr.bf16.mxu0 0
        %1115 = vmatpush1.bf16.msra.mxu0 %v1082
        %1116 = vmatprep.subr.bf16.mxu0 0
        %1117 = vmatpush1.bf16.msra.mxu0 %v1081
        %1118 = vmatprep.subr.bf16.mxu0 0
        %1119 = vmatpush1.bf16.msra.mxu0 %v1080
        %1120 = vmatprep.subr.bf16.mxu0 0
        %1121 = vmatpush1.bf16.msra.mxu0 %v1079
        %1122 = vmatprep.subr.bf16.mxu0 0
        %1123 = vmatpush2.bf16.msra.mxu0 0
        %1124 = vmatprep.subr.bf16.mxu0 0
        %1125 = vmatpush2.bf16.msra.mxu0 0
        %1126 = vmatprep.subr.bf16.mxu0 0
        %1127 = vmatpush2.bf16.msra.mxu0 0
        %1128 = vmatprep.subr.bf16.mxu0 0
        %1129 = vmatpush2.bf16.msra.mxu0 0
        %1130 = vmatprep.subr.bf16.mxu0 0
        %1131 = vmatpush2.bf16.msra.mxu0 %v1090
        %1132 = vmatprep.subr.bf16.mxu0 0
        %1133 = vmatpush2.bf16.msra.mxu0 %v1089
        %1134 = vmatprep.subr.bf16.mxu0 0
        %1135 = vmatpush2.bf16.msra.mxu0 %v1088
        %1136 = vmatprep.subr.bf16.mxu0 0
        %1137 = vmatpush2.bf16.msra.mxu0 %v1087
        %1138 = vmatprep.mubr.bf16.mxu0 %v1104
        %1139 = vmatmul.mubr.bf16.gmra.mxu0 %v998
        %v1140 = vpop.f32.mrf.mxu0
        %v1141 = vadd.f32 %v1029, %v1140
        %v1142 = vpop.f32.mrf.mxu0
        %v1143 = vpop.f32.mrf.mxu0
        %v1144 = vadd.f32 %v1029, %v1143
        %v1145 = vpop.f32.mrf.mxu0
        %1146 = vdwg.mxu0
        %v1147 = vmax.f32 %v1141, 0.0
        %v1148 = vmax.f32 %v1144, 0.0
        %v1151 = vrot.slane %v1147, 7
        %v1152 = vrot.slane %v1148, 7
        %v1153 = vsel %vm975, %v1151, %v1152
        %v1156 = vsel %vm975, 0.0, %v1151
        %v1157 = vrot.slane %v1147, 1
        %v1158 = vrot.slane %v1148, 1
        %v1159 = vsel %vm982, %v1157, %v1158
        %v1162 = vsel %vm982, %v1158, 0.0
        %v1163 = vpack.c.bf16 %v1153, %v1156
        %v1164 = vpack.c.bf16 %v1148, %v1147
        %v1165 = vpack.c.bf16 %v1162, %v1159
        %v1166 = vld [vmem:[%s3] sm:$0xf]
        %v1167 = vld [vmem:[%s3 + $0x4] sm:$0xf]
        %v1168 = vld [vmem:[%s3 + $0x8] sm:$0xf]
        %v1169 = vld [vmem:[%s3 + $0xc] sm:$0xf]
        %v1170 = vld [vmem:[%s3 + $0x10] sm:$0xf]
        %v1171 = vld [vmem:[%s3 + $0x14] sm:$0xf]
        %v1172 = vld [vmem:[%s3 + $0x18] sm:$0xf]
        %v1173 = vld [vmem:[%s3 + $0x1c] sm:$0xf]
        %v1174 = vld [vmem:[%s3 + $0x20] sm:$0xf]
        %v1175 = vld [vmem:[%s3 + $0x24] sm:$0xf]
        %v1176 = vld [vmem:[%s3 + $0x28] sm:$0xf]
        %v1177 = vld [vmem:[%s3 + $0x2c] sm:$0xf]
        %v1178 = vld [vmem:[%s3 + $0x30] sm:$0xf]
        %v1179 = vld [vmem:[%s3 + $0x34] sm:$0xf]
        %v1180 = vld [vmem:[%s3 + $0x38] sm:$0xf]
        %v1181 = vld [vmem:[%s3 + $0x3c] sm:$0xf]
        %v1182 = vld [vmem:[%s3 + $0x40] sm:$0xf]
        %v1183 = vld [vmem:[%s3 + $0x44] sm:$0xf]
        %v1184 = vld [vmem:[%s3 + $0x48] sm:$0xf]
        %v1185 = vld [vmem:[%s3 + $0x4c] sm:$0xf]
        %v1186 = vld [vmem:[%s3 + $0x50] sm:$0xf]
        %v1187 = vld [vmem:[%s3 + $0x54] sm:$0xf]
        %v1188 = vld [vmem:[%s3 + $0x58] sm:$0xf]
        %v1189 = vld [vmem:[%s3 + $0x5c] sm:$0xf]
        %v1190 = vld [vmem:[%s3 + $0x60] sm:$0xf]
        %v1191 = vld [vmem:[%s3 + $0x64] sm:$0xf]
        %v1192 = vld [vmem:[%s3 + $0x68] sm:$0xf]
        %v1193 = vld [vmem:[%s3 + $0x6c] sm:$0xf]
        %v1194 = vld [vmem:[%s3 + $0x70] sm:$0xf]
        %v1195 = vld [vmem:[%s3 + $0x74] sm:$0xf]
        %v1196 = vld [vmem:[%s3 + $0x78] sm:$0xf]
        %v1197 = vld [vmem:[%s3 + $0x7c] sm:$0xf]
        %v1198 = vld [vmem:[%s3 + $0x80] sm:$0xf]
        %v1199 = vld [vmem:[%s3 + $0x84] sm:$0xf]
        %v1200 = vld [vmem:[%s3 + $0x88] sm:$0xf]
        %v1201 = vld [vmem:[%s3 + $0x8c] sm:$0xf]
        %v1202 = vld [vmem:[%s3 + $0x90] sm:$0xf]
        %v1203 = vld [vmem:[%s3 + $0x94] sm:$0xf]
        %v1204 = vld [vmem:[%s3 + $0x98] sm:$0xf]
        %v1205 = vld [vmem:[%s3 + $0x9c] sm:$0xf]
        %v1206 = vld [vmem:[%s3 + $0xa0] sm:$0xf]
        %v1207 = vld [vmem:[%s3 + $0xa4] sm:$0xf]
        %v1208 = vld [vmem:[%s3 + $0xa8] sm:$0xf]
        %v1209 = vld [vmem:[%s3 + $0xac] sm:$0xf]
        %v1210 = vld [vmem:[%s3 + $0xb0] sm:$0xf]
        %v1211 = vld [vmem:[%s3 + $0xb4] sm:$0xf]
        %v1212 = vld [vmem:[%s3 + $0xb8] sm:$0xf]
        %v1213 = vld [vmem:[%s3 + $0xbc] sm:$0xf]
        %v1214 = vld [vmem:[#allocation8] sm:$0x1]
        %v1216 = vlaneseq
        %v1217 = vshrl.u32 %v1216, 7
        %v1218 = vsub.s32 0, %v1217
        %v1219 = vrot.slane %v1214, %v1218
        %v1269 = vunpack.c.l.b16 %v1166
        %v1270 = vunpack.c.l.b16 %v1167
        %v1271 = vunpack.c.l.b16 %v1168
        %v1272 = vunpack.c.l.b16 %v1169
        %v1273 = vunpack.c.l.b16 %v1170
        %v1274 = vunpack.c.l.b16 %v1171
        %v1275 = vunpack.c.l.b16 %v1172
        %v1276 = vunpack.c.l.b16 %v1173
        %v1277 = vunpack.c.l.b16 %v1174
        %v1278 = vunpack.c.l.b16 %v1175
        %v1279 = vunpack.c.l.b16 %v1176
        %v1280 = vunpack.c.l.b16 %v1177
        %v1281 = vunpack.c.l.b16 %v1178
        %v1282 = vunpack.c.l.b16 %v1179
        %v1283 = vunpack.c.l.b16 %v1180
        %v1284 = vunpack.c.l.b16 %v1181
        %v1285 = vunpack.c.l.b16 %v1182
        %v1286 = vunpack.c.l.b16 %v1183
        %v1287 = vunpack.c.l.b16 %v1184
        %v1288 = vunpack.c.l.b16 %v1185
        %v1289 = vunpack.c.l.b16 %v1186
        %v1290 = vunpack.c.l.b16 %v1187
        %v1291 = vunpack.c.l.b16 %v1188
        %v1292 = vunpack.c.l.b16 %v1189
        %v1293 = vunpack.c.l.b16 %v1190
        %v1294 = vunpack.c.l.b16 %v1191
        %v1295 = vunpack.c.l.b16 %v1192
        %v1296 = vunpack.c.l.b16 %v1193
        %v1297 = vunpack.c.l.b16 %v1194
        %v1298 = vunpack.c.l.b16 %v1195
        %v1299 = vunpack.c.l.b16 %v1196
        %v1300 = vunpack.c.l.b16 %v1197
        %v1301 = vunpack.c.l.b16 %v1198
        %v1302 = vunpack.c.l.b16 %v1199
        %v1303 = vunpack.c.l.b16 %v1200
        %v1304 = vunpack.c.l.b16 %v1201
        %v1305 = vunpack.c.l.b16 %v1202
        %v1306 = vunpack.c.l.b16 %v1203
        %v1307 = vunpack.c.l.b16 %v1204
        %v1308 = vunpack.c.l.b16 %v1205
        %v1309 = vunpack.c.l.b16 %v1206
        %v1310 = vunpack.c.l.b16 %v1207
        %v1311 = vunpack.c.l.b16 %v1208
        %v1312 = vunpack.c.l.b16 %v1209
        %v1313 = vunpack.c.l.b16 %v1210
        %v1314 = vunpack.c.l.b16 %v1211
        %v1315 = vunpack.c.l.b16 %v1212
        %v1316 = vunpack.c.l.b16 %v1213
        %v1317 = vpack.c.b16 %v1270, %v1269
        %v1318 = vpack.c.b16 %v1272, %v1271
        %v1319 = vpack.c.b16 %v1274, %v1273
        %v1320 = vpack.c.b16 %v1276, %v1275
        %v1321 = vpack.c.b16 %v1278, %v1277
        %v1322 = vpack.c.b16 %v1280, %v1279
        %v1323 = vpack.c.b16 %v1282, %v1281
        %v1324 = vpack.c.b16 %v1284, %v1283
        %v1325 = vpack.c.b16 %v1286, %v1285
        %v1326 = vpack.c.b16 %v1288, %v1287
        %v1327 = vpack.c.b16 %v1290, %v1289
        %v1328 = vpack.c.b16 %v1292, %v1291
        %v1329 = vpack.c.b16 %v1294, %v1293
        %v1330 = vpack.c.b16 %v1296, %v1295
        %v1331 = vpack.c.b16 %v1298, %v1297
        %v1332 = vpack.c.b16 %v1300, %v1299
        %v1333 = vpack.c.b16 %v1302, %v1301
        %v1334 = vpack.c.b16 %v1304, %v1303
        %v1335 = vpack.c.b16 %v1306, %v1305
        %v1336 = vpack.c.b16 %v1308, %v1307
        %v1337 = vpack.c.b16 %v1310, %v1309
        %v1338 = vpack.c.b16 %v1312, %v1311
        %v1339 = vpack.c.b16 %v1314, %v1313
        %v1340 = vpack.c.b16 %v1316, %v1315
        %1365 = vmatprep.subr.bf16.mxu0 0
        %1366 = vmatpush1.bf16.msra.mxu0 %v1324
        %1367 = vmatprep.subr.bf16.mxu0 0
        %1368 = vmatpush1.bf16.msra.mxu0 %v1323
        %1369 = vmatprep.subr.bf16.mxu0 0
        %1370 = vmatpush1.bf16.msra.mxu0 %v1322
        %1371 = vmatprep.subr.bf16.mxu0 0
        %1372 = vmatpush1.bf16.msra.mxu0 %v1321
        %1373 = vmatprep.subr.bf16.mxu0 0
        %1374 = vmatpush1.bf16.msra.mxu0 %v1320
        %1375 = vmatprep.subr.bf16.mxu0 0
        %1376 = vmatpush1.bf16.msra.mxu0 %v1319
        %1377 = vmatprep.subr.bf16.mxu0 0
        %1378 = vmatpush1.bf16.msra.mxu0 %v1318
        %1379 = vmatprep.subr.bf16.mxu0 0
        %1380 = vmatpush1.bf16.msra.mxu0 %v1317
        %1381 = vmatprep.subr.bf16.mxu0 0
        %1382 = vmatpush2.bf16.msra.mxu0 %v1332
        %1383 = vmatprep.subr.bf16.mxu0 0
        %1384 = vmatpush2.bf16.msra.mxu0 %v1331
        %1385 = vmatprep.subr.bf16.mxu0 0
        %1386 = vmatpush2.bf16.msra.mxu0 %v1330
        %1387 = vmatprep.subr.bf16.mxu0 0
        %1388 = vmatpush2.bf16.msra.mxu0 %v1329
        %1389 = vmatprep.subr.bf16.mxu0 0
        %1390 = vmatpush2.bf16.msra.mxu0 %v1328
        %1391 = vmatprep.subr.bf16.mxu0 0
        %1392 = vmatpush2.bf16.msra.mxu0 %v1327
        %1393 = vmatprep.subr.bf16.mxu0 0
        %1394 = vmatpush2.bf16.msra.mxu0 %v1326
        %1395 = vmatprep.subr.bf16.mxu0 0
        %1396 = vmatpush2.bf16.msra.mxu0 %v1325
        %1397 = vmatprep.mubr.bf16.mxu0 %v1164
        %1398 = vmatmul.mubr.bf16.gmra.mxu0 %v1163
        %v1399 = vpop.f32.mrf.mxu0
        %v1400 = vadd.f32 %v1219, %v1399
        %v1401 = vpop.f32.mrf.mxu0
        %v1402 = vpop.f32.mrf.mxu0
        %v1403 = vadd.f32 %v1219, %v1402
        %v1404 = vpop.f32.mrf.mxu0
        %1405 = vdwg.mxu0
        %1406 = vmatprep.subr.bf16.mxu0 0
        %1407 = vmatpush1.bf16.msra.mxu0 %v1340
        %1408 = vmatprep.subr.bf16.mxu0 0
        %1409 = vmatpush1.bf16.msra.mxu0 %v1339
        %1410 = vmatprep.subr.bf16.mxu0 0
        %1411 = vmatpush1.bf16.msra.mxu0 %v1338
        %1412 = vmatprep.subr.bf16.mxu0 0
        %1413 = vmatpush1.bf16.msra.mxu0 %v1337
        %1414 = vmatprep.subr.bf16.mxu0 0
        %1415 = vmatpush1.bf16.msra.mxu0 %v1336
        %1416 = vmatprep.subr.bf16.mxu0 0
        %1417 = vmatpush1.bf16.msra.mxu0 %v1335
        %1418 = vmatprep.subr.bf16.mxu0 0
        %1419 = vmatpush1.bf16.msra.mxu0 %v1334
        %1420 = vmatprep.subr.bf16.mxu0 0
        %1421 = vmatpush1.bf16.msra.mxu0 %v1333
        %1422 = vmatprep.subr.bf16.mxu0 0
        %1423 = vmatpush2.bf16.msra.mxu0 0
        %1424 = vmatprep.subr.bf16.mxu0 0
        %1425 = vmatpush2.bf16.msra.mxu0 0
        %1426 = vmatprep.subr.bf16.mxu0 0
        %1427 = vmatpush2.bf16.msra.mxu0 0
        %1428 = vmatprep.subr.bf16.mxu0 0
        %1429 = vmatpush2.bf16.msra.mxu0 0
        %1430 = vmatprep.subr.bf16.mxu0 0
        %1431 = vmatpush2.bf16.msra.mxu0 0
        %1432 = vmatprep.subr.bf16.mxu0 0
        %1433 = vmatpush2.bf16.msra.mxu0 0
        %1434 = vmatprep.subr.bf16.mxu0 0
        %1435 = vmatpush2.bf16.msra.mxu0 0
        %1436 = vmatprep.subr.bf16.mxu0 0
        %1437 = vmatpush2.bf16.msra.mxu0 0
        %1438 = vmatprep.mubr.bf16.mxu0 0
        %1439 = vmatmul.mubr.bf16.gmra.mxu0 %v1165
        %v1440 = vpop.f32.mrf.mxu0
        %v1441 = vadd.f32 %v1400, %v1440
        %v1442 = vpop.f32.mrf.mxu0
        %v1443 = vpop.f32.mrf.mxu0
        %v1444 = vadd.f32 %v1403, %v1443
        %v1445 = vpop.f32.mrf.mxu0
        %1446 = vdwg.mxu0
        %v1447 = vmax.f32 %v1441, 0.0
        %v1448 = vmax.f32 %v1444, 0.0
        %v1451 = vrot.slane %v1447, 7
        %v1452 = vrot.slane %v1448, 7
        %v1453 = vsel %vm975, %v1451, %v1452
        %v1456 = vsel %vm975, 0.0, %v1451
        %v1457 = vrot.slane %v1447, 1
        %v1458 = vrot.slane %v1448, 1
        %v1459 = vsel %vm982, %v1457, %v1458
        %v1462 = vsel %vm982, %v1458, 0.0
        %v1463 = vpack.c.bf16 %v1453, %v1456
        %v1464 = vpack.c.bf16 %v1448, %v1447
        %v1465 = vpack.c.bf16 %v1462, %v1459
        %v1466 = vld [vmem:[#allocation10] sm:$0xf]
        %v1467 = vld [vmem:[#allocation10 + $0x4] sm:$0xf]
        %v1468 = vld [vmem:[#allocation10 + $0x8] sm:$0xf]
        %v1469 = vld [vmem:[#allocation10 + $0xc] sm:$0xf]
        %v1470 = vld [vmem:[#allocation10 + $0x10] sm:$0xf]
        %v1471 = vld [vmem:[#allocation10 + $0x14] sm:$0xf]
        %v1472 = vld [vmem:[#allocation10 + $0x18] sm:$0xf]
        %v1473 = vld [vmem:[#allocation10 + $0x1c] sm:$0xf]
        %v1474 = vld [vmem:[#allocation10 + $0x20] sm:$0xf]
        %v1475 = vld [vmem:[#allocation10 + $0x24] sm:$0xf]
        %v1476 = vld [vmem:[#allocation10 + $0x28] sm:$0xf]
        %v1477 = vld [vmem:[#allocation10 + $0x2c] sm:$0xf]
        %v1478 = vld [vmem:[#allocation10 + $0x30] sm:$0xf]
        %v1479 = vld [vmem:[#allocation10 + $0x34] sm:$0xf]
        %v1480 = vld [vmem:[#allocation10 + $0x38] sm:$0xf]
        %v1481 = vld [vmem:[#allocation10 + $0x3c] sm:$0xf]
        %v1482 = vld [vmem:[#allocation10 + $0x40] sm:$0xf]
        %v1483 = vld [vmem:[#allocation10 + $0x44] sm:$0xf]
        %v1484 = vld [vmem:[#allocation10 + $0x48] sm:$0xf]
        %v1485 = vld [vmem:[#allocation10 + $0x4c] sm:$0xf]
        %v1486 = vld [vmem:[#allocation10 + $0x50] sm:$0xf]
        %v1487 = vld [vmem:[#allocation10 + $0x54] sm:$0xf]
        %v1488 = vld [vmem:[#allocation10 + $0x58] sm:$0xf]
        %v1489 = vld [vmem:[#allocation10 + $0x5c] sm:$0xf]
        %v1490 = vld [vmem:[#allocation10 + $0x60] sm:$0xf]
        %v1491 = vld [vmem:[#allocation10 + $0x64] sm:$0xf]
        %v1492 = vld [vmem:[#allocation10 + $0x68] sm:$0xf]
        %v1493 = vld [vmem:[#allocation10 + $0x6c] sm:$0xf]
        %v1494 = vld [vmem:[#allocation10 + $0x70] sm:$0xf]
        %v1495 = vld [vmem:[#allocation10 + $0x74] sm:$0xf]
        %v1496 = vld [vmem:[#allocation10 + $0x78] sm:$0xf]
        %v1497 = vld [vmem:[#allocation10 + $0x7c] sm:$0xf]
        %v1498 = vld [vmem:[#allocation10 + $0x80] sm:$0xf]
        %v1499 = vld [vmem:[#allocation10 + $0x84] sm:$0xf]
        %v1500 = vld [vmem:[#allocation10 + $0x88] sm:$0xf]
        %v1501 = vld [vmem:[#allocation10 + $0x8c] sm:$0xf]
        %v1502 = vld [vmem:[#allocation10 + $0x90] sm:$0xf]
        %v1503 = vld [vmem:[#allocation10 + $0x94] sm:$0xf]
        %v1504 = vld [vmem:[#allocation10 + $0x98] sm:$0xf]
        %v1505 = vld [vmem:[#allocation10 + $0x9c] sm:$0xf]
        %v1506 = vld [vmem:[#allocation10 + $0xa0] sm:$0xf]
        %v1507 = vld [vmem:[#allocation10 + $0xa4] sm:$0xf]
        %v1508 = vld [vmem:[#allocation10 + $0xa8] sm:$0xf]
        %v1509 = vld [vmem:[#allocation10 + $0xac] sm:$0xf]
        %v1510 = vld [vmem:[#allocation10 + $0xb0] sm:$0xf]
        %v1511 = vld [vmem:[#allocation10 + $0xb4] sm:$0xf]
        %v1512 = vld [vmem:[#allocation10 + $0xb8] sm:$0xf]
        %v1513 = vld [vmem:[#allocation10 + $0xbc] sm:$0xf]
        %v1514 = vld [vmem:[#allocation11] sm:$0x1]
        %v1516 = vlaneseq
        %v1517 = vshrl.u32 %v1516, 7
        %v1518 = vsub.s32 0, %v1517
        %v1519 = vrot.slane %v1514, %v1518
        %v1569 = vunpack.c.l.b16 %v1466
        %v1570 = vunpack.c.l.b16 %v1467
        %v1571 = vunpack.c.l.b16 %v1468
        %v1572 = vunpack.c.l.b16 %v1469
        %v1573 = vunpack.c.l.b16 %v1470
        %v1574 = vunpack.c.l.b16 %v1471
        %v1575 = vunpack.c.l.b16 %v1472
        %v1576 = vunpack.c.l.b16 %v1473
        %v1577 = vunpack.c.l.b16 %v1474
        %v1578 = vunpack.c.l.b16 %v1475
        %v1579 = vunpack.c.l.b16 %v1476
        %v1580 = vunpack.c.l.b16 %v1477
        %v1581 = vunpack.c.l.b16 %v1478
        %v1582 = vunpack.c.l.b16 %v1479
        %v1583 = vunpack.c.l.b16 %v1480
        %v1584 = vunpack.c.l.b16 %v1481
        %v1585 = vunpack.c.l.b16 %v1482
        %v1586 = vunpack.c.l.b16 %v1483
        %v1587 = vunpack.c.l.b16 %v1484
        %v1588 = vunpack.c.l.b16 %v1485
        %v1589 = vunpack.c.l.b16 %v1486
        %v1590 = vunpack.c.l.b16 %v1487
        %v1591 = vunpack.c.l.b16 %v1488
        %v1592 = vunpack.c.l.b16 %v1489
        %v1593 = vunpack.c.l.b16 %v1490
        %v1594 = vunpack.c.l.b16 %v1491
        %v1595 = vunpack.c.l.b16 %v1492
        %v1596 = vunpack.c.l.b16 %v1493
        %v1597 = vunpack.c.l.b16 %v1494
        %v1598 = vunpack.c.l.b16 %v1495
        %v1599 = vunpack.c.l.b16 %v1496
        %v1600 = vunpack.c.l.b16 %v1497
        %v1601 = vunpack.c.l.b16 %v1498
        %v1602 = vunpack.c.l.b16 %v1499
        %v1603 = vunpack.c.l.b16 %v1500
        %v1604 = vunpack.c.l.b16 %v1501
        %v1605 = vunpack.c.l.b16 %v1502
        %v1606 = vunpack.c.l.b16 %v1503
        %v1607 = vunpack.c.l.b16 %v1504
        %v1608 = vunpack.c.l.b16 %v1505
        %v1609 = vunpack.c.l.b16 %v1506
        %v1610 = vunpack.c.l.b16 %v1507
        %v1611 = vunpack.c.l.b16 %v1508
        %v1612 = vunpack.c.l.b16 %v1509
        %v1613 = vunpack.c.l.b16 %v1510
        %v1614 = vunpack.c.l.b16 %v1511
        %v1615 = vunpack.c.l.b16 %v1512
        %v1616 = vunpack.c.l.b16 %v1513
        %v1617 = vpack.c.b16 %v1570, %v1569
        %v1618 = vpack.c.b16 %v1572, %v1571
        %v1619 = vpack.c.b16 %v1574, %v1573
        %v1620 = vpack.c.b16 %v1576, %v1575
        %v1621 = vpack.c.b16 %v1578, %v1577
        %v1622 = vpack.c.b16 %v1580, %v1579
        %v1623 = vpack.c.b16 %v1582, %v1581
        %v1624 = vpack.c.b16 %v1584, %v1583
        %v1625 = vpack.c.b16 %v1586, %v1585
        %v1626 = vpack.c.b16 %v1588, %v1587
        %v1627 = vpack.c.b16 %v1590, %v1589
        %v1628 = vpack.c.b16 %v1592, %v1591
        %v1629 = vpack.c.b16 %v1594, %v1593
        %v1630 = vpack.c.b16 %v1596, %v1595
        %v1631 = vpack.c.b16 %v1598, %v1597
        %v1632 = vpack.c.b16 %v1600, %v1599
        %v1633 = vpack.c.b16 %v1602, %v1601
        %v1634 = vpack.c.b16 %v1604, %v1603
        %v1635 = vpack.c.b16 %v1606, %v1605
        %v1636 = vpack.c.b16 %v1608, %v1607
        %v1637 = vpack.c.b16 %v1610, %v1609
        %v1638 = vpack.c.b16 %v1612, %v1611
        %v1639 = vpack.c.b16 %v1614, %v1613
        %v1640 = vpack.c.b16 %v1616, %v1615
        %1665 = vmatprep.subr.bf16.mxu0 0
        %1666 = vmatpush1.bf16.msra.mxu0 %v1624
        %1667 = vmatprep.subr.bf16.mxu0 0
        %1668 = vmatpush1.bf16.msra.mxu0 %v1623
        %1669 = vmatprep.subr.bf16.mxu0 0
        %1670 = vmatpush1.bf16.msra.mxu0 %v1622
        %1671 = vmatprep.subr.bf16.mxu0 0
        %1672 = vmatpush1.bf16.msra.mxu0 %v1621
        %1673 = vmatprep.subr.bf16.mxu0 0
        %1674 = vmatpush1.bf16.msra.mxu0 %v1620
        %1675 = vmatprep.subr.bf16.mxu0 0
        %1676 = vmatpush1.bf16.msra.mxu0 %v1619
        %1677 = vmatprep.subr.bf16.mxu0 0
        %1678 = vmatpush1.bf16.msra.mxu0 %v1618
        %1679 = vmatprep.subr.bf16.mxu0 0
        %1680 = vmatpush1.bf16.msra.mxu0 %v1617
        %1681 = vmatprep.subr.bf16.mxu0 0
        %1682 = vmatpush2.bf16.msra.mxu0 %v1632
        %1683 = vmatprep.subr.bf16.mxu0 0
        %1684 = vmatpush2.bf16.msra.mxu0 %v1631
        %1685 = vmatprep.subr.bf16.mxu0 0
        %1686 = vmatpush2.bf16.msra.mxu0 %v1630
        %1687 = vmatprep.subr.bf16.mxu0 0
        %1688 = vmatpush2.bf16.msra.mxu0 %v1629
        %1689 = vmatprep.subr.bf16.mxu0 0
        %1690 = vmatpush2.bf16.msra.mxu0 %v1628
        %1691 = vmatprep.subr.bf16.mxu0 0
        %1692 = vmatpush2.bf16.msra.mxu0 %v1627
        %1693 = vmatprep.subr.bf16.mxu0 0
        %1694 = vmatpush2.bf16.msra.mxu0 %v1626
        %1695 = vmatprep.subr.bf16.mxu0 0
        %1696 = vmatpush2.bf16.msra.mxu0 %v1625
        %1697 = vmatprep.mubr.bf16.mxu0 %v1464
        %1698 = vmatmul.mubr.bf16.gmra.mxu0 %v1463
        %v1699 = vpop.f32.mrf.mxu0
        %v1700 = vadd.f32 %v1519, %v1699
        %v1701 = vpop.f32.mrf.mxu0
        %v1702 = vpop.f32.mrf.mxu0
        %v1703 = vadd.f32 %v1519, %v1702
        %v1704 = vpop.f32.mrf.mxu0
        %1705 = vdwg.mxu0
        %1706 = vmatprep.subr.bf16.mxu0 0
        %1707 = vmatpush1.bf16.msra.mxu0 %v1640
        %1708 = vmatprep.subr.bf16.mxu0 0
        %1709 = vmatpush1.bf16.msra.mxu0 %v1639
        %1710 = vmatprep.subr.bf16.mxu0 0
        %1711 = vmatpush1.bf16.msra.mxu0 %v1638
        %1712 = vmatprep.subr.bf16.mxu0 0
        %1713 = vmatpush1.bf16.msra.mxu0 %v1637
        %1714 = vmatprep.subr.bf16.mxu0 0
        %1715 = vmatpush1.bf16.msra.mxu0 %v1636
        %1716 = vmatprep.subr.bf16.mxu0 0
        %1717 = vmatpush1.bf16.msra.mxu0 %v1635
        %1718 = vmatprep.subr.bf16.mxu0 0
        %1719 = vmatpush1.bf16.msra.mxu0 %v1634
        %1720 = vmatprep.subr.bf16.mxu0 0
        %1721 = vmatpush1.bf16.msra.mxu0 %v1633
        %1722 = vmatprep.subr.bf16.mxu0 0
        %1723 = vmatpush2.bf16.msra.mxu0 0
        %1724 = vmatprep.subr.bf16.mxu0 0
        %1725 = vmatpush2.bf16.msra.mxu0 0
        %1726 = vmatprep.subr.bf16.mxu0 0
        %1727 = vmatpush2.bf16.msra.mxu0 0
        %1728 = vmatprep.subr.bf16.mxu0 0
        %1729 = vmatpush2.bf16.msra.mxu0 0
        %1730 = vmatprep.subr.bf16.mxu0 0
        %1731 = vmatpush2.bf16.msra.mxu0 0
        %1732 = vmatprep.subr.bf16.mxu0 0
        %1733 = vmatpush2.bf16.msra.mxu0 0
        %1734 = vmatprep.subr.bf16.mxu0 0
        %1735 = vmatpush2.bf16.msra.mxu0 0
        %1736 = vmatprep.subr.bf16.mxu0 0
        %1737 = vmatpush2.bf16.msra.mxu0 0
        %1738 = vmatprep.mubr.bf16.mxu0 0
        %1739 = vmatmul.mubr.bf16.gmra.mxu0 %v1465
        %v1740 = vpop.f32.mrf.mxu0
        %v1741 = vadd.f32 %v1700, %v1740
        %v1742 = vpop.f32.mrf.mxu0
        %v1743 = vpop.f32.mrf.mxu0
        %v1744 = vadd.f32 %v1703, %v1743
        %v1745 = vpop.f32.mrf.mxu0
        %1746 = vdwg.mxu0
        %v1747 = vmax.f32 %v1741, 0.0
        %v1748 = vmax.f32 %v1744, 0.0
        %v1749 = vld [vmem:[%s19] sm:$0xf]
        %v1750 = vpack.c.bf16 %v1748, %v1747
        %vm1751 = vcmask 130048
        %v1753 = vsel %vm1751, %v1749, 0
        %1755 = vmatprep.subr.bf16.mxu0 0
        %1756 = vmatpush1.bf16.msra.mxu0 0
        %1757 = vmatprep.subr.bf16.mxu0 0
        %1758 = vmatpush1.bf16.msra.mxu0 0
        %1759 = vmatprep.subr.bf16.mxu0 0
        %1760 = vmatpush1.bf16.msra.mxu0 0
        %1761 = vmatprep.subr.bf16.mxu0 0
        %1762 = vmatpush1.bf16.msra.mxu0 0
        %1763 = vmatprep.subr.bf16.mxu0 0
        %1764 = vmatpush1.bf16.msra.mxu0 0
        %1765 = vmatprep.subr.bf16.mxu0 0
        %1766 = vmatpush1.bf16.msra.mxu0 0
        %1767 = vmatprep.subr.bf16.mxu0 0
        %1768 = vmatpush1.bf16.msra.mxu0 0
        %1769 = vmatprep.subr.bf16.mxu0 0
        %1770 = vmatpush1.bf16.msra.mxu0 %v1750
        %1771 = vmatprep.subr.bf16.mxu0 0
        %1772 = vmatpush2.bf16.msra.mxu0 0
        %1773 = vmatprep.subr.bf16.mxu0 0
        %1774 = vmatpush2.bf16.msra.mxu0 0
        %1775 = vmatprep.subr.bf16.mxu0 0
        %1776 = vmatpush2.bf16.msra.mxu0 0
        %1777 = vmatprep.subr.bf16.mxu0 0
        %1778 = vmatpush2.bf16.msra.mxu0 0
        %1779 = vmatprep.subr.bf16.mxu0 0
        %1780 = vmatpush2.bf16.msra.mxu0 0
        %1781 = vmatprep.subr.bf16.mxu0 0
        %1782 = vmatpush2.bf16.msra.mxu0 0
        %1783 = vmatprep.subr.bf16.mxu0 0
        %1784 = vmatpush2.bf16.msra.mxu0 0
        %1785 = vmatprep.subr.bf16.mxu0 0
        %1786 = vmatpush2.bf16.msra.mxu0 0
        %1787 = vmatprep.mubr.bf16.mxu0 0
        %1788 = vmatmul.mubr.bf16.gmra.mxu0 %v1753
        %v1789 = vpop.f32.mrf.mxu0
        %v1790 = vadd.f32 0.0, %v1789
        %v1791 = vpop.f32.mrf.mxu0
        %v1792 = vpop.f32.mrf.mxu0
        %v1793 = vpop.f32.mrf.mxu0
        %1794 = vdwg.mxu0
        %v1795 = vpack.c.bf16 %v1790, %v1790
        %v1796 = vld [vmem:[%s20] sm:$0xf]
        %v1797 = vld [vmem:[%s20 + $0x4] sm:$0xf]
        %v1798 = vld [vmem:[%s20 + $0x8] sm:$0xf]
        %v1799 = vld [vmem:[%s20 + $0xc] sm:$0xf]
        %v1800 = vld [vmem:[%s20 + $0x10] sm:$0xf]
        %v1801 = vld [vmem:[%s20 + $0x14] sm:$0xf]
        %v1802 = vld [vmem:[%s20 + $0x18] sm:$0xf]
        %v1803 = vld [vmem:[%s20 + $0x1c] sm:$0xf]
        %v1804 = vld [vmem:[%s20 + $0x20] sm:$0xf]
        %v1805 = vld [vmem:[%s20 + $0x24] sm:$0xf]
        %v1806 = vld [vmem:[%s20 + $0x28] sm:$0xf]
        %v1807 = vld [vmem:[%s20 + $0x2c] sm:$0xf]
        %v1808 = vld [vmem:[%s20 + $0x30] sm:$0xf]
        %v1809 = vld [vmem:[%s20 + $0x34] sm:$0xf]
        %v1810 = vld [vmem:[%s20 + $0x38] sm:$0xf]
        %v1811 = vld [vmem:[%s20 + $0x3c] sm:$0xf]
        %v1828 = vunpack.c.l.b16 %v1796
        %v1829 = vunpack.c.l.b16 %v1797
        %v1830 = vunpack.c.l.b16 %v1798
        %v1831 = vunpack.c.l.b16 %v1799
        %v1832 = vunpack.c.l.b16 %v1800
        %v1833 = vunpack.c.l.b16 %v1801
        %v1834 = vunpack.c.l.b16 %v1802
        %v1835 = vunpack.c.l.b16 %v1803
        %v1836 = vunpack.c.l.b16 %v1804
        %v1837 = vunpack.c.l.b16 %v1805
        %v1838 = vunpack.c.l.b16 %v1806
        %v1839 = vunpack.c.l.b16 %v1807
        %v1840 = vunpack.c.l.b16 %v1808
        %v1841 = vunpack.c.l.b16 %v1809
        %v1842 = vunpack.c.l.b16 %v1810
        %v1843 = vunpack.c.l.b16 %v1811
        %v1844 = vpack.c.b16 %v1829, %v1828
        %v1845 = vpack.c.b16 %v1831, %v1830
        %v1846 = vpack.c.b16 %v1833, %v1832
        %v1847 = vpack.c.b16 %v1835, %v1834
        %v1848 = vpack.c.b16 %v1837, %v1836
        %v1849 = vpack.c.b16 %v1839, %v1838
        %v1850 = vpack.c.b16 %v1841, %v1840
        %v1851 = vpack.c.b16 %v1843, %v1842
        %1860 = vmatprep.subr.bf16.mxu0 0
        %1861 = vmatpush1.bf16.msra.mxu0 %v1851
        %1862 = vmatprep.subr.bf16.mxu0 0
        %1863 = vmatpush1.bf16.msra.mxu0 %v1850
        %1864 = vmatprep.subr.bf16.mxu0 0
        %1865 = vmatpush1.bf16.msra.mxu0 %v1849
        %1866 = vmatprep.subr.bf16.mxu0 0
        %1867 = vmatpush1.bf16.msra.mxu0 %v1848
        %1868 = vmatprep.subr.bf16.mxu0 0
        %1869 = vmatpush1.bf16.msra.mxu0 %v1847
        %1870 = vmatprep.subr.bf16.mxu0 0
        %1871 = vmatpush1.bf16.msra.mxu0 %v1846
        %1872 = vmatprep.subr.bf16.mxu0 0
        %1873 = vmatpush1.bf16.msra.mxu0 %v1845
        %1874 = vmatprep.subr.bf16.mxu0 0
        %1875 = vmatpush1.bf16.msra.mxu0 %v1844
        %1876 = vmatprep.subr.bf16.mxu0 0
        %1877 = vmatpush2.bf16.msra.mxu0 0
        %1878 = vmatprep.subr.bf16.mxu0 0
        %1879 = vmatpush2.bf16.msra.mxu0 0
        %1880 = vmatprep.subr.bf16.mxu0 0
        %1881 = vmatpush2.bf16.msra.mxu0 0
        %1882 = vmatprep.subr.bf16.mxu0 0
        %1883 = vmatpush2.bf16.msra.mxu0 0
        %1884 = vmatprep.subr.bf16.mxu0 0
        %1885 = vmatpush2.bf16.msra.mxu0 0
        %1886 = vmatprep.subr.bf16.mxu0 0
        %1887 = vmatpush2.bf16.msra.mxu0 0
        %1888 = vmatprep.subr.bf16.mxu0 0
        %1889 = vmatpush2.bf16.msra.mxu0 0
        %1890 = vmatprep.subr.bf16.mxu0 0
        %1891 = vmatpush2.bf16.msra.mxu0 0
        %1892 = vmatprep.mubr.bf16.mxu0 0
        %1893 = vmatmul.mubr.bf16.gmra.mxu0 %v1795
        %v1894 = vpop.f32.mrf.mxu0
        %v1895 = vadd.f32 0.0, %v1894
        %v1896 = vpop.f32.mrf.mxu0
        %v1897 = vpop.f32.mrf.mxu0
        %v1898 = vpop.f32.mrf.mxu0
        %1899 = vdwg.mxu0
        %v1901 = vrot.slane %v1895, 7
        %v1903 = vsel %vm975, 0.0, %v1901
        %v1904 = vrot.slane %v1895, 1
        %v1906 = vsel %vm982, %v1904, 0.0
        %1907 = vrot.lane.b32.xlu0 %v1895, 64
        %v1908 = vpop.permute.xlu0 %1907
        %v1910 = vsel %vm995, %v1903, %v1908
        %v1911 = vpack.c.bf16 %v1910, %v1910
        %v1912 = vpack.c.bf16 %v1906, %v1906
        %v1913 = vld [vmem:[#allocation13] sm:$0xf]
        %v1914 = vld [vmem:[#allocation13 + $0x4] sm:$0xf]
        %v1915 = vld [vmem:[#allocation13 + $0x8] sm:$0xf]
        %v1916 = vld [vmem:[#allocation13 + $0xc] sm:$0xf]
        %v1917 = vld [vmem:[#allocation13 + $0x10] sm:$0xf]
        %v1918 = vld [vmem:[#allocation13 + $0x14] sm:$0xf]
        %v1919 = vld [vmem:[#allocation13 + $0x18] sm:$0xf]
        %v1920 = vld [vmem:[#allocation13 + $0x1c] sm:$0xf]
        %v1921 = vld [vmem:[#allocation13 + $0x20] sm:$0xf]
        %v1922 = vld [vmem:[#allocation13 + $0x24] sm:$0xf]
        %v1923 = vld [vmem:[#allocation13 + $0x28] sm:$0xf]
        %v1924 = vld [vmem:[#allocation13 + $0x2c] sm:$0xf]
        %v1925 = vld [vmem:[#allocation13 + $0x30] sm:$0xf]
        %v1926 = vld [vmem:[#allocation13 + $0x34] sm:$0xf]
        %v1927 = vld [vmem:[#allocation13 + $0x38] sm:$0xf]
        %v1928 = vld [vmem:[#allocation13 + $0x3c] sm:$0xf]
        %v1929 = vld [vmem:[#allocation13 + $0x40] sm:$0xf]
        %v1930 = vld [vmem:[#allocation13 + $0x44] sm:$0xf]
        %v1931 = vld [vmem:[#allocation13 + $0x48] sm:$0xf]
        %v1932 = vld [vmem:[#allocation13 + $0x4c] sm:$0xf]
        %v1933 = vld [vmem:[#allocation13 + $0x50] sm:$0xf]
        %v1934 = vld [vmem:[#allocation13 + $0x54] sm:$0xf]
        %v1935 = vld [vmem:[#allocation13 + $0x58] sm:$0xf]
        %v1936 = vld [vmem:[#allocation13 + $0x5c] sm:$0xf]
        %v1937 = vld [vmem:[#allocation14] sm:$0x1]
        %v1939 = vlaneseq
        %v1940 = vshrl.u32 %v1939, 7
        %v1941 = vsub.s32 0, %v1940
        %v1942 = vrot.slane %v1937, %v1941
        %v1968 = vunpack.c.l.b16 %v1913
        %v1969 = vunpack.c.l.b16 %v1914
        %v1970 = vunpack.c.l.b16 %v1915
        %v1971 = vunpack.c.l.b16 %v1916
        %v1972 = vunpack.c.l.b16 %v1917
        %v1973 = vunpack.c.l.b16 %v1918
        %v1974 = vunpack.c.l.b16 %v1919
        %v1975 = vunpack.c.l.b16 %v1920
        %v1976 = vunpack.c.l.b16 %v1921
        %v1977 = vunpack.c.l.b16 %v1922
        %v1978 = vunpack.c.l.b16 %v1923
        %v1979 = vunpack.c.l.b16 %v1924
        %v1980 = vunpack.c.l.b16 %v1925
        %v1981 = vunpack.c.l.b16 %v1926
        %v1982 = vunpack.c.l.b16 %v1927
        %v1983 = vunpack.c.l.b16 %v1928
        %v1984 = vunpack.c.l.b16 %v1929
        %v1985 = vunpack.c.l.b16 %v1930
        %v1986 = vunpack.c.l.b16 %v1931
        %v1987 = vunpack.c.l.b16 %v1932
        %v1988 = vunpack.c.l.b16 %v1933
        %v1989 = vunpack.c.l.b16 %v1934
        %v1990 = vunpack.c.l.b16 %v1935
        %v1991 = vunpack.c.l.b16 %v1936
        %v1992 = vpack.c.b16 %v1969, %v1968
        %v1993 = vpack.c.b16 %v1971, %v1970
        %v1994 = vpack.c.b16 %v1973, %v1972
        %v1995 = vpack.c.b16 %v1975, %v1974
        %v1996 = vpack.c.b16 %v1977, %v1976
        %v1997 = vpack.c.b16 %v1979, %v1978
        %v1998 = vpack.c.b16 %v1981, %v1980
        %v1999 = vpack.c.b16 %v1983, %v1982
        %v2000 = vpack.c.b16 %v1985, %v1984
        %v2001 = vpack.c.b16 %v1987, %v1986
        %v2002 = vpack.c.b16 %v1989, %v1988
        %v2003 = vpack.c.b16 %v1991, %v1990
        %v2017 = vsel %vm995, %v1912, 0
        %2019 = vmatprep.subr.bf16.mxu0 0
        %2020 = vmatpush1.bf16.msra.mxu0 %v1999
        %2021 = vmatprep.subr.bf16.mxu0 0
        %2022 = vmatpush1.bf16.msra.mxu0 %v1998
        %2023 = vmatprep.subr.bf16.mxu0 0
        %2024 = vmatpush1.bf16.msra.mxu0 %v1997
        %2025 = vmatprep.subr.bf16.mxu0 0
        %2026 = vmatpush1.bf16.msra.mxu0 %v1996
        %2027 = vmatprep.subr.bf16.mxu0 0
        %2028 = vmatpush1.bf16.msra.mxu0 %v1995
        %2029 = vmatprep.subr.bf16.mxu0 0
        %2030 = vmatpush1.bf16.msra.mxu0 %v1994
        %2031 = vmatprep.subr.bf16.mxu0 0
        %2032 = vmatpush1.bf16.msra.mxu0 %v1993
        %2033 = vmatprep.subr.bf16.mxu0 0
        %2034 = vmatpush1.bf16.msra.mxu0 %v1992
        %2035 = vmatprep.subr.bf16.mxu0 0
        %2036 = vmatpush2.bf16.msra.mxu0 0
        %2037 = vmatprep.subr.bf16.mxu0 0
        %2038 = vmatpush2.bf16.msra.mxu0 0
        %2039 = vmatprep.subr.bf16.mxu0 0
        %2040 = vmatpush2.bf16.msra.mxu0 0
        %2041 = vmatprep.subr.bf16.mxu0 0
        %2042 = vmatpush2.bf16.msra.mxu0 0
        %2043 = vmatprep.subr.bf16.mxu0 0
        %2044 = vmatpush2.bf16.msra.mxu0 %v2003
        %2045 = vmatprep.subr.bf16.mxu0 0
        %2046 = vmatpush2.bf16.msra.mxu0 %v2002
        %2047 = vmatprep.subr.bf16.mxu0 0
        %2048 = vmatpush2.bf16.msra.mxu0 %v2001
        %2049 = vmatprep.subr.bf16.mxu0 0
        %2050 = vmatpush2.bf16.msra.mxu0 %v2000
        %2051 = vmatprep.mubr.bf16.mxu0 %v2017
        %2052 = vmatmul.mubr.bf16.gmra.mxu0 %v1911
        %v2053 = vpop.f32.mrf.mxu0
        %v2054 = vadd.f32 %v1942, %v2053
        %v2055 = vpop.f32.mrf.mxu0
        %v2056 = vpop.f32.mrf.mxu0
        %v2057 = vpop.f32.mrf.mxu0
        %2058 = vdwg.mxu0
        %v2059 = vmax.f32 %v2054, 0.0
        %v2061 = vrot.slane %v2059, 7
        %v2063 = vsel %vm975, 0.0, %v2061
        %v2064 = vrot.slane %v2059, 1
        %v2066 = vsel %vm982, %v2064, 0.0
        %v2067 = vpack.c.bf16 %v2063, %v2063
        %v2068 = vpack.c.bf16 %v2059, %v2059
        %v2069 = vpack.c.bf16 %v2066, %v2066
        %v2070 = vld [vmem:[#allocation16] sm:$0xf]
        %v2071 = vld [vmem:[#allocation16 + $0x4] sm:$0xf]
        %v2072 = vld [vmem:[#allocation16 + $0x8] sm:$0xf]
        %v2073 = vld [vmem:[#allocation16 + $0xc] sm:$0xf]
        %v2074 = vld [vmem:[#allocation16 + $0x10] sm:$0xf]
        %v2075 = vld [vmem:[#allocation16 + $0x14] sm:$0xf]
        %v2076 = vld [vmem:[#allocation16 + $0x18] sm:$0xf]
        %v2077 = vld [vmem:[#allocation16 + $0x1c] sm:$0xf]
        %v2078 = vld [vmem:[#allocation16 + $0x20] sm:$0xf]
        %v2079 = vld [vmem:[#allocation16 + $0x24] sm:$0xf]
        %v2080 = vld [vmem:[#allocation16 + $0x28] sm:$0xf]
        %v2081 = vld [vmem:[#allocation16 + $0x2c] sm:$0xf]
        %v2082 = vld [vmem:[#allocation16 + $0x30] sm:$0xf]
        %v2083 = vld [vmem:[#allocation16 + $0x34] sm:$0xf]
        %v2084 = vld [vmem:[#allocation16 + $0x38] sm:$0xf]
        %v2085 = vld [vmem:[#allocation16 + $0x3c] sm:$0xf]
        %v2086 = vld [vmem:[#allocation16 + $0x40] sm:$0xf]
        %v2087 = vld [vmem:[#allocation16 + $0x44] sm:$0xf]
        %v2088 = vld [vmem:[#allocation16 + $0x48] sm:$0xf]
        %v2089 = vld [vmem:[#allocation16 + $0x4c] sm:$0xf]
        %v2090 = vld [vmem:[#allocation16 + $0x50] sm:$0xf]
        %v2091 = vld [vmem:[#allocation16 + $0x54] sm:$0xf]
        %v2092 = vld [vmem:[#allocation16 + $0x58] sm:$0xf]
        %v2093 = vld [vmem:[#allocation16 + $0x5c] sm:$0xf]
        %v2094 = vld [vmem:[#allocation16 + $0x60] sm:$0xf]
        %v2095 = vld [vmem:[#allocation16 + $0x64] sm:$0xf]
        %v2096 = vld [vmem:[#allocation16 + $0x68] sm:$0xf]
        %v2097 = vld [vmem:[#allocation16 + $0x6c] sm:$0xf]
        %v2098 = vld [vmem:[#allocation16 + $0x70] sm:$0xf]
        %v2099 = vld [vmem:[#allocation16 + $0x74] sm:$0xf]
        %v2100 = vld [vmem:[#allocation16 + $0x78] sm:$0xf]
        %v2101 = vld [vmem:[#allocation16 + $0x7c] sm:$0xf]
        %v2102 = vld [vmem:[#allocation16 + $0x80] sm:$0xf]
        %v2103 = vld [vmem:[#allocation16 + $0x84] sm:$0xf]
        %v2104 = vld [vmem:[#allocation16 + $0x88] sm:$0xf]
        %v2105 = vld [vmem:[#allocation16 + $0x8c] sm:$0xf]
        %v2106 = vld [vmem:[#allocation16 + $0x90] sm:$0xf]
        %v2107 = vld [vmem:[#allocation16 + $0x94] sm:$0xf]
        %v2108 = vld [vmem:[#allocation16 + $0x98] sm:$0xf]
        %v2109 = vld [vmem:[#allocation16 + $0x9c] sm:$0xf]
        %v2110 = vld [vmem:[#allocation16 + $0xa0] sm:$0xf]
        %v2111 = vld [vmem:[#allocation16 + $0xa4] sm:$0xf]
        %v2112 = vld [vmem:[#allocation16 + $0xa8] sm:$0xf]
        %v2113 = vld [vmem:[#allocation16 + $0xac] sm:$0xf]
        %v2114 = vld [vmem:[#allocation16 + $0xb0] sm:$0xf]
        %v2115 = vld [vmem:[#allocation16 + $0xb4] sm:$0xf]
        %v2116 = vld [vmem:[#allocation16 + $0xb8] sm:$0xf]
        %v2117 = vld [vmem:[#allocation16 + $0xbc] sm:$0xf]
        %v2118 = vld [vmem:[#allocation17] sm:$0x1]
        %v2120 = vlaneseq
        %v2121 = vshrl.u32 %v2120, 7
        %v2122 = vsub.s32 0, %v2121
        %v2123 = vrot.slane %v2118, %v2122
        %v2173 = vunpack.c.l.b16 %v2070
        %v2174 = vunpack.c.l.b16 %v2071
        %v2175 = vunpack.c.l.b16 %v2072
        %v2176 = vunpack.c.l.b16 %v2073
        %v2177 = vunpack.c.l.b16 %v2074
        %v2178 = vunpack.c.l.b16 %v2075
        %v2179 = vunpack.c.l.b16 %v2076
        %v2180 = vunpack.c.l.b16 %v2077
        %v2181 = vunpack.c.l.b16 %v2078
        %v2182 = vunpack.c.l.b16 %v2079
        %v2183 = vunpack.c.l.b16 %v2080
        %v2184 = vunpack.c.l.b16 %v2081
        %v2185 = vunpack.c.l.b16 %v2082
        %v2186 = vunpack.c.l.b16 %v2083
        %v2187 = vunpack.c.l.b16 %v2084
        %v2188 = vunpack.c.l.b16 %v2085
        %v2189 = vunpack.c.l.b16 %v2086
        %v2190 = vunpack.c.l.b16 %v2087
        %v2191 = vunpack.c.l.b16 %v2088
        %v2192 = vunpack.c.l.b16 %v2089
        %v2193 = vunpack.c.l.b16 %v2090
        %v2194 = vunpack.c.l.b16 %v2091
        %v2195 = vunpack.c.l.b16 %v2092
        %v2196 = vunpack.c.l.b16 %v2093
        %v2197 = vunpack.c.l.b16 %v2094
        %v2198 = vunpack.c.l.b16 %v2095
        %v2199 = vunpack.c.l.b16 %v2096
        %v2200 = vunpack.c.l.b16 %v2097
        %v2201 = vunpack.c.l.b16 %v2098
        %v2202 = vunpack.c.l.b16 %v2099
        %v2203 = vunpack.c.l.b16 %v2100
        %v2204 = vunpack.c.l.b16 %v2101
        %v2205 = vunpack.c.l.b16 %v2102
        %v2206 = vunpack.c.l.b16 %v2103
        %v2207 = vunpack.c.l.b16 %v2104
        %v2208 = vunpack.c.l.b16 %v2105
        %v2209 = vunpack.c.l.b16 %v2106
        %v2210 = vunpack.c.l.b16 %v2107
        %v2211 = vunpack.c.l.b16 %v2108
        %v2212 = vunpack.c.l.b16 %v2109
        %v2213 = vunpack.c.l.b16 %v2110
        %v2214 = vunpack.c.l.b16 %v2111
        %v2215 = vunpack.c.l.b16 %v2112
        %v2216 = vunpack.c.l.b16 %v2113
        %v2217 = vunpack.c.l.b16 %v2114
        %v2218 = vunpack.c.l.b16 %v2115
        %v2219 = vunpack.c.l.b16 %v2116
        %v2220 = vunpack.c.l.b16 %v2117
        %v2221 = vpack.c.b16 %v2174, %v2173
        %v2222 = vpack.c.b16 %v2176, %v2175
        %v2223 = vpack.c.b16 %v2178, %v2177
        %v2224 = vpack.c.b16 %v2180, %v2179
        %v2225 = vpack.c.b16 %v2182, %v2181
        %v2226 = vpack.c.b16 %v2184, %v2183
        %v2227 = vpack.c.b16 %v2186, %v2185
        %v2228 = vpack.c.b16 %v2188, %v2187
        %v2229 = vpack.c.b16 %v2190, %v2189
        %v2230 = vpack.c.b16 %v2192, %v2191
        %v2231 = vpack.c.b16 %v2194, %v2193
        %v2232 = vpack.c.b16 %v2196, %v2195
        %v2233 = vpack.c.b16 %v2198, %v2197
        %v2234 = vpack.c.b16 %v2200, %v2199
        %v2235 = vpack.c.b16 %v2202, %v2201
        %v2236 = vpack.c.b16 %v2204, %v2203
        %v2237 = vpack.c.b16 %v2206, %v2205
        %v2238 = vpack.c.b16 %v2208, %v2207
        %v2239 = vpack.c.b16 %v2210, %v2209
        %v2240 = vpack.c.b16 %v2212, %v2211
        %v2241 = vpack.c.b16 %v2214, %v2213
        %v2242 = vpack.c.b16 %v2216, %v2215
        %v2243 = vpack.c.b16 %v2218, %v2217
        %v2244 = vpack.c.b16 %v2220, %v2219
        %2269 = vmatprep.subr.bf16.mxu0 0
        %2270 = vmatpush1.bf16.msra.mxu0 %v2228
        %2271 = vmatprep.subr.bf16.mxu0 0
        %2272 = vmatpush1.bf16.msra.mxu0 %v2227
        %2273 = vmatprep.subr.bf16.mxu0 0
        %2274 = vmatpush1.bf16.msra.mxu0 %v2226
        %2275 = vmatprep.subr.bf16.mxu0 0
        %2276 = vmatpush1.bf16.msra.mxu0 %v2225
        %2277 = vmatprep.subr.bf16.mxu0 0
        %2278 = vmatpush1.bf16.msra.mxu0 %v2224
        %2279 = vmatprep.subr.bf16.mxu0 0
        %2280 = vmatpush1.bf16.msra.mxu0 %v2223
        %2281 = vmatprep.subr.bf16.mxu0 0
        %2282 = vmatpush1.bf16.msra.mxu0 %v2222
        %2283 = vmatprep.subr.bf16.mxu0 0
        %2284 = vmatpush1.bf16.msra.mxu0 %v2221
        %2285 = vmatprep.subr.bf16.mxu0 0
        %2286 = vmatpush2.bf16.msra.mxu0 %v2236
        %2287 = vmatprep.subr.bf16.mxu0 0
        %2288 = vmatpush2.bf16.msra.mxu0 %v2235
        %2289 = vmatprep.subr.bf16.mxu0 0
        %2290 = vmatpush2.bf16.msra.mxu0 %v2234
        %2291 = vmatprep.subr.bf16.mxu0 0
        %2292 = vmatpush2.bf16.msra.mxu0 %v2233
        %2293 = vmatprep.subr.bf16.mxu0 0
        %2294 = vmatpush2.bf16.msra.mxu0 %v2232
        %2295 = vmatprep.subr.bf16.mxu0 0
        %2296 = vmatpush2.bf16.msra.mxu0 %v2231
        %2297 = vmatprep.subr.bf16.mxu0 0
        %2298 = vmatpush2.bf16.msra.mxu0 %v2230
        %2299 = vmatprep.subr.bf16.mxu0 0
        %2300 = vmatpush2.bf16.msra.mxu0 %v2229
        %2301 = vmatprep.mubr.bf16.mxu0 %v2068
        %2302 = vmatmul.mubr.bf16.gmra.mxu0 %v2067
        %v2303 = vpop.f32.mrf.mxu0
        %v2304 = vadd.f32 %v2123, %v2303
        %v2305 = vpop.f32.mrf.mxu0
        %v2306 = vpop.f32.mrf.mxu0
        %v2307 = vpop.f32.mrf.mxu0
        %2308 = vdwg.mxu0
        %2309 = vmatprep.subr.bf16.mxu0 0
        %2310 = vmatpush1.bf16.msra.mxu0 %v2244
        %2311 = vmatprep.subr.bf16.mxu0 0
        %2312 = vmatpush1.bf16.msra.mxu0 %v2243
        %2313 = vmatprep.subr.bf16.mxu0 0
        %2314 = vmatpush1.bf16.msra.mxu0 %v2242
        %2315 = vmatprep.subr.bf16.mxu0 0
        %2316 = vmatpush1.bf16.msra.mxu0 %v2241
        %2317 = vmatprep.subr.bf16.mxu0 0
        %2318 = vmatpush1.bf16.msra.mxu0 %v2240
        %2319 = vmatprep.subr.bf16.mxu0 0
        %2320 = vmatpush1.bf16.msra.mxu0 %v2239
        %2321 = vmatprep.subr.bf16.mxu0 0
        %2322 = vmatpush1.bf16.msra.mxu0 %v2238
        %2323 = vmatprep.subr.bf16.mxu0 0
        %2324 = vmatpush1.bf16.msra.mxu0 %v2237
        %2325 = vmatprep.subr.bf16.mxu0 0
        %2326 = vmatpush2.bf16.msra.mxu0 0
        %2327 = vmatprep.subr.bf16.mxu0 0
        %2328 = vmatpush2.bf16.msra.mxu0 0
        %2329 = vmatprep.subr.bf16.mxu0 0
        %2330 = vmatpush2.bf16.msra.mxu0 0
        %2331 = vmatprep.subr.bf16.mxu0 0
        %2332 = vmatpush2.bf16.msra.mxu0 0
        %2333 = vmatprep.subr.bf16.mxu0 0
        %2334 = vmatpush2.bf16.msra.mxu0 0
        %2335 = vmatprep.subr.bf16.mxu0 0
        %2336 = vmatpush2.bf16.msra.mxu0 0
        %2337 = vmatprep.subr.bf16.mxu0 0
        %2338 = vmatpush2.bf16.msra.mxu0 0
        %2339 = vmatprep.subr.bf16.mxu0 0
        %2340 = vmatpush2.bf16.msra.mxu0 0
        %2341 = vmatprep.mubr.bf16.mxu0 0
        %2342 = vmatmul.mubr.bf16.gmra.mxu0 %v2069
        %v2343 = vpop.f32.mrf.mxu0
        %v2344 = vadd.f32 %v2304, %v2343
        %v2345 = vpop.f32.mrf.mxu0
        %v2346 = vpop.f32.mrf.mxu0
        %v2347 = vpop.f32.mrf.mxu0
        %2348 = vdwg.mxu0
        %v2349 = vmax.f32 %v2344, 0.0
        %v2351 = vrot.slane %v2349, 7
        %v2353 = vsel %vm975, 0.0, %v2351
        %v2354 = vrot.slane %v2349, 1
        %v2356 = vsel %vm982, %v2354, 0.0
        %v2357 = vpack.c.bf16 %v2353, %v2353
        %v2358 = vpack.c.bf16 %v2349, %v2349
        %v2359 = vpack.c.bf16 %v2356, %v2356
        %v2360 = vld [vmem:[#allocation19] sm:$0xf]
        %v2361 = vld [vmem:[#allocation19 + $0x4] sm:$0xf]
        %v2362 = vld [vmem:[#allocation19 + $0x8] sm:$0xf]
        %v2363 = vld [vmem:[#allocation19 + $0xc] sm:$0xf]
        %v2364 = vld [vmem:[#allocation19 + $0x10] sm:$0xf]
        %v2365 = vld [vmem:[#allocation19 + $0x14] sm:$0xf]
        %v2366 = vld [vmem:[#allocation19 + $0x18] sm:$0xf]
        %v2367 = vld [vmem:[#allocation19 + $0x1c] sm:$0xf]
        %v2368 = vld [vmem:[#allocation19 + $0x20] sm:$0xf]
        %v2369 = vld [vmem:[#allocation19 + $0x24] sm:$0xf]
        %v2370 = vld [vmem:[#allocation19 + $0x28] sm:$0xf]
        %v2371 = vld [vmem:[#allocation19 + $0x2c] sm:$0xf]
        %v2372 = vld [vmem:[#allocation19 + $0x30] sm:$0xf]
        %v2373 = vld [vmem:[#allocation19 + $0x34] sm:$0xf]
        %v2374 = vld [vmem:[#allocation19 + $0x38] sm:$0xf]
        %v2375 = vld [vmem:[#allocation19 + $0x3c] sm:$0xf]
        %v2376 = vld [vmem:[#allocation19 + $0x40] sm:$0xf]
        %v2377 = vld [vmem:[#allocation19 + $0x44] sm:$0xf]
        %v2378 = vld [vmem:[#allocation19 + $0x48] sm:$0xf]
        %v2379 = vld [vmem:[#allocation19 + $0x4c] sm:$0xf]
        %v2380 = vld [vmem:[#allocation19 + $0x50] sm:$0xf]
        %v2381 = vld [vmem:[#allocation19 + $0x54] sm:$0xf]
        %v2382 = vld [vmem:[#allocation19 + $0x58] sm:$0xf]
        %v2383 = vld [vmem:[#allocation19 + $0x5c] sm:$0xf]
        %v2384 = vld [vmem:[#allocation19 + $0x60] sm:$0xf]
        %v2385 = vld [vmem:[#allocation19 + $0x64] sm:$0xf]
        %v2386 = vld [vmem:[#allocation19 + $0x68] sm:$0xf]
        %v2387 = vld [vmem:[#allocation19 + $0x6c] sm:$0xf]
        %v2388 = vld [vmem:[#allocation19 + $0x70] sm:$0xf]
        %v2389 = vld [vmem:[#allocation19 + $0x74] sm:$0xf]
        %v2390 = vld [vmem:[#allocation19 + $0x78] sm:$0xf]
        %v2391 = vld [vmem:[#allocation19 + $0x7c] sm:$0xf]
        %v2392 = vld [vmem:[#allocation19 + $0x80] sm:$0xf]
        %v2393 = vld [vmem:[#allocation19 + $0x84] sm:$0xf]
        %v2394 = vld [vmem:[#allocation19 + $0x88] sm:$0xf]
        %v2395 = vld [vmem:[#allocation19 + $0x8c] sm:$0xf]
        %v2396 = vld [vmem:[#allocation19 + $0x90] sm:$0xf]
        %v2397 = vld [vmem:[#allocation19 + $0x94] sm:$0xf]
        %v2398 = vld [vmem:[#allocation19 + $0x98] sm:$0xf]
        %v2399 = vld [vmem:[#allocation19 + $0x9c] sm:$0xf]
        %v2400 = vld [vmem:[#allocation19 + $0xa0] sm:$0xf]
        %v2401 = vld [vmem:[#allocation19 + $0xa4] sm:$0xf]
        %v2402 = vld [vmem:[#allocation19 + $0xa8] sm:$0xf]
        %v2403 = vld [vmem:[#allocation19 + $0xac] sm:$0xf]
        %v2404 = vld [vmem:[#allocation19 + $0xb0] sm:$0xf]
        %v2405 = vld [vmem:[#allocation19 + $0xb4] sm:$0xf]
        %v2406 = vld [vmem:[#allocation19 + $0xb8] sm:$0xf]
        %v2407 = vld [vmem:[#allocation19 + $0xbc] sm:$0xf]
        %v2408 = vld [vmem:[#allocation20] sm:$0x1]
        %v2410 = vlaneseq
        %v2411 = vshrl.u32 %v2410, 7
        %v2412 = vsub.s32 0, %v2411
        %v2413 = vrot.slane %v2408, %v2412
        %v2463 = vunpack.c.l.b16 %v2360
        %v2464 = vunpack.c.l.b16 %v2361
        %v2465 = vunpack.c.l.b16 %v2362
        %v2466 = vunpack.c.l.b16 %v2363
        %v2467 = vunpack.c.l.b16 %v2364
        %v2468 = vunpack.c.l.b16 %v2365
        %v2469 = vunpack.c.l.b16 %v2366
        %v2470 = vunpack.c.l.b16 %v2367
        %v2471 = vunpack.c.l.b16 %v2368
        %v2472 = vunpack.c.l.b16 %v2369
        %v2473 = vunpack.c.l.b16 %v2370
        %v2474 = vunpack.c.l.b16 %v2371
        %v2475 = vunpack.c.l.b16 %v2372
        %v2476 = vunpack.c.l.b16 %v2373
        %v2477 = vunpack.c.l.b16 %v2374
        %v2478 = vunpack.c.l.b16 %v2375
        %v2479 = vunpack.c.l.b16 %v2376
        %v2480 = vunpack.c.l.b16 %v2377
        %v2481 = vunpack.c.l.b16 %v2378
        %v2482 = vunpack.c.l.b16 %v2379
        %v2483 = vunpack.c.l.b16 %v2380
        %v2484 = vunpack.c.l.b16 %v2381
        %v2485 = vunpack.c.l.b16 %v2382
        %v2486 = vunpack.c.l.b16 %v2383
        %v2487 = vunpack.c.l.b16 %v2384
        %v2488 = vunpack.c.l.b16 %v2385
        %v2489 = vunpack.c.l.b16 %v2386
        %v2490 = vunpack.c.l.b16 %v2387
        %v2491 = vunpack.c.l.b16 %v2388
        %v2492 = vunpack.c.l.b16 %v2389
        %v2493 = vunpack.c.l.b16 %v2390
        %v2494 = vunpack.c.l.b16 %v2391
        %v2495 = vunpack.c.l.b16 %v2392
        %v2496 = vunpack.c.l.b16 %v2393
        %v2497 = vunpack.c.l.b16 %v2394
        %v2498 = vunpack.c.l.b16 %v2395
        %v2499 = vunpack.c.l.b16 %v2396
        %v2500 = vunpack.c.l.b16 %v2397
        %v2501 = vunpack.c.l.b16 %v2398
        %v2502 = vunpack.c.l.b16 %v2399
        %v2503 = vunpack.c.l.b16 %v2400
        %v2504 = vunpack.c.l.b16 %v2401
        %v2505 = vunpack.c.l.b16 %v2402
        %v2506 = vunpack.c.l.b16 %v2403
        %v2507 = vunpack.c.l.b16 %v2404
        %v2508 = vunpack.c.l.b16 %v2405
        %v2509 = vunpack.c.l.b16 %v2406
        %v2510 = vunpack.c.l.b16 %v2407
        %v2511 = vpack.c.b16 %v2464, %v2463
        %v2512 = vpack.c.b16 %v2466, %v2465
        %v2513 = vpack.c.b16 %v2468, %v2467
        %v2514 = vpack.c.b16 %v2470, %v2469
        %v2515 = vpack.c.b16 %v2472, %v2471
        %v2516 = vpack.c.b16 %v2474, %v2473
        %v2517 = vpack.c.b16 %v2476, %v2475
        %v2518 = vpack.c.b16 %v2478, %v2477
        %v2519 = vpack.c.b16 %v2480, %v2479
        %v2520 = vpack.c.b16 %v2482, %v2481
        %v2521 = vpack.c.b16 %v2484, %v2483
        %v2522 = vpack.c.b16 %v2486, %v2485
        %v2523 = vpack.c.b16 %v2488, %v2487
        %v2524 = vpack.c.b16 %v2490, %v2489
        %v2525 = vpack.c.b16 %v2492, %v2491
        %v2526 = vpack.c.b16 %v2494, %v2493
        %v2527 = vpack.c.b16 %v2496, %v2495
        %v2528 = vpack.c.b16 %v2498, %v2497
        %v2529 = vpack.c.b16 %v2500, %v2499
        %v2530 = vpack.c.b16 %v2502, %v2501
        %v2531 = vpack.c.b16 %v2504, %v2503
        %v2532 = vpack.c.b16 %v2506, %v2505
        %v2533 = vpack.c.b16 %v2508, %v2507
        %v2534 = vpack.c.b16 %v2510, %v2509
        %2559 = vmatprep.subr.bf16.mxu0 0
        %2560 = vmatpush1.bf16.msra.mxu0 %v2518
        %2561 = vmatprep.subr.bf16.mxu0 0
        %2562 = vmatpush1.bf16.msra.mxu0 %v2517
        %2563 = vmatprep.subr.bf16.mxu0 0
        %2564 = vmatpush1.bf16.msra.mxu0 %v2516
        %2565 = vmatprep.subr.bf16.mxu0 0
        %2566 = vmatpush1.bf16.msra.mxu0 %v2515
        %2567 = vmatprep.subr.bf16.mxu0 0
        %2568 = vmatpush1.bf16.msra.mxu0 %v2514
        %2569 = vmatprep.subr.bf16.mxu0 0
        %2570 = vmatpush1.bf16.msra.mxu0 %v2513
        %2571 = vmatprep.subr.bf16.mxu0 0
        %2572 = vmatpush1.bf16.msra.mxu0 %v2512
        %2573 = vmatprep.subr.bf16.mxu0 0
        %2574 = vmatpush1.bf16.msra.mxu0 %v2511
        %2575 = vmatprep.subr.bf16.mxu0 0
        %2576 = vmatpush2.bf16.msra.mxu0 %v2526
        %2577 = vmatprep.subr.bf16.mxu0 0
        %2578 = vmatpush2.bf16.msra.mxu0 %v2525
        %2579 = vmatprep.subr.bf16.mxu0 0
        %2580 = vmatpush2.bf16.msra.mxu0 %v2524
        %2581 = vmatprep.subr.bf16.mxu0 0
        %2582 = vmatpush2.bf16.msra.mxu0 %v2523
        %2583 = vmatprep.subr.bf16.mxu0 0
        %2584 = vmatpush2.bf16.msra.mxu0 %v2522
        %2585 = vmatprep.subr.bf16.mxu0 0
        %2586 = vmatpush2.bf16.msra.mxu0 %v2521
        %2587 = vmatprep.subr.bf16.mxu0 0
        %2588 = vmatpush2.bf16.msra.mxu0 %v2520
        %2589 = vmatprep.subr.bf16.mxu0 0
        %2590 = vmatpush2.bf16.msra.mxu0 %v2519
        %2591 = vmatprep.mubr.bf16.mxu0 %v2358
        %2592 = vmatmul.mubr.bf16.gmra.mxu0 %v2357
        %v2593 = vpop.f32.mrf.mxu0
        %v2594 = vadd.f32 %v2413, %v2593
        %v2595 = vpop.f32.mrf.mxu0
        %v2596 = vpop.f32.mrf.mxu0
        %v2597 = vpop.f32.mrf.mxu0
        %2598 = vdwg.mxu0
        %2599 = vmatprep.subr.bf16.mxu0 0
        %2600 = vmatpush1.bf16.msra.mxu0 %v2534
        %2601 = vmatprep.subr.bf16.mxu0 0
        %2602 = vmatpush1.bf16.msra.mxu0 %v2533
        %2603 = vmatprep.subr.bf16.mxu0 0
        %2604 = vmatpush1.bf16.msra.mxu0 %v2532
        %2605 = vmatprep.subr.bf16.mxu0 0
        %2606 = vmatpush1.bf16.msra.mxu0 %v2531
        %2607 = vmatprep.subr.bf16.mxu0 0
        %2608 = vmatpush1.bf16.msra.mxu0 %v2530
        %2609 = vmatprep.subr.bf16.mxu0 0
        %2610 = vmatpush1.bf16.msra.mxu0 %v2529
        %2611 = vmatprep.subr.bf16.mxu0 0
        %2612 = vmatpush1.bf16.msra.mxu0 %v2528
        %2613 = vmatprep.subr.bf16.mxu0 0
        %2614 = vmatpush1.bf16.msra.mxu0 %v2527
        %2615 = vmatprep.subr.bf16.mxu0 0
        %2616 = vmatpush2.bf16.msra.mxu0 0
        %2617 = vmatprep.subr.bf16.mxu0 0
        %2618 = vmatpush2.bf16.msra.mxu0 0
        %2619 = vmatprep.subr.bf16.mxu0 0
        %2620 = vmatpush2.bf16.msra.mxu0 0
        %2621 = vmatprep.subr.bf16.mxu0 0
        %2622 = vmatpush2.bf16.msra.mxu0 0
        %2623 = vmatprep.subr.bf16.mxu0 0
        %2624 = vmatpush2.bf16.msra.mxu0 0
        %2625 = vmatprep.subr.bf16.mxu0 0
        %2626 = vmatpush2.bf16.msra.mxu0 0
        %2627 = vmatprep.subr.bf16.mxu0 0
        %2628 = vmatpush2.bf16.msra.mxu0 0
        %2629 = vmatprep.subr.bf16.mxu0 0
        %2630 = vmatpush2.bf16.msra.mxu0 0
        %2631 = vmatprep.mubr.bf16.mxu0 0
        %2632 = vmatmul.mubr.bf16.gmra.mxu0 %v2359
        %v2633 = vpop.f32.mrf.mxu0
        %v2634 = vadd.f32 %v2594, %v2633
        %v2635 = vpop.f32.mrf.mxu0
        %v2636 = vpop.f32.mrf.mxu0
        %v2637 = vpop.f32.mrf.mxu0
        %2638 = vdwg.mxu0
        %v2639 = vmax.f32 %v2634, 0.0
        %v2640 = vld [vmem:[#allocation31] sm:$0x3]
        %v2641 = vpack.c.bf16 %v2639, %v2639
        %vm2642 = vcmask 64512
        %v2644 = vsel %vm2642, %v2640, 0
        %vm2646 = vcmask 1043456
        %v2648 = vsel %vm2646, %v2641, 0
        %2650 = vmatprep.subr.bf16.mxu0 0
        %2651 = vmatpush1.bf16.msra.mxu0 0
        %2652 = vmatprep.subr.bf16.mxu0 0
        %2653 = vmatpush1.bf16.msra.mxu0 0
        %2654 = vmatprep.subr.bf16.mxu0 0
        %2655 = vmatpush1.bf16.msra.mxu0 0
        %2656 = vmatprep.subr.bf16.mxu0 0
        %2657 = vmatpush1.bf16.msra.mxu0 0
        %2658 = vmatprep.subr.bf16.mxu0 0
        %2659 = vmatpush1.bf16.msra.mxu0 0
        %2660 = vmatprep.subr.bf16.mxu0 0
        %2661 = vmatpush1.bf16.msra.mxu0 0
        %2662 = vmatprep.subr.bf16.mxu0 0
        %2663 = vmatpush1.bf16.msra.mxu0 0
        %2664 = vmatprep.subr.bf16.mxu0 0
        %2665 = vmatpush1.bf16.msra.mxu0 %v2648
        %2666 = vmatprep.subr.bf16.mxu0 0
        %2667 = vmatpush2.bf16.msra.mxu0 0
        %2668 = vmatprep.subr.bf16.mxu0 0
        %2669 = vmatpush2.bf16.msra.mxu0 0
        %2670 = vmatprep.subr.bf16.mxu0 0
        %2671 = vmatpush2.bf16.msra.mxu0 0
        %2672 = vmatprep.subr.bf16.mxu0 0
        %2673 = vmatpush2.bf16.msra.mxu0 0
        %2674 = vmatprep.subr.bf16.mxu0 0
        %2675 = vmatpush2.bf16.msra.mxu0 0
        %2676 = vmatprep.subr.bf16.mxu0 0
        %2677 = vmatpush2.bf16.msra.mxu0 0
        %2678 = vmatprep.subr.bf16.mxu0 0
        %2679 = vmatpush2.bf16.msra.mxu0 0
        %2680 = vmatprep.subr.bf16.mxu0 0
        %2681 = vmatpush2.bf16.msra.mxu0 0
        %2682 = vmatprep.mubr.bf16.mxu0 0
        %2683 = vmatmul.mubr.bf16.gmra.mxu0 %v2644
        %v2684 = vpop.f32.mrf.mxu0
        %v2685 = vadd.f32 0.0, %v2684
        %v2686 = vpop.f32.mrf.mxu0
        %v2687 = vpop.f32.mrf.mxu0
        %v2688 = vpop.f32.mrf.mxu0
        %2689 = vdwg.mxu0
        %v2690 = vpack.c.bf16 %v2685, %v2685
        %v2691 = vld [vmem:[%s22] sm:$0xf]
        %v2692 = vld [vmem:[%s22 + $0x4] sm:$0xf]
        %v2693 = vld [vmem:[%s22 + $0x8] sm:$0xf]
        %v2694 = vld [vmem:[%s22 + $0xc] sm:$0xf]
        %v2695 = vld [vmem:[%s22 + $0x10] sm:$0xf]
        %v2696 = vld [vmem:[%s22 + $0x14] sm:$0xf]
        %v2697 = vld [vmem:[%s22 + $0x18] sm:$0xf]
        %v2698 = vld [vmem:[%s22 + $0x1c] sm:$0xf]
        %v2699 = vld [vmem:[%s22 + $0x20] sm:$0xf]
        %v2700 = vld [vmem:[%s22 + $0x24] sm:$0xf]
        %v2701 = vld [vmem:[%s22 + $0x28] sm:$0xf]
        %v2702 = vld [vmem:[%s22 + $0x2c] sm:$0xf]
        %v2703 = vld [vmem:[%s22 + $0x30] sm:$0xf]
        %v2704 = vld [vmem:[%s22 + $0x34] sm:$0xf]
        %v2705 = vld [vmem:[%s22 + $0x38] sm:$0xf]
        %v2706 = vld [vmem:[%s22 + $0x3c] sm:$0xf]
        %v2723 = vunpack.c.l.b16 %v2691
        %v2724 = vunpack.c.l.b16 %v2692
        %v2725 = vunpack.c.l.b16 %v2693
        %v2726 = vunpack.c.l.b16 %v2694
        %v2727 = vunpack.c.l.b16 %v2695
        %v2728 = vunpack.c.l.b16 %v2696
        %v2729 = vunpack.c.l.b16 %v2697
        %v2730 = vunpack.c.l.b16 %v2698
        %v2731 = vunpack.c.l.b16 %v2699
        %v2732 = vunpack.c.l.b16 %v2700
        %v2733 = vunpack.c.l.b16 %v2701
        %v2734 = vunpack.c.l.b16 %v2702
        %v2735 = vunpack.c.l.b16 %v2703
        %v2736 = vunpack.c.l.b16 %v2704
        %v2737 = vunpack.c.l.b16 %v2705
        %v2738 = vunpack.c.l.b16 %v2706
        %v2739 = vpack.c.b16 %v2724, %v2723
        %v2740 = vpack.c.b16 %v2726, %v2725
        %v2741 = vpack.c.b16 %v2728, %v2727
        %v2742 = vpack.c.b16 %v2730, %v2729
        %v2743 = vpack.c.b16 %v2732, %v2731
        %v2744 = vpack.c.b16 %v2734, %v2733
        %v2745 = vpack.c.b16 %v2736, %v2735
        %v2746 = vpack.c.b16 %v2738, %v2737
        %2755 = vmatprep.subr.bf16.mxu0 0
        %2756 = vmatpush1.bf16.msra.mxu0 %v2746
        %2757 = vmatprep.subr.bf16.mxu0 0
        %2758 = vmatpush1.bf16.msra.mxu0 %v2745
        %2759 = vmatprep.subr.bf16.mxu0 0
        %2760 = vmatpush1.bf16.msra.mxu0 %v2744
        %2761 = vmatprep.subr.bf16.mxu0 0
        %2762 = vmatpush1.bf16.msra.mxu0 %v2743
        %2763 = vmatprep.subr.bf16.mxu0 0
        %2764 = vmatpush1.bf16.msra.mxu0 %v2742
        %2765 = vmatprep.subr.bf16.mxu0 0
        %2766 = vmatpush1.bf16.msra.mxu0 %v2741
        %2767 = vmatprep.subr.bf16.mxu0 0
        %2768 = vmatpush1.bf16.msra.mxu0 %v2740
        %2769 = vmatprep.subr.bf16.mxu0 0
        %2770 = vmatpush1.bf16.msra.mxu0 %v2739
        %2771 = vmatprep.subr.bf16.mxu0 0
        %2772 = vmatpush2.bf16.msra.mxu0 0
        %2773 = vmatprep.subr.bf16.mxu0 0
        %2774 = vmatpush2.bf16.msra.mxu0 0
        %2775 = vmatprep.subr.bf16.mxu0 0
        %2776 = vmatpush2.bf16.msra.mxu0 0
        %2777 = vmatprep.subr.bf16.mxu0 0
        %2778 = vmatpush2.bf16.msra.mxu0 0
        %2779 = vmatprep.subr.bf16.mxu0 0
        %2780 = vmatpush2.bf16.msra.mxu0 0
        %2781 = vmatprep.subr.bf16.mxu0 0
        %2782 = vmatpush2.bf16.msra.mxu0 0
        %2783 = vmatprep.subr.bf16.mxu0 0
        %2784 = vmatpush2.bf16.msra.mxu0 0
        %2785 = vmatprep.subr.bf16.mxu0 0
        %2786 = vmatpush2.bf16.msra.mxu0 0
        %2787 = vmatprep.mubr.bf16.mxu0 0
        %2788 = vmatmul.mubr.bf16.gmra.mxu0 %v2690
        %v2789 = vpop.f32.mrf.mxu0
        %v2790 = vadd.f32 0.0, %v2789
        %v2791 = vpop.f32.mrf.mxu0
        %v2792 = vpop.f32.mrf.mxu0
        %v2793 = vpop.f32.mrf.mxu0
        %2794 = vdwg.mxu0
        %v2796 = vrot.slane %v2790, 7
        %v2798 = vsel %vm975, 0.0, %v2796
        %v2799 = vrot.slane %v2790, 1
        %vm2801 = vcmask 1042432
        %v2802 = vsel %vm2801, %v2799, 0.0
        %2803 = vrot.lane.b32.xlu0 %v2790, 64
        %v2804 = vpop.permute.xlu0 %2803
        %v2806 = vsel %vm995, %v2798, %v2804
        %v2807 = vpack.c.bf16 %v2806, %v2806
        %v2808 = vpack.c.bf16 %v2802, %v2802
        %v2809 = vld [vmem:[#allocation22] sm:$0xf]
        %v2810 = vld [vmem:[#allocation22 + $0x4] sm:$0xf]
        %v2811 = vld [vmem:[#allocation22 + $0x8] sm:$0xf]
        %v2812 = vld [vmem:[#allocation22 + $0xc] sm:$0xf]
        %v2813 = vld [vmem:[#allocation22 + $0x10] sm:$0xf]
        %v2814 = vld [vmem:[#allocation22 + $0x14] sm:$0xf]
        %v2815 = vld [vmem:[#allocation22 + $0x18] sm:$0xf]
        %v2816 = vld [vmem:[#allocation22 + $0x1c] sm:$0xf]
        %v2817 = vld [vmem:[#allocation22 + $0x20] sm:$0xf]
        %v2818 = vld [vmem:[#allocation22 + $0x24] sm:$0xf]
        %v2819 = vld [vmem:[#allocation22 + $0x28] sm:$0xf]
        %v2820 = vld [vmem:[#allocation22 + $0x2c] sm:$0xf]
        %v2821 = vld [vmem:[#allocation22 + $0x30] sm:$0xf]
        %v2822 = vld [vmem:[#allocation22 + $0x34] sm:$0xf]
        %v2823 = vld [vmem:[#allocation22 + $0x38] sm:$0xf]
        %v2824 = vld [vmem:[#allocation22 + $0x3c] sm:$0xf]
        %v2825 = vld [vmem:[#allocation22 + $0x40] sm:$0xf]
        %v2826 = vld [vmem:[#allocation22 + $0x44] sm:$0xf]
        %v2827 = vld [vmem:[#allocation22 + $0x48] sm:$0xf]
        %v2828 = vld [vmem:[#allocation22 + $0x4c] sm:$0xf]
        %v2829 = vld [vmem:[#allocation22 + $0x50] sm:$0xf]
        %v2830 = vld [vmem:[#allocation22 + $0x54] sm:$0xf]
        %v2831 = vld [vmem:[#allocation22 + $0x58] sm:$0xf]
        %v2832 = vld [vmem:[#allocation22 + $0x5c] sm:$0xf]
        %v2833 = vld [vmem:[#allocation23] sm:$0x1]
        %v2835 = vlaneseq
        %v2836 = vshrl.u32 %v2835, 7
        %v2837 = vsub.s32 0, %v2836
        %v2838 = vrot.slane %v2833, %v2837
        %v2864 = vunpack.c.l.b16 %v2809
        %v2865 = vunpack.c.l.b16 %v2810
        %v2866 = vunpack.c.l.b16 %v2811
        %v2867 = vunpack.c.l.b16 %v2812
        %v2868 = vunpack.c.l.b16 %v2813
        %v2869 = vunpack.c.l.b16 %v2814
        %v2870 = vunpack.c.l.b16 %v2815
        %v2871 = vunpack.c.l.b16 %v2816
        %v2872 = vunpack.c.l.b16 %v2817
        %v2873 = vunpack.c.l.b16 %v2818
        %v2874 = vunpack.c.l.b16 %v2819
        %v2875 = vunpack.c.l.b16 %v2820
        %v2876 = vunpack.c.l.b16 %v2821
        %v2877 = vunpack.c.l.b16 %v2822
        %v2878 = vunpack.c.l.b16 %v2823
        %v2879 = vunpack.c.l.b16 %v2824
        %v2880 = vunpack.c.l.b16 %v2825
        %v2881 = vunpack.c.l.b16 %v2826
        %v2882 = vunpack.c.l.b16 %v2827
        %v2883 = vunpack.c.l.b16 %v2828
        %v2884 = vunpack.c.l.b16 %v2829
        %v2885 = vunpack.c.l.b16 %v2830
        %v2886 = vunpack.c.l.b16 %v2831
        %v2887 = vunpack.c.l.b16 %v2832
        %v2888 = vpack.c.b16 %v2865, %v2864
        %v2889 = vpack.c.b16 %v2867, %v2866
        %v2890 = vpack.c.b16 %v2869, %v2868
        %v2891 = vpack.c.b16 %v2871, %v2870
        %v2892 = vpack.c.b16 %v2873, %v2872
        %v2893 = vpack.c.b16 %v2875, %v2874
        %v2894 = vpack.c.b16 %v2877, %v2876
        %v2895 = vpack.c.b16 %v2879, %v2878
        %v2896 = vpack.c.b16 %v2881, %v2880
        %v2897 = vpack.c.b16 %v2883, %v2882
        %v2898 = vpack.c.b16 %v2885, %v2884
        %v2899 = vpack.c.b16 %v2887, %v2886
        %v2913 = vsel %vm995, %v2808, 0
        %2915 = vmatprep.subr.bf16.mxu0 0
        %2916 = vmatpush1.bf16.msra.mxu0 %v2895
        %2917 = vmatprep.subr.bf16.mxu0 0
        %2918 = vmatpush1.bf16.msra.mxu0 %v2894
        %2919 = vmatprep.subr.bf16.mxu0 0
        %2920 = vmatpush1.bf16.msra.mxu0 %v2893
        %2921 = vmatprep.subr.bf16.mxu0 0
        %2922 = vmatpush1.bf16.msra.mxu0 %v2892
        %2923 = vmatprep.subr.bf16.mxu0 0
        %2924 = vmatpush1.bf16.msra.mxu0 %v2891
        %2925 = vmatprep.subr.bf16.mxu0 0
        %2926 = vmatpush1.bf16.msra.mxu0 %v2890
        %2927 = vmatprep.subr.bf16.mxu0 0
        %2928 = vmatpush1.bf16.msra.mxu0 %v2889
        %2929 = vmatprep.subr.bf16.mxu0 0
        %2930 = vmatpush1.bf16.msra.mxu0 %v2888
        %2931 = vmatprep.subr.bf16.mxu0 0
        %2932 = vmatpush2.bf16.msra.mxu0 0
        %2933 = vmatprep.subr.bf16.mxu0 0
        %2934 = vmatpush2.bf16.msra.mxu0 0
        %2935 = vmatprep.subr.bf16.mxu0 0
        %2936 = vmatpush2.bf16.msra.mxu0 0
        %2937 = vmatprep.subr.bf16.mxu0 0
        %2938 = vmatpush2.bf16.msra.mxu0 0
        %2939 = vmatprep.subr.bf16.mxu0 0
        %2940 = vmatpush2.bf16.msra.mxu0 %v2899
        %2941 = vmatprep.subr.bf16.mxu0 0
        %2942 = vmatpush2.bf16.msra.mxu0 %v2898
        %2943 = vmatprep.subr.bf16.mxu0 0
        %2944 = vmatpush2.bf16.msra.mxu0 %v2897
        %2945 = vmatprep.subr.bf16.mxu0 0
        %2946 = vmatpush2.bf16.msra.mxu0 %v2896
        %2947 = vmatprep.mubr.bf16.mxu0 %v2913
        %2948 = vmatmul.mubr.bf16.gmra.mxu0 %v2807
        %v2949 = vpop.f32.mrf.mxu0
        %v2950 = vadd.f32 %v2838, %v2949
        %v2951 = vpop.f32.mrf.mxu0
        %v2952 = vpop.f32.mrf.mxu0
        %v2953 = vpop.f32.mrf.mxu0
        %2954 = vdwg.mxu0
        %v2955 = vmax.f32 %v2950, 0.0
        %v2957 = vrot.slane %v2955, 7
        %v2959 = vsel %vm975, 0.0, %v2957
        %v2960 = vrot.slane %v2955, 1
        %v2962 = vsel %vm2801, %v2960, 0.0
        %v2963 = vpack.c.bf16 %v2959, %v2959
        %v2964 = vpack.c.bf16 %v2955, %v2955
        %v2965 = vpack.c.bf16 %v2962, %v2962
        %v2966 = vld [vmem:[#allocation25] sm:$0xf]
        %v2967 = vld [vmem:[#allocation25 + $0x4] sm:$0xf]
        %v2968 = vld [vmem:[#allocation25 + $0x8] sm:$0xf]
        %v2969 = vld [vmem:[#allocation25 + $0xc] sm:$0xf]
        %v2970 = vld [vmem:[#allocation25 + $0x10] sm:$0xf]
        %v2971 = vld [vmem:[#allocation25 + $0x14] sm:$0xf]
        %v2972 = vld [vmem:[#allocation25 + $0x18] sm:$0xf]
        %v2973 = vld [vmem:[#allocation25 + $0x1c] sm:$0xf]
        %v2974 = vld [vmem:[#allocation25 + $0x20] sm:$0xf]
        %v2975 = vld [vmem:[#allocation25 + $0x24] sm:$0xf]
        %v2976 = vld [vmem:[#allocation25 + $0x28] sm:$0xf]
        %v2977 = vld [vmem:[#allocation25 + $0x2c] sm:$0xf]
        %v2978 = vld [vmem:[#allocation25 + $0x30] sm:$0xf]
        %v2979 = vld [vmem:[#allocation25 + $0x34] sm:$0xf]
        %v2980 = vld [vmem:[#allocation25 + $0x38] sm:$0xf]
        %v2981 = vld [vmem:[#allocation25 + $0x3c] sm:$0xf]
        %v2982 = vld [vmem:[#allocation25 + $0x40] sm:$0xf]
        %v2983 = vld [vmem:[#allocation25 + $0x44] sm:$0xf]
        %v2984 = vld [vmem:[#allocation25 + $0x48] sm:$0xf]
        %v2985 = vld [vmem:[#allocation25 + $0x4c] sm:$0xf]
        %v2986 = vld [vmem:[#allocation25 + $0x50] sm:$0xf]
        %v2987 = vld [vmem:[#allocation25 + $0x54] sm:$0xf]
        %v2988 = vld [vmem:[#allocation25 + $0x58] sm:$0xf]
        %v2989 = vld [vmem:[#allocation25 + $0x5c] sm:$0xf]
        %v2990 = vld [vmem:[#allocation25 + $0x60] sm:$0xf]
        %v2991 = vld [vmem:[#allocation25 + $0x64] sm:$0xf]
        %v2992 = vld [vmem:[#allocation25 + $0x68] sm:$0xf]
        %v2993 = vld [vmem:[#allocation25 + $0x6c] sm:$0xf]
        %v2994 = vld [vmem:[#allocation25 + $0x70] sm:$0xf]
        %v2995 = vld [vmem:[#allocation25 + $0x74] sm:$0xf]
        %v2996 = vld [vmem:[#allocation25 + $0x78] sm:$0xf]
        %v2997 = vld [vmem:[#allocation25 + $0x7c] sm:$0xf]
        %v2998 = vld [vmem:[#allocation25 + $0x80] sm:$0xf]
        %v2999 = vld [vmem:[#allocation25 + $0x84] sm:$0xf]
        %v3000 = vld [vmem:[#allocation25 + $0x88] sm:$0xf]
        %v3001 = vld [vmem:[#allocation25 + $0x8c] sm:$0xf]
        %v3002 = vld [vmem:[#allocation25 + $0x90] sm:$0xf]
        %v3003 = vld [vmem:[#allocation25 + $0x94] sm:$0xf]
        %v3004 = vld [vmem:[#allocation25 + $0x98] sm:$0xf]
        %v3005 = vld [vmem:[#allocation25 + $0x9c] sm:$0xf]
        %v3006 = vld [vmem:[#allocation25 + $0xa0] sm:$0xf]
        %v3007 = vld [vmem:[#allocation25 + $0xa4] sm:$0xf]
        %v3008 = vld [vmem:[#allocation25 + $0xa8] sm:$0xf]
        %v3009 = vld [vmem:[#allocation25 + $0xac] sm:$0xf]
        %v3010 = vld [vmem:[#allocation25 + $0xb0] sm:$0xf]
        %v3011 = vld [vmem:[#allocation25 + $0xb4] sm:$0xf]
        %v3012 = vld [vmem:[#allocation25 + $0xb8] sm:$0xf]
        %v3013 = vld [vmem:[#allocation25 + $0xbc] sm:$0xf]
        %v3014 = vld [vmem:[#allocation26] sm:$0x1]
        %v3016 = vlaneseq
        %v3017 = vshrl.u32 %v3016, 7
        %v3018 = vsub.s32 0, %v3017
        %v3019 = vrot.slane %v3014, %v3018
        %v3069 = vunpack.c.l.b16 %v2966
        %v3070 = vunpack.c.l.b16 %v2967
        %v3071 = vunpack.c.l.b16 %v2968
        %v3072 = vunpack.c.l.b16 %v2969
        %v3073 = vunpack.c.l.b16 %v2970
        %v3074 = vunpack.c.l.b16 %v2971
        %v3075 = vunpack.c.l.b16 %v2972
        %v3076 = vunpack.c.l.b16 %v2973
        %v3077 = vunpack.c.l.b16 %v2974
        %v3078 = vunpack.c.l.b16 %v2975
        %v3079 = vunpack.c.l.b16 %v2976
        %v3080 = vunpack.c.l.b16 %v2977
        %v3081 = vunpack.c.l.b16 %v2978
        %v3082 = vunpack.c.l.b16 %v2979
        %v3083 = vunpack.c.l.b16 %v2980
        %v3084 = vunpack.c.l.b16 %v2981
        %v3085 = vunpack.c.l.b16 %v2982
        %v3086 = vunpack.c.l.b16 %v2983
        %v3087 = vunpack.c.l.b16 %v2984
        %v3088 = vunpack.c.l.b16 %v2985
        %v3089 = vunpack.c.l.b16 %v2986
        %v3090 = vunpack.c.l.b16 %v2987
        %v3091 = vunpack.c.l.b16 %v2988
        %v3092 = vunpack.c.l.b16 %v2989
        %v3093 = vunpack.c.l.b16 %v2990
        %v3094 = vunpack.c.l.b16 %v2991
        %v3095 = vunpack.c.l.b16 %v2992
        %v3096 = vunpack.c.l.b16 %v2993
        %v3097 = vunpack.c.l.b16 %v2994
        %v3098 = vunpack.c.l.b16 %v2995
        %v3099 = vunpack.c.l.b16 %v2996
        %v3100 = vunpack.c.l.b16 %v2997
        %v3101 = vunpack.c.l.b16 %v2998
        %v3102 = vunpack.c.l.b16 %v2999
        %v3103 = vunpack.c.l.b16 %v3000
        %v3104 = vunpack.c.l.b16 %v3001
        %v3105 = vunpack.c.l.b16 %v3002
        %v3106 = vunpack.c.l.b16 %v3003
        %v3107 = vunpack.c.l.b16 %v3004
        %v3108 = vunpack.c.l.b16 %v3005
        %v3109 = vunpack.c.l.b16 %v3006
        %v3110 = vunpack.c.l.b16 %v3007
        %v3111 = vunpack.c.l.b16 %v3008
        %v3112 = vunpack.c.l.b16 %v3009
        %v3113 = vunpack.c.l.b16 %v3010
        %v3114 = vunpack.c.l.b16 %v3011
        %v3115 = vunpack.c.l.b16 %v3012
        %v3116 = vunpack.c.l.b16 %v3013
        %v3117 = vpack.c.b16 %v3070, %v3069
        %v3118 = vpack.c.b16 %v3072, %v3071
        %v3119 = vpack.c.b16 %v3074, %v3073
        %v3120 = vpack.c.b16 %v3076, %v3075
        %v3121 = vpack.c.b16 %v3078, %v3077
        %v3122 = vpack.c.b16 %v3080, %v3079
        %v3123 = vpack.c.b16 %v3082, %v3081
        %v3124 = vpack.c.b16 %v3084, %v3083
        %v3125 = vpack.c.b16 %v3086, %v3085
        %v3126 = vpack.c.b16 %v3088, %v3087
        %v3127 = vpack.c.b16 %v3090, %v3089
        %v3128 = vpack.c.b16 %v3092, %v3091
        %v3129 = vpack.c.b16 %v3094, %v3093
        %v3130 = vpack.c.b16 %v3096, %v3095
        %v3131 = vpack.c.b16 %v3098, %v3097
        %v3132 = vpack.c.b16 %v3100, %v3099
        %v3133 = vpack.c.b16 %v3102, %v3101
        %v3134 = vpack.c.b16 %v3104, %v3103
        %v3135 = vpack.c.b16 %v3106, %v3105
        %v3136 = vpack.c.b16 %v3108, %v3107
        %v3137 = vpack.c.b16 %v3110, %v3109
        %v3138 = vpack.c.b16 %v3112, %v3111
        %v3139 = vpack.c.b16 %v3114, %v3113
        %v3140 = vpack.c.b16 %v3116, %v3115
        %3165 = vmatprep.subr.bf16.mxu0 0
        %3166 = vmatpush1.bf16.msra.mxu0 %v3124
        %3167 = vmatprep.subr.bf16.mxu0 0
        %3168 = vmatpush1.bf16.msra.mxu0 %v3123
        %3169 = vmatprep.subr.bf16.mxu0 0
        %3170 = vmatpush1.bf16.msra.mxu0 %v3122
        %3171 = vmatprep.subr.bf16.mxu0 0
        %3172 = vmatpush1.bf16.msra.mxu0 %v3121
        %3173 = vmatprep.subr.bf16.mxu0 0
        %3174 = vmatpush1.bf16.msra.mxu0 %v3120
        %3175 = vmatprep.subr.bf16.mxu0 0
        %3176 = vmatpush1.bf16.msra.mxu0 %v3119
        %3177 = vmatprep.subr.bf16.mxu0 0
        %3178 = vmatpush1.bf16.msra.mxu0 %v3118
        %3179 = vmatprep.subr.bf16.mxu0 0
        %3180 = vmatpush1.bf16.msra.mxu0 %v3117
        %3181 = vmatprep.subr.bf16.mxu0 0
        %3182 = vmatpush2.bf16.msra.mxu0 %v3132
        %3183 = vmatprep.subr.bf16.mxu0 0
        %3184 = vmatpush2.bf16.msra.mxu0 %v3131
        %3185 = vmatprep.subr.bf16.mxu0 0
        %3186 = vmatpush2.bf16.msra.mxu0 %v3130
        %3187 = vmatprep.subr.bf16.mxu0 0
        %3188 = vmatpush2.bf16.msra.mxu0 %v3129
        %3189 = vmatprep.subr.bf16.mxu0 0
        %3190 = vmatpush2.bf16.msra.mxu0 %v3128
        %3191 = vmatprep.subr.bf16.mxu0 0
        %3192 = vmatpush2.bf16.msra.mxu0 %v3127
        %3193 = vmatprep.subr.bf16.mxu0 0
        %3194 = vmatpush2.bf16.msra.mxu0 %v3126
        %3195 = vmatprep.subr.bf16.mxu0 0
        %3196 = vmatpush2.bf16.msra.mxu0 %v3125
        %3197 = vmatprep.mubr.bf16.mxu0 %v2964
        %3198 = vmatmul.mubr.bf16.gmra.mxu0 %v2963
        %v3199 = vpop.f32.mrf.mxu0
        %v3200 = vadd.f32 %v3019, %v3199
        %v3201 = vpop.f32.mrf.mxu0
        %v3202 = vpop.f32.mrf.mxu0
        %v3203 = vpop.f32.mrf.mxu0
        %3204 = vdwg.mxu0
        %3205 = vmatprep.subr.bf16.mxu0 0
        %3206 = vmatpush1.bf16.msra.mxu0 %v3140
        %3207 = vmatprep.subr.bf16.mxu0 0
        %3208 = vmatpush1.bf16.msra.mxu0 %v3139
        %3209 = vmatprep.subr.bf16.mxu0 0
        %3210 = vmatpush1.bf16.msra.mxu0 %v3138
        %3211 = vmatprep.subr.bf16.mxu0 0
        %3212 = vmatpush1.bf16.msra.mxu0 %v3137
        %3213 = vmatprep.subr.bf16.mxu0 0
        %3214 = vmatpush1.bf16.msra.mxu0 %v3136
        %3215 = vmatprep.subr.bf16.mxu0 0
        %3216 = vmatpush1.bf16.msra.mxu0 %v3135
        %3217 = vmatprep.subr.bf16.mxu0 0
        %3218 = vmatpush1.bf16.msra.mxu0 %v3134
        %3219 = vmatprep.subr.bf16.mxu0 0
        %3220 = vmatpush1.bf16.msra.mxu0 %v3133
        %3221 = vmatprep.subr.bf16.mxu0 0
        %3222 = vmatpush2.bf16.msra.mxu0 0
        %3223 = vmatprep.subr.bf16.mxu0 0
        %3224 = vmatpush2.bf16.msra.mxu0 0
        %3225 = vmatprep.subr.bf16.mxu0 0
        %3226 = vmatpush2.bf16.msra.mxu0 0
        %3227 = vmatprep.subr.bf16.mxu0 0
        %3228 = vmatpush2.bf16.msra.mxu0 0
        %3229 = vmatprep.subr.bf16.mxu0 0
        %3230 = vmatpush2.bf16.msra.mxu0 0
        %3231 = vmatprep.subr.bf16.mxu0 0
        %3232 = vmatpush2.bf16.msra.mxu0 0
        %3233 = vmatprep.subr.bf16.mxu0 0
        %3234 = vmatpush2.bf16.msra.mxu0 0
        %3235 = vmatprep.subr.bf16.mxu0 0
        %3236 = vmatpush2.bf16.msra.mxu0 0
        %3237 = vmatprep.mubr.bf16.mxu0 0
        %3238 = vmatmul.mubr.bf16.gmra.mxu0 %v2965
        %v3239 = vpop.f32.mrf.mxu0
        %v3240 = vadd.f32 %v3200, %v3239
        %v3241 = vpop.f32.mrf.mxu0
        %v3242 = vpop.f32.mrf.mxu0
        %v3243 = vpop.f32.mrf.mxu0
        %3244 = vdwg.mxu0
        %v3245 = vmax.f32 %v3240, 0.0
        %v3247 = vrot.slane %v3245, 7
        %v3249 = vsel %vm975, 0.0, %v3247
        %v3250 = vrot.slane %v3245, 1
        %v3252 = vsel %vm2801, %v3250, 0.0
        %v3253 = vpack.c.bf16 %v3249, %v3249
        %v3254 = vpack.c.bf16 %v3245, %v3245
        %v3255 = vpack.c.bf16 %v3252, %v3252
        %v3256 = vld [vmem:[#allocation28] sm:$0xf]
        %v3257 = vld [vmem:[#allocation28 + $0x4] sm:$0xf]
        %v3258 = vld [vmem:[#allocation28 + $0x8] sm:$0xf]
        %v3259 = vld [vmem:[#allocation28 + $0xc] sm:$0xf]
        %v3260 = vld [vmem:[#allocation28 + $0x10] sm:$0xf]
        %v3261 = vld [vmem:[#allocation28 + $0x14] sm:$0xf]
        %v3262 = vld [vmem:[#allocation28 + $0x18] sm:$0xf]
        %v3263 = vld [vmem:[#allocation28 + $0x1c] sm:$0xf]
        %v3264 = vld [vmem:[#allocation28 + $0x20] sm:$0xf]
        %v3265 = vld [vmem:[#allocation28 + $0x24] sm:$0xf]
        %v3266 = vld [vmem:[#allocation28 + $0x28] sm:$0xf]
        %v3267 = vld [vmem:[#allocation28 + $0x2c] sm:$0xf]
        %v3268 = vld [vmem:[#allocation28 + $0x30] sm:$0xf]
        %v3269 = vld [vmem:[#allocation28 + $0x34] sm:$0xf]
        %v3270 = vld [vmem:[#allocation28 + $0x38] sm:$0xf]
        %v3271 = vld [vmem:[#allocation28 + $0x3c] sm:$0xf]
        %v3272 = vld [vmem:[#allocation28 + $0x40] sm:$0xf]
        %v3273 = vld [vmem:[#allocation28 + $0x44] sm:$0xf]
        %v3274 = vld [vmem:[#allocation28 + $0x48] sm:$0xf]
        %v3275 = vld [vmem:[#allocation28 + $0x4c] sm:$0xf]
        %v3276 = vld [vmem:[#allocation28 + $0x50] sm:$0xf]
        %v3277 = vld [vmem:[#allocation28 + $0x54] sm:$0xf]
        %v3278 = vld [vmem:[#allocation28 + $0x58] sm:$0xf]
        %v3279 = vld [vmem:[#allocation28 + $0x5c] sm:$0xf]
        %v3280 = vld [vmem:[#allocation28 + $0x60] sm:$0xf]
        %v3281 = vld [vmem:[#allocation28 + $0x64] sm:$0xf]
        %v3282 = vld [vmem:[#allocation28 + $0x68] sm:$0xf]
        %v3283 = vld [vmem:[#allocation28 + $0x6c] sm:$0xf]
        %v3284 = vld [vmem:[#allocation28 + $0x70] sm:$0xf]
        %v3285 = vld [vmem:[#allocation28 + $0x74] sm:$0xf]
        %v3286 = vld [vmem:[#allocation28 + $0x78] sm:$0xf]
        %v3287 = vld [vmem:[#allocation28 + $0x7c] sm:$0xf]
        %v3288 = vld [vmem:[#allocation28 + $0x80] sm:$0xf]
        %v3289 = vld [vmem:[#allocation28 + $0x84] sm:$0xf]
        %v3290 = vld [vmem:[#allocation28 + $0x88] sm:$0xf]
        %v3291 = vld [vmem:[#allocation28 + $0x8c] sm:$0xf]
        %v3292 = vld [vmem:[#allocation28 + $0x90] sm:$0xf]
        %v3293 = vld [vmem:[#allocation28 + $0x94] sm:$0xf]
        %v3294 = vld [vmem:[#allocation28 + $0x98] sm:$0xf]
        %v3295 = vld [vmem:[#allocation28 + $0x9c] sm:$0xf]
        %v3296 = vld [vmem:[#allocation28 + $0xa0] sm:$0xf]
        %v3297 = vld [vmem:[#allocation28 + $0xa4] sm:$0xf]
        %v3298 = vld [vmem:[#allocation28 + $0xa8] sm:$0xf]
        %v3299 = vld [vmem:[#allocation28 + $0xac] sm:$0xf]
        %v3300 = vld [vmem:[#allocation28 + $0xb0] sm:$0xf]
        %v3301 = vld [vmem:[#allocation28 + $0xb4] sm:$0xf]
        %v3302 = vld [vmem:[#allocation28 + $0xb8] sm:$0xf]
        %v3303 = vld [vmem:[#allocation28 + $0xbc] sm:$0xf]
        %v3304 = vld [vmem:[#allocation29] sm:$0x1]
        %v3306 = vlaneseq
        %v3307 = vshrl.u32 %v3306, 7
        %v3308 = vsub.s32 0, %v3307
        %v3309 = vrot.slane %v3304, %v3308
        %v3359 = vunpack.c.l.b16 %v3256
        %v3360 = vunpack.c.l.b16 %v3257
        %v3361 = vunpack.c.l.b16 %v3258
        %v3362 = vunpack.c.l.b16 %v3259
        %v3363 = vunpack.c.l.b16 %v3260
        %v3364 = vunpack.c.l.b16 %v3261
        %v3365 = vunpack.c.l.b16 %v3262
        %v3366 = vunpack.c.l.b16 %v3263
        %v3367 = vunpack.c.l.b16 %v3264
        %v3368 = vunpack.c.l.b16 %v3265
        %v3369 = vunpack.c.l.b16 %v3266
        %v3370 = vunpack.c.l.b16 %v3267
        %v3371 = vunpack.c.l.b16 %v3268
        %v3372 = vunpack.c.l.b16 %v3269
        %v3373 = vunpack.c.l.b16 %v3270
        %v3374 = vunpack.c.l.b16 %v3271
        %v3375 = vunpack.c.l.b16 %v3272
        %v3376 = vunpack.c.l.b16 %v3273
        %v3377 = vunpack.c.l.b16 %v3274
        %v3378 = vunpack.c.l.b16 %v3275
        %v3379 = vunpack.c.l.b16 %v3276
        %v3380 = vunpack.c.l.b16 %v3277
        %v3381 = vunpack.c.l.b16 %v3278
        %v3382 = vunpack.c.l.b16 %v3279
        %v3383 = vunpack.c.l.b16 %v3280
        %v3384 = vunpack.c.l.b16 %v3281
        %v3385 = vunpack.c.l.b16 %v3282
        %v3386 = vunpack.c.l.b16 %v3283
        %v3387 = vunpack.c.l.b16 %v3284
        %v3388 = vunpack.c.l.b16 %v3285
        %v3389 = vunpack.c.l.b16 %v3286
        %v3390 = vunpack.c.l.b16 %v3287
        %v3391 = vunpack.c.l.b16 %v3288
        %v3392 = vunpack.c.l.b16 %v3289
        %v3393 = vunpack.c.l.b16 %v3290
        %v3394 = vunpack.c.l.b16 %v3291
        %v3395 = vunpack.c.l.b16 %v3292
        %v3396 = vunpack.c.l.b16 %v3293
        %v3397 = vunpack.c.l.b16 %v3294
        %v3398 = vunpack.c.l.b16 %v3295
        %v3399 = vunpack.c.l.b16 %v3296
        %v3400 = vunpack.c.l.b16 %v3297
        %v3401 = vunpack.c.l.b16 %v3298
        %v3402 = vunpack.c.l.b16 %v3299
        %v3403 = vunpack.c.l.b16 %v3300
        %v3404 = vunpack.c.l.b16 %v3301
        %v3405 = vunpack.c.l.b16 %v3302
        %v3406 = vunpack.c.l.b16 %v3303
        %v3407 = vpack.c.b16 %v3360, %v3359
        %v3408 = vpack.c.b16 %v3362, %v3361
        %v3409 = vpack.c.b16 %v3364, %v3363
        %v3410 = vpack.c.b16 %v3366, %v3365
        %v3411 = vpack.c.b16 %v3368, %v3367
        %v3412 = vpack.c.b16 %v3370, %v3369
        %v3413 = vpack.c.b16 %v3372, %v3371
        %v3414 = vpack.c.b16 %v3374, %v3373
        %v3415 = vpack.c.b16 %v3376, %v3375
        %v3416 = vpack.c.b16 %v3378, %v3377
        %v3417 = vpack.c.b16 %v3380, %v3379
        %v3418 = vpack.c.b16 %v3382, %v3381
        %v3419 = vpack.c.b16 %v3384, %v3383
        %v3420 = vpack.c.b16 %v3386, %v3385
        %v3421 = vpack.c.b16 %v3388, %v3387
        %v3422 = vpack.c.b16 %v3390, %v3389
        %v3423 = vpack.c.b16 %v3392, %v3391
        %v3424 = vpack.c.b16 %v3394, %v3393
        %v3425 = vpack.c.b16 %v3396, %v3395
        %v3426 = vpack.c.b16 %v3398, %v3397
        %v3427 = vpack.c.b16 %v3400, %v3399
        %v3428 = vpack.c.b16 %v3402, %v3401
        %v3429 = vpack.c.b16 %v3404, %v3403
        %v3430 = vpack.c.b16 %v3406, %v3405
        %3455 = vmatprep.subr.bf16.mxu0 0
        %3456 = vmatpush1.bf16.msra.mxu0 %v3414
        %3457 = vmatprep.subr.bf16.mxu0 0
        %3458 = vmatpush1.bf16.msra.mxu0 %v3413
        %3459 = vmatprep.subr.bf16.mxu0 0
        %3460 = vmatpush1.bf16.msra.mxu0 %v3412
        %3461 = vmatprep.subr.bf16.mxu0 0
        %3462 = vmatpush1.bf16.msra.mxu0 %v3411
        %3463 = vmatprep.subr.bf16.mxu0 0
        %3464 = vmatpush1.bf16.msra.mxu0 %v3410
        %3465 = vmatprep.subr.bf16.mxu0 0
        %3466 = vmatpush1.bf16.msra.mxu0 %v3409
        %3467 = vmatprep.subr.bf16.mxu0 0
        %3468 = vmatpush1.bf16.msra.mxu0 %v3408
        %3469 = vmatprep.subr.bf16.mxu0 0
        %3470 = vmatpush1.bf16.msra.mxu0 %v3407
        %3471 = vmatprep.subr.bf16.mxu0 0
        %3472 = vmatpush2.bf16.msra.mxu0 %v3422
        %3473 = vmatprep.subr.bf16.mxu0 0
        %3474 = vmatpush2.bf16.msra.mxu0 %v3421
        %3475 = vmatprep.subr.bf16.mxu0 0
        %3476 = vmatpush2.bf16.msra.mxu0 %v3420
        %3477 = vmatprep.subr.bf16.mxu0 0
        %3478 = vmatpush2.bf16.msra.mxu0 %v3419
        %3479 = vmatprep.subr.bf16.mxu0 0
        %3480 = vmatpush2.bf16.msra.mxu0 %v3418
        %3481 = vmatprep.subr.bf16.mxu0 0
        %3482 = vmatpush2.bf16.msra.mxu0 %v3417
        %3483 = vmatprep.subr.bf16.mxu0 0
        %3484 = vmatpush2.bf16.msra.mxu0 %v3416
        %3485 = vmatprep.subr.bf16.mxu0 0
        %3486 = vmatpush2.bf16.msra.mxu0 %v3415
        %3487 = vmatprep.mubr.bf16.mxu0 %v3254
        %3488 = vmatmul.mubr.bf16.gmra.mxu0 %v3253
        %v3489 = vpop.f32.mrf.mxu0
        %v3490 = vadd.f32 %v3309, %v3489
        %v3491 = vpop.f32.mrf.mxu0
        %v3492 = vpop.f32.mrf.mxu0
        %v3493 = vpop.f32.mrf.mxu0
        %3494 = vdwg.mxu0
        %3495 = vmatprep.subr.bf16.mxu0 0
        %3496 = vmatpush1.bf16.msra.mxu0 %v3430
        %3497 = vmatprep.subr.bf16.mxu0 0
        %3498 = vmatpush1.bf16.msra.mxu0 %v3429
        %3499 = vmatprep.subr.bf16.mxu0 0
        %3500 = vmatpush1.bf16.msra.mxu0 %v3428
        %3501 = vmatprep.subr.bf16.mxu0 0
        %3502 = vmatpush1.bf16.msra.mxu0 %v3427
        %3503 = vmatprep.subr.bf16.mxu0 0
        %3504 = vmatpush1.bf16.msra.mxu0 %v3426
        %3505 = vmatprep.subr.bf16.mxu0 0
        %3506 = vmatpush1.bf16.msra.mxu0 %v3425
        %3507 = vmatprep.subr.bf16.mxu0 0
        %3508 = vmatpush1.bf16.msra.mxu0 %v3424
        %3509 = vmatprep.subr.bf16.mxu0 0
        %3510 = vmatpush1.bf16.msra.mxu0 %v3423
        %3511 = vmatprep.subr.bf16.mxu0 0
        %3512 = vmatpush2.bf16.msra.mxu0 0
        %3513 = vmatprep.subr.bf16.mxu0 0
        %3514 = vmatpush2.bf16.msra.mxu0 0
        %3515 = vmatprep.subr.bf16.mxu0 0
        %3516 = vmatpush2.bf16.msra.mxu0 0
        %3517 = vmatprep.subr.bf16.mxu0 0
        %3518 = vmatpush2.bf16.msra.mxu0 0
        %3519 = vmatprep.subr.bf16.mxu0 0
        %3520 = vmatpush2.bf16.msra.mxu0 0
        %3521 = vmatprep.subr.bf16.mxu0 0
        %3522 = vmatpush2.bf16.msra.mxu0 0
        %3523 = vmatprep.subr.bf16.mxu0 0
        %3524 = vmatpush2.bf16.msra.mxu0 0
        %3525 = vmatprep.subr.bf16.mxu0 0
        %3526 = vmatpush2.bf16.msra.mxu0 0
        %3527 = vmatprep.mubr.bf16.mxu0 0
        %3528 = vmatmul.mubr.bf16.gmra.mxu0 %v3255
        %v3529 = vpop.f32.mrf.mxu0
        %v3530 = vadd.f32 %v3490, %v3529
        %v3531 = vpop.f32.mrf.mxu0
        %v3532 = vpop.f32.mrf.mxu0
        %v3533 = vpop.f32.mrf.mxu0
        %3534 = vdwg.mxu0
        %v3535 = vmax.f32 %v3530, 0.0
        %3536 = vst [vmem:[%s969] sm:$0xf] %v3535
        %s3537 = sand.u32 %s545, 1
        %s3538 = scalar_lea.sflag [#allocation4], %s3537
        %s3539 = sand.u32 %s545, 1
        %s3540 = smul.addr %s3539, 4
        %s3541 = scalar_lea.vmem [#allocation32], %s3540
        // Predicated region
        $region189: #{tpu_custom_call.1} parent=111 // pred_check
          %p3542 = pneg %p555
        $region190: #{tpu_custom_call.1} parent=111 // pred_check_branch
          %3544 = sbr.rel (%p3542) target = $region192
        $region191: #{tpu_custom_call.1} parent=111 // pred_region
          %s3546 = ssub.s32 64, 64
          %3547 = vsyncadd %s3538, %s3546
          %s3548 = smul.addr %s49, 64
          %s3549 = scalar_lea.hbm %s23, %s3548
          %s3551 = sshll.u32 %s3541, 4
          %s3552 = int_to_ptr.vmem [resolvable:$true] %s3551
          %3554 = dma.vmem_to_hbm [thread:$0]  %s3552, 64, %s3549, %s3538
        $region192: #{tpu_custom_call.1} parent=111 // pred_fallthru
          _
      $region112: #{tpu_custom_call.1} parent=5 // pred_fallthru
        _
      %p3555 = scmp.le.s32.totalorder 2, %s44
      // Predicated region
      $region193: #{tpu_custom_call.1} parent=5 // pred_check
        %p3556 = pneg %p3555
      $region194: #{tpu_custom_call.1} parent=5 // pred_check_branch
        %3558 = sbr.rel (%p3556) target = $region196
      $region195: #{tpu_custom_call.1} parent=5 // pred_region
        %s3559 = ssub.s32 %s44, 2
        // Predicated region
        $region197: #{tpu_custom_call.1} parent=195 // pred_check
          %p3560 = pneg %p561
        $region198: #{tpu_custom_call.1} parent=195 // pred_check_branch
          %3562 = sbr.rel (%p3560) target = $region200
        $region199: #{tpu_custom_call.1} parent=195 // pred_region
          %s3563 = sand.u32 %s546, 1
          %s3564 = scalar_lea.sflag [#allocation4], %s3563
          %s3565 = sand.u32 %s546, 1
          %s3566 = smul.addr %s3565, 4
          %s3567 = scalar_lea.vmem [#allocation32], %s3566
          %3568 = dma.done %s3564, 64
        $region200: #{tpu_custom_call.1} parent=195 // pred_fallthru
          _
      $region196: #{tpu_custom_call.1} parent=5 // pred_fallthru
        _
    $region6: #{tpu_custom_call.1} parent=1 // loop_footer
      %s48 = sadd.s32 1, %s44
    $region7: #{tpu_custom_call.1} parent=1 // loop_footer_branch
      %43 = sbr.rel target = $region3
    $region8: #{tpu_custom_call.1} parent=1 // loop_exit
      _
    %3569 = vsyncpa [#allocation3], 1
    %s3570 = scalar_lea.sflag [#allocation3], 1
    %3571 = vsyncpa %s3570, 1
    %3572 = vsyncpa [#allocation6], 1
    %3573 = vsyncpa [#allocation9], 1
    %3574 = vsyncpa [#allocation12], 1
    %3575 = vsyncpa [#allocation15], 1
    %3576 = vsyncpa [#allocation18], 1
    %3577 = vsyncpa [#allocation21], 1
    %3578 = vsyncpa [#allocation24], 1
    %3579 = vsyncpa [#allocation27], 1
    %3580 = vsyncpa [#allocation30], 1
    %3581 = vsyncpa [#allocation4], 1
    %s3582 = scalar_lea.sflag [#allocation4], 1
    %3583 = vsyncpa %s3582, 1

</llo_original>
